<compile_context>
chip_gen: v7x
topology: tpu7x:2x2x1
jax: 0.10.0
libtpu: 0.0.40
codegen_flags: <defaults>
</compile_context>

<pallas_src>
import functools

import jax
import jax.numpy as jnp
from jax import lax
from jax.experimental import pallas as pl
from jax.experimental.pallas import tpu as pltpu


# ---------------------------------------------------------------------------
# Pallas kernels
# ---------------------------------------------------------------------------
def linear_kernel(x_ref, w_ref, b_ref, o_ref):
    """o = x @ w + b   (one (tm, K) row-block per grid step)."""
    o_ref[...] = (jnp.dot(x_ref[...], w_ref[...],
                          preferred_element_type=jnp.float32) + b_ref[...])


def gru_recurrence_kernel(gi_ref, h0_ref, whh_ref, bhn_ref, out_ref, hN_ref):
    """Sequential GRU recurrence over a block of timesteps.

    The input projection gi_t = x_t @ W_ih^T + b_ih (+ b_hr, b_hz folded in)
    is precomputed for all timesteps OUTSIDE this kernel, so only the
    hidden-path matmul h @ W_hh^T remains inside the time loop.

    gi_ref  : (T_BLK, B, 3H)  precomputed input gates for this time block
    h0_ref  : (B, H)          initial hidden state
    whh_ref : (H, 3H)         W_hh^T, gate order [r, z, n] (PyTorch convention)
    bhn_ref : (1, H)          b_hn (only hidden bias that cannot be folded)
    out_ref : (T_BLK, B, H)   per-timestep outputs for this time block
    hN_ref  : (B, H)          hidden-state carry; constant block index =>
                              resident across the whole grid, written back once
    """
    tb = pl.program_id(0)
    H = hN_ref.shape[-1]
    t_blk = gi_ref.shape[0]

    @pl.when(tb == 0)
    def _():
        hN_ref[...] = h0_ref[...]

    whh = whh_ref[...]
    bhn = bhn_ref[...]

    def step(t, h):
        gi = gi_ref[t]                                            # (B, 3H)
        gh = jnp.dot(h, whh, preferred_element_type=jnp.float32)  # (B, 3H)
        r = jax.nn.sigmoid(gi[:, 0 * H:1 * H] + gh[:, 0 * H:1 * H])
        z = jax.nn.sigmoid(gi[:, 1 * H:2 * H] + gh[:, 1 * H:2 * H])
        n = jnp.tanh(gi[:, 2 * H:3 * H] + r * (gh[:, 2 * H:3 * H] + bhn))
        h_new = (1.0 - z) * n + z * h
        out_ref[t] = h_new
        return h_new

    hN_ref[...] = lax.fori_loop(0, t_blk, step, hN_ref[...], unroll=True)


# ---------------------------------------------------------------------------
# Wrappers around pallas_call
# ---------------------------------------------------------------------------
def _row_block(m):
    for cand in (512, 256, 128):
        if m % cand == 0:
            return cand
    return m


def linear(x, w_t, b_row):
    """x: (M, K); w_t: (K, N); b_row: (1, N) -> (M, N); tiled over rows."""
    M, K = x.shape
    N = w_t.shape[1]
    tm = _row_block(M)
    return pl.pallas_call(
        linear_kernel,
        out_shape=jax.ShapeDtypeStruct((M, N), jnp.float32),
        grid_spec=pltpu.PrefetchScalarGridSpec(
            num_scalar_prefetch=0,
            grid=(M // tm,),
            in_specs=[
                pl.BlockSpec((tm, K), lambda i: (i, 0)),
                pl.BlockSpec((K, N), lambda i: (0, 0)),
                pl.BlockSpec((1, N), lambda i: (0, 0)),
            ],
            out_specs=pl.BlockSpec((tm, N), lambda i: (i, 0)),
        ),
        compiler_params=pltpu.CompilerParams(
            dimension_semantics=("parallel",)),
    )(x, w_t, b_row)


def _time_block(t):
    for cand in (64, 32, 16, 8):
        if t % cand == 0:
            return cand
    return t


def gru_layer(x_tbf, h0, w_ih_t, w_hh_t, b_gi, b_hn):
    """One GRU layer over a full sequence.

    x_tbf : (T, B, Din) float32, time-major
    h0    : (B, H)
    w_ih_t: (Din, 3H)   pre-transposed W_ih
    w_hh_t: (H, 3H)     pre-transposed W_hh
    b_gi  : (1, 3H)     b_ih with b_hr / b_hz folded in
    b_hn  : (1, H)
    Returns (out_seq (T, B, H), h_final (B, H)).
    """
    T, B, Din = x_tbf.shape
    H = h0.shape[-1]

    # 1) Hoisted input projection: one big matmul for all timesteps.
    gi = linear(x_tbf.reshape(T * B, Din), w_ih_t, b_gi).reshape(T, B, 3 * H)

    # 2) Sequential recurrence, T_BLK timesteps per grid step.
    t_blk = _time_block(T)
    # TODO(synk): for lane-dense stores, H (=32 here) would need padding to a
    # multiple of 128; kept unpadded to preserve exact module shapes.
    out, hN = pl.pallas_call(
        gru_recurrence_kernel,
        out_shape=(jax.ShapeDtypeStruct((T, B, H), jnp.float32),
                   jax.ShapeDtypeStruct((B, H), jnp.float32)),
        grid_spec=pltpu.PrefetchScalarGridSpec(
            num_scalar_prefetch=0,
            grid=(T // t_blk,),
            in_specs=[
                pl.BlockSpec((t_blk, B, 3 * H), lambda tb: (tb, 0, 0)),
                pl.BlockSpec((B, H), lambda tb: (0, 0)),
                pl.BlockSpec((H, 3 * H), lambda tb: (0, 0)),
                pl.BlockSpec((1, H), lambda tb: (0, 0)),
            ],
            out_specs=[
                pl.BlockSpec((t_blk, B, H), lambda tb: (tb, 0, 0)),
                pl.BlockSpec((B, H), lambda tb: (0, 0)),
            ],
        ),
        compiler_params=pltpu.CompilerParams(
            dimension_semantics=("arbitrary",)),  # time blocks are sequential
    )(gi, h0, w_hh_t, b_hn)
    return out, hN


# ---------------------------------------------------------------------------
# Parameters: PyTorch-layout init + one-time kernel-ready preparation
# ---------------------------------------------------------------------------
def init_params(key, input_dim, output_dim, embed_dim, hidden_dim, n_layers):
    keys = iter(jax.random.split(key, 4 + 2 * n_layers * 4 + 2))

    def uniform(k, shape, bound):
        return jax.random.uniform(k, shape, jnp.float32, -bound, bound)

    params = {
        "emb_src": jax.random.normal(next(keys), (input_dim, embed_dim), jnp.float32),
        "emb_tgt": jax.random.normal(next(keys), (output_dim, embed_dim), jnp.float32),
        "encoder": [],
        "decoder": [],
    }
    bound = 1.0 / jnp.sqrt(hidden_dim)
    for stack in ("encoder", "decoder"):
        for layer in range(n_layers):
            din = embed_dim if layer == 0 else hidden_dim
            params[stack].append({
                "w_ih": uniform(next(keys), (3 * hidden_dim, din), bound),
                "w_hh": uniform(next(keys), (3 * hidden_dim, hidden_dim), bound),
                "b_ih": uniform(next(keys), (3 * hidden_dim,), bound),
                "b_hh": uniform(next(keys), (3 * hidden_dim,), bound),
            })
    params["fc_w"] = uniform(next(keys), (output_dim, hidden_dim), bound)
    params["fc_b"] = uniform(next(keys), (output_dim,), bound)
    return params


def prepare_params(raw):
    """One-time transform: pre-transpose weights, fold r/z hidden biases into
    the input-side bias. Mathematically identical to the PyTorch GRU gates."""
    def prep_gru(p):
        H = p["b_ih"].shape[0] // 3
        b_gi = p["b_ih"] + jnp.concatenate(
            [p["b_hh"][:2 * H], jnp.zeros((H,), jnp.float32)])
        return {
            "w_ih_t": jnp.transpose(p["w_ih"]),        # (Din, 3H)
            "w_hh_t": jnp.transpose(p["w_hh"]),        # (H, 3H)
            "b_gi": b_gi.reshape(1, -1),               # (1, 3H)
            "b_hn": p["b_hh"][2 * H:].reshape(1, -1),  # (1, H)
        }
    return {
        "emb_src": raw["emb_src"],
        "emb_tgt": raw["emb_tgt"],
        "encoder": [prep_gru(p) for p in raw["encoder"]],
        "decoder": [prep_gru(p) for p in raw["decoder"]],
        "fc_w_t": jnp.transpose(raw["fc_w"]),          # (H, V)
        "fc_b": raw["fc_b"].reshape(1, -1),            # (1, V)
    }


# ---------------------------------------------------------------------------
# Forward
# ---------------------------------------------------------------------------
@functools.partial(jax.jit, static_argnames=("n_layers", "hidden_dim"))
def gru_seq2seq_forward(params, src, tgt, *, n_layers, hidden_dim):
    """src: (B, Ts) int32 token ids; tgt: (B, Tt) int32 -> (B, Tt, output_dim)."""
    B = src.shape[0]

    # Embedding lookups (glue); dropout = identity (eval mode).
    src_emb = jnp.take(params["emb_src"], src, axis=0)  # (B, Ts, E)
    tgt_emb = jnp.take(params["emb_tgt"], tgt, axis=0)  # (B, Tt, E)

    # --- Encoder (multi-layer GRU) ---
    x = jnp.transpose(src_emb, (1, 0, 2)).astype(jnp.float32)  # (Ts, B, E)
    enc_hidden = []
    for l in range(n_layers):
        p = params["encoder"][l]
        h0 = jnp.zeros((B, hidden_dim), jnp.float32)
        x, hN = gru_layer(x, h0, p["w_ih_t"], p["w_hh_t"], p["b_gi"], p["b_hn"])
        enc_hidden.append(hN)
        # inter-layer dropout: identity (eval mode)

    # --- Decoder (multi-layer GRU, initialised with encoder hidden) ---
    y = jnp.transpose(tgt_emb, (1, 0, 2)).astype(jnp.float32)  # (Tt, B, E)
    for l in range(n_layers):
        p = params["decoder"][l]
        y, _ = gru_layer(y, enc_hidden[l], p["w_ih_t"], p["w_hh_t"],
                         p["b_gi"], p["b_hn"])

    # --- Output projection (tiled Pallas linear) ---
    Tt = y.shape[0]
    flat = y.reshape(Tt * B, hidden_dim)
    logits = linear(flat, params["fc_w_t"], params["fc_b"])    # (Tt*B, V)
    return logits.reshape(Tt, B, -1).transpose(1, 0, 2)        # (B, Tt, V)


# ---------------------------------------------------------------------------
if __name__ == "__main__":
    input_dim, output_dim = 50, 60
    embed_dim, hidden_dim, n_layers, dropout = 32, 32, 2, 0.1
    B, Ts, Tt = 2, 8, 8

    key = jax.random.PRNGKey(0)
    k_params, k_src, k_tgt = jax.random.split(key, 3)

    raw = init_params(k_params, input_dim, output_dim, embed_dim,
                      hidden_dim, n_layers)
    params = prepare_params(raw)   # one-time layout preparation (outside jit)

    src = jax.random.randint(k_src, (B, Ts), 0, input_dim, dtype=jnp.int32)
    tgt = jax.random.randint(k_tgt, (B, Tt), 0, output_dim, dtype=jnp.int32)

    out = gru_seq2seq_forward(params, src, tgt,
                              n_layers=n_layers, hidden_dim=hidden_dim)
    out = jax.block_until_ready(out)
    assert out.shape == (B, Tt, output_dim), out.shape
    assert bool(jnp.all(jnp.isfinite(out)))
    print("KERNEL_OK")
</pallas_src>

<mosaic_0001>
module attributes {stable_mosaic.version = 11 : i64} {
  func.func @linear_kernel(%arg0: i32, %arg1: memref<16x32xf32, #tpu.memory_space<vmem>>, %arg2: memref<32x96xf32, #tpu.memory_space<vmem>>, %arg3: memref<1x96xf32, #tpu.memory_space<vmem>>, %arg4: memref<16x96xf32, #tpu.memory_space<vmem>>) attributes {dimension_semantics = [#tpu.dimension_semantics<parallel>], iteration_bounds = array<i64: 1>, scalar_prefetch = 0 : i64, scratch_operands = 0 : i64, tpu.core_type = #tpu.core_type<tc>, window_params = [{transform_indices = @transform_0, window_bounds = array<i64: 16, 32>}, {pipeline_mode = #tpu.pipeline_mode<synchronous>, transform_indices = @transform_1, window_bounds = array<i64: 32, 96>}, {pipeline_mode = #tpu.pipeline_mode<synchronous>, transform_indices = @transform_2, window_bounds = array<i64: 1, 96>}, {transform_indices = @transform_3, window_bounds = array<i64: 16, 96>}]} {
    %c0 = arith.constant 0 : index
    %c0_0 = arith.constant 0 : index
    %0 = vector.load %arg1[%c0, %c0_0] : memref<16x32xf32, #tpu.memory_space<vmem>>, vector<16x32xf32>
    %c0_1 = arith.constant 0 : index
    %c0_2 = arith.constant 0 : index
    %1 = vector.load %arg2[%c0_1, %c0_2] : memref<32x96xf32, #tpu.memory_space<vmem>>, vector<32x96xf32>
    %cst = arith.constant dense<0.000000e+00> : vector<16x96xf32>
    %2 = tpu.matmul %0, %1, %cst {dimension_numbers = #tpu.dot_dimension_numbers<[1], [0], [0], [1], [0, 0, 1, 1], [], []>} : vector<16x32xf32>, vector<32x96xf32>, vector<16x96xf32> -> vector<16x96xf32>
    %c0_3 = arith.constant 0 : index
    %c0_4 = arith.constant 0 : index
    %3 = vector.load %arg3[%c0_3, %c0_4] : memref<1x96xf32, #tpu.memory_space<vmem>>, vector<1x96xf32>
    %4 = vector.broadcast %3 : vector<1x96xf32> to vector<16x96xf32>
    %5 = arith.addf %2, %4 : vector<16x96xf32>
    %c0_5 = arith.constant 0 : index
    %c0_6 = arith.constant 0 : index
    %6 = vector.load %arg4[%c0_5, %c0_6] : memref<16x96xf32, #tpu.memory_space<vmem>>, vector<16x96xf32>
    tpu.vector_store %arg4[%c0_5, %c0_6], %5 {strides = array<i32>} : memref<16x96xf32, #tpu.memory_space<vmem>>, vector<16x96xf32>,
    return
  }
  func.func @transform_0(%arg0: i32) -> (i32, i32) {
    %c0_i32 = arith.constant 0 : i32
    %c0_i32_0 = arith.constant 0 : i32
    return %arg0, %c0_i32 : i32, i32
  }
  func.func @transform_1(%arg0: i32) -> (i32, i32) {
    %c0_i32 = arith.constant 0 : i32
    %c0_i32_0 = arith.constant 0 : i32
    %c0_i32_1 = arith.constant 0 : i32
    return %c0_i32, %c0_i32_0 : i32, i32
  }
  func.func @transform_2(%arg0: i32) -> (i32, i32) {
    %c0_i32 = arith.constant 0 : i32
    %c0_i32_0 = arith.constant 0 : i32
    %c0_i32_1 = arith.constant 0 : i32
    return %c0_i32, %c0_i32_0 : i32, i32
  }
  func.func @transform_3(%arg0: i32) -> (i32, i32) {
    %c0_i32 = arith.constant 0 : i32
    %c0_i32_0 = arith.constant 0 : i32
    return %arg0, %c0_i32 : i32, i32
  }
}

module attributes {stable_mosaic.version = 11 : i64} {
  func.func @gru_recurrence_kernel(%arg0: i32, %arg1: memref<8x2x96xf32, #tpu.memory_space<vmem>>, %arg2: memref<2x32xf32, #tpu.memory_space<vmem>>, %arg3: memref<32x96xf32, #tpu.memory_space<vmem>>, %arg4: memref<1x32xf32, #tpu.memory_space<vmem>>, %arg5: memref<8x2x32xf32, #tpu.memory_space<vmem>>, %arg6: memref<2x32xf32, #tpu.memory_space<vmem>>) attributes {dimension_semantics = [#tpu.dimension_semantics<arbitrary>], iteration_bounds = array<i64: 1>, scalar_prefetch = 0 : i64, scratch_operands = 0 : i64, tpu.core_type = #tpu.core_type<tc>, window_params = [{transform_indices = @transform_0, window_bounds = array<i64: 8, 2, 96>}, {pipeline_mode = #tpu.pipeline_mode<synchronous>, transform_indices = @transform_1, window_bounds = array<i64: 2, 32>}, {pipeline_mode = #tpu.pipeline_mode<synchronous>, transform_indices = @transform_2, window_bounds = array<i64: 32, 96>}, {pipeline_mode = #tpu.pipeline_mode<synchronous>, transform_indices = @transform_3, window_bounds = array<i64: 1, 32>}, {transform_indices = @transform_4, window_bounds = array<i64: 8, 2, 32>}, {pipeline_mode = #tpu.pipeline_mode<synchronous>, transform_indices = @transform_5, window_bounds = array<i64: 2, 32>}]} {
    %c0_i32 = arith.constant 0 : i32
    %0 = arith.cmpi eq, %arg0, %c0_i32 : i32
    %1 = arith.extui %0 : i1 to i32
    %c0_i32_0 = arith.constant 0 : i32
    %2 = arith.cmpi ne, %1, %c0_i32_0 : i32
    scf.if %2 {
      %c0_72 = arith.constant 0 : index
      %c0_73 = arith.constant 0 : index
      %295 = vector.load %arg2[%c0_72, %c0_73] : memref<2x32xf32, #tpu.memory_space<vmem>>, vector<2x32xf32>
      %c0_74 = arith.constant 0 : index
      %c0_75 = arith.constant 0 : index
      %296 = vector.load %arg6[%c0_74, %c0_75] : memref<2x32xf32, #tpu.memory_space<vmem>>, vector<2x32xf32>
      tpu.vector_store %arg6[%c0_74, %c0_75], %295 {strides = array<i32>} : memref<2x32xf32, #tpu.memory_space<vmem>>, vector<2x32xf32>,
    } else {
    }
    %c0 = arith.constant 0 : index
    %c0_1 = arith.constant 0 : index
    %3 = vector.load %arg3[%c0, %c0_1] : memref<32x96xf32, #tpu.memory_space<vmem>>, vector<32x96xf32>
    %c0_2 = arith.constant 0 : index
    %c0_3 = arith.constant 0 : index
    %4 = vector.load %arg4[%c0_2, %c0_3] : memref<1x32xf32, #tpu.memory_space<vmem>>, vector<1x32xf32>
    %c0_4 = arith.constant 0 : index
    %c0_5 = arith.constant 0 : index
    %5 = vector.load %arg6[%c0_4, %c0_5] : memref<2x32xf32, #tpu.memory_space<vmem>>, vector<2x32xf32>
    %c0_i32_6 = arith.constant 0 : i32
    %6 = arith.index_cast %c0_i32_6 : i32 to index
    %c0_7 = arith.constant 0 : index
    %c0_8 = arith.constant 0 : index
    %7 = vector.load %arg1[%6, %c0_7, %c0_8] : memref<8x2x96xf32, #tpu.memory_space<vmem>>, vector<1x2x96xf32>
    %8 = vector.shape_cast %7 : vector<1x2x96xf32> to vector<2x96xf32>
    %cst = arith.constant dense<0.000000e+00> : vector<2x96xf32>
    %9 = tpu.matmul %5, %3, %cst {dimension_numbers = #tpu.dot_dimension_numbers<[1], [0], [0], [1], [0, 0, 1, 1], [], []>} : vector<2x32xf32>, vector<32x96xf32>, vector<2x96xf32> -> vector<2x96xf32>
    %10 = vector.extract_strided_slice %8 {offsets = [0, 0], sizes = [2, 32], strides = [1, 1]} : vector<2x96xf32> to vector<2x32xf32>
    %11 = vector.extract_strided_slice %9 {offsets = [0, 0], sizes = [2, 32], strides = [1, 1]} : vector<2x96xf32> to vector<2x32xf32>
    %12 = arith.addf %10, %11 : vector<2x32xf32>
    %13 = arith.negf %12 : vector<2x32xf32>
    %14 = math.exp %13 : vector<2x32xf32>
    %cst_9 = arith.constant 1.000000e+00 : f32
    %15 = vector.broadcast %cst_9 : f32 to vector<2x32xf32>
    %16 = arith.addf %15, %14 : vector<2x32xf32>
    %17 = arith.divf %15, %16 : vector<2x32xf32>
    %18 = vector.extract_strided_slice %8 {offsets = [0, 32], sizes = [2, 32], strides = [1, 1]} : vector<2x96xf32> to vector<2x32xf32>
    %19 = vector.extract_strided_slice %9 {offsets = [0, 32], sizes = [2, 32], strides = [1, 1]} : vector<2x96xf32> to vector<2x32xf32>
    %20 = arith.addf %18, %19 : vector<2x32xf32>
    %21 = arith.negf %20 : vector<2x32xf32>
    %22 = math.exp %21 : vector<2x32xf32>
    %cst_10 = arith.constant 1.000000e+00 : f32
    %23 = vector.broadcast %cst_10 : f32 to vector<2x32xf32>
    %24 = arith.addf %23, %22 : vector<2x32xf32>
    %25 = arith.divf %23, %24 : vector<2x32xf32>
    %26 = vector.extract_strided_slice %8 {offsets = [0, 64], sizes = [2, 32], strides = [1, 1]} : vector<2x96xf32> to vector<2x32xf32>
    %27 = vector.extract_strided_slice %9 {offsets = [0, 64], sizes = [2, 32], strides = [1, 1]} : vector<2x96xf32> to vector<2x32xf32>
    %28 = vector.broadcast %4 : vector<1x32xf32> to vector<2x32xf32>
    %29 = arith.addf %27, %28 : vector<2x32xf32>
    %30 = arith.mulf %17, %29 : vector<2x32xf32>
    %31 = arith.addf %26, %30 : vector<2x32xf32>
    %32 = math.tanh %31 : vector<2x32xf32>
    %cst_11 = arith.constant 1.000000e+00 : f32
    %33 = vector.broadcast %cst_11 : f32 to vector<2x32xf32>
    %34 = arith.subf %33, %25 : vector<2x32xf32>
    %35 = arith.mulf %34, %32 : vector<2x32xf32>
    %36 = arith.mulf %25, %5 : vector<2x32xf32>
    %37 = arith.addf %35, %36 : vector<2x32xf32>
    %38 = arith.index_cast %c0_i32_6 : i32 to index
    %c0_12 = arith.constant 0 : index
    %c0_13 = arith.constant 0 : index
    %39 = vector.load %arg5[%38, %c0_12, %c0_13] : memref<8x2x32xf32, #tpu.memory_space<vmem>>, vector<1x2x32xf32>
    %40 = vector.shape_cast %39 : vector<1x2x32xf32> to vector<2x32xf32>
    %41 = vector.shape_cast %37 : vector<2x32xf32> to vector<1x2x32xf32>
    tpu.vector_store %arg5[%38, %c0_12, %c0_13], %41 {strides = array<i32>} : memref<8x2x32xf32, #tpu.memory_space<vmem>>, vector<1x2x32xf32>,
    %c1_i32 = arith.constant 1 : i32
    %42 = arith.index_cast %c1_i32 : i32 to index
    %c0_14 = arith.constant 0 : index
    %c0_15 = arith.constant 0 : index
    %43 = vector.load %arg1[%42, %c0_14, %c0_15] : memref<8x2x96xf32, #tpu.memory_space<vmem>>, vector<1x2x96xf32>
    %44 = vector.shape_cast %43 : vector<1x2x96xf32> to vector<2x96xf32>
    %cst_16 = arith.constant dense<0.000000e+00> : vector<2x96xf32>
    %45 = tpu.matmul %37, %3, %cst_16 {dimension_numbers = #tpu.dot_dimension_numbers<[1], [0], [0], [1], [0, 0, 1, 1], [], []>} : vector<2x32xf32>, vector<32x96xf32>, vector<2x96xf32> -> vector<2x96xf32>
    %46 = vector.extract_strided_slice %44 {offsets = [0, 0], sizes = [2, 32], strides = [1, 1]} : vector<2x96xf32> to vector<2x32xf32>
    %47 = vector.extract_strided_slice %45 {offsets = [0, 0], sizes = [2, 32], strides = [1, 1]} : vector<2x96xf32> to vector<2x32xf32>
    %48 = arith.addf %46, %47 : vector<2x32xf32>
    %49 = arith.negf %48 : vector<2x32xf32>
    %50 = math.exp %49 : vector<2x32xf32>
    %cst_17 = arith.constant 1.000000e+00 : f32
    %51 = vector.broadcast %cst_17 : f32 to vector<2x32xf32>
    %52 = arith.addf %51, %50 : vector<2x32xf32>
    %53 = arith.divf %51, %52 : vector<2x32xf32>
    %54 = vector.extract_strided_slice %44 {offsets = [0, 32], sizes = [2, 32], strides = [1, 1]} : vector<2x96xf32> to vector<2x32xf32>
    %55 = vector.extract_strided_slice %45 {offsets = [0, 32], sizes = [2, 32], strides = [1, 1]} : vector<2x96xf32> to vector<2x32xf32>
    %56 = arith.addf %54, %55 : vector<2x32xf32>
    %57 = arith.negf %56 : vector<2x32xf32>
    %58 = math.exp %57 : vector<2x32xf32>
    %cst_18 = arith.constant 1.000000e+00 : f32
    %59 = vector.broadcast %cst_18 : f32 to vector<2x32xf32>
    %60 = arith.addf %59, %58 : vector<2x32xf32>
    %61 = arith.divf %59, %60 : vector<2x32xf32>
    %62 = vector.extract_strided_slice %44 {offsets = [0, 64], sizes = [2, 32], strides = [1, 1]} : vector<2x96xf32> to vector<2x32xf32>
    %63 = vector.extract_strided_slice %45 {offsets = [0, 64], sizes = [2, 32], strides = [1, 1]} : vector<2x96xf32> to vector<2x32xf32>
    %64 = vector.broadcast %4 : vector<1x32xf32> to vector<2x32xf32>
    %65 = arith.addf %63, %64 : vector<2x32xf32>
    %66 = arith.mulf %53, %65 : vector<2x32xf32>
    %67 = arith.addf %62, %66 : vector<2x32xf32>
    %68 = math.tanh %67 : vector<2x32xf32>
    %cst_19 = arith.constant 1.000000e+00 : f32
    %69 = vector.broadcast %cst_19 : f32 to vector<2x32xf32>
    %70 = arith.subf %69, %61 : vector<2x32xf32>
    %71 = arith.mulf %70, %68 : vector<2x32xf32>
    %72 = arith.mulf %61, %37 : vector<2x32xf32>
    %73 = arith.addf %71, %72 : vector<2x32xf32>
    %74 = arith.index_cast %c1_i32 : i32 to index
    %c0_20 = arith.constant 0 : index
    %c0_21 = arith.constant 0 : index
    %75 = vector.load %arg5[%74, %c0_20, %c0_21] : memref<8x2x32xf32, #tpu.memory_space<vmem>>, vector<1x2x32xf32>
    %76 = vector.shape_cast %75 : vector<1x2x32xf32> to vector<2x32xf32>
    %77 = vector.shape_cast %73 : vector<2x32xf32> to vector<1x2x32xf32>
    tpu.vector_store %arg5[%74, %c0_20, %c0_21], %77 {strides = array<i32>} : memref<8x2x32xf32, #tpu.memory_space<vmem>>, vector<1x2x32xf32>,
    %c2_i32 = arith.constant 2 : i32
    %78 = arith.index_cast %c2_i32 : i32 to index
    %c0_22 = arith.constant 0 : index
    %c0_23 = arith.constant 0 : index
    %79 = vector.load %arg1[%78, %c0_22, %c0_23] : memref<8x2x96xf32, #tpu.memory_space<vmem>>, vector<1x2x96xf32>
    %80 = vector.shape_cast %79 : vector<1x2x96xf32> to vector<2x96xf32>
    %cst_24 = arith.constant dense<0.000000e+00> : vector<2x96xf32>
    %81 = tpu.matmul %73, %3, %cst_24 {dimension_numbers = #tpu.dot_dimension_numbers<[1], [0], [0], [1], [0, 0, 1, 1], [], []>} : vector<2x32xf32>, vector<32x96xf32>, vector<2x96xf32> -> vector<2x96xf32>
    %82 = vector.extract_strided_slice %80 {offsets = [0, 0], sizes = [2, 32], strides = [1, 1]} : vector<2x96xf32> to vector<2x32xf32>
    %83 = vector.extract_strided_slice %81 {offsets = [0, 0], sizes = [2, 32], strides = [1, 1]} : vector<2x96xf32> to vector<2x32xf32>
    %84 = arith.addf %82, %83 : vector<2x32xf32>
    %85 = arith.negf %84 : vector<2x32xf32>
    %86 = math.exp %85 : vector<2x32xf32>
    %cst_25 = arith.constant 1.000000e+00 : f32
    %87 = vector.broadcast %cst_25 : f32 to vector<2x32xf32>
    %88 = arith.addf %87, %86 : vector<2x32xf32>
    %89 = arith.divf %87, %88 : vector<2x32xf32>
    %90 = vector.extract_strided_slice %80 {offsets = [0, 32], sizes = [2, 32], strides = [1, 1]} : vector<2x96xf32> to vector<2x32xf32>
    %91 = vector.extract_strided_slice %81 {offsets = [0, 32], sizes = [2, 32], strides = [1, 1]} : vector<2x96xf32> to vector<2x32xf32>
    %92 = arith.addf %90, %91 : vector<2x32xf32>
    %93 = arith.negf %92 : vector<2x32xf32>
    %94 = math.exp %93 : vector<2x32xf32>
    %cst_26 = arith.constant 1.000000e+00 : f32
    %95 = vector.broadcast %cst_26 : f32 to vector<2x32xf32>
    %96 = arith.addf %95, %94 : vector<2x32xf32>
    %97 = arith.divf %95, %96 : vector<2x32xf32>
    %98 = vector.extract_strided_slice %80 {offsets = [0, 64], sizes = [2, 32], strides = [1, 1]} : vector<2x96xf32> to vector<2x32xf32>
    %99 = vector.extract_strided_slice %81 {offsets = [0, 64], sizes = [2, 32], strides = [1, 1]} : vector<2x96xf32> to vector<2x32xf32>
    %100 = vector.broadcast %4 : vector<1x32xf32> to vector<2x32xf32>
    %101 = arith.addf %99, %100 : vector<2x32xf32>
    %102 = arith.mulf %89, %101 : vector<2x32xf32>
    %103 = arith.addf %98, %102 : vector<2x32xf32>
    %104 = math.tanh %103 : vector<2x32xf32>
    %cst_27 = arith.constant 1.000000e+00 : f32
    %105 = vector.broadcast %cst_27 : f32 to vector<2x32xf32>
    %106 = arith.subf %105, %97 : vector<2x32xf32>
    %107 = arith.mulf %106, %104 : vector<2x32xf32>
    %108 = arith.mulf %97, %73 : vector<2x32xf32>
    %109 = arith.addf %107, %108 : vector<2x32xf32>
    %110 = arith.index_cast %c2_i32 : i32 to index
    %c0_28 = arith.constant 0 : index
    %c0_29 = arith.constant 0 : index
    %111 = vector.load %arg5[%110, %c0_28, %c0_29] : memref<8x2x32xf32, #tpu.memory_space<vmem>>, vector<1x2x32xf32>
    %112 = vector.shape_cast %111 : vector<1x2x32xf32> to vector<2x32xf32>
    %113 = vector.shape_cast %109 : vector<2x32xf32> to vector<1x2x32xf32>
    tpu.vector_store %arg5[%110, %c0_28, %c0_29], %113 {strides = array<i32>} : memref<8x2x32xf32, #tpu.memory_space<vmem>>, vector<1x2x32xf32>,
    %c3_i32 = arith.constant 3 : i32
    %114 = arith.index_cast %c3_i32 : i32 to index
    %c0_30 = arith.constant 0 : index
    %c0_31 = arith.constant 0 : index
    %115 = vector.load %arg1[%114, %c0_30, %c0_31] : memref<8x2x96xf32, #tpu.memory_space<vmem>>, vector<1x2x96xf32>
    %116 = vector.shape_cast %115 : vector<1x2x96xf32> to vector<2x96xf32>
    %cst_32 = arith.constant dense<0.000000e+00> : vector<2x96xf32>
    %117 = tpu.matmul %109, %3, %cst_32 {dimension_numbers = #tpu.dot_dimension_numbers<[1], [0], [0], [1], [0, 0, 1, 1], [], []>} : vector<2x32xf32>, vector<32x96xf32>, vector<2x96xf32> -> vector<2x96xf32>
    %118 = vector.extract_strided_slice %116 {offsets = [0, 0], sizes = [2, 32], strides = [1, 1]} : vector<2x96xf32> to vector<2x32xf32>
    %119 = vector.extract_strided_slice %117 {offsets = [0, 0], sizes = [2, 32], strides = [1, 1]} : vector<2x96xf32> to vector<2x32xf32>
    %120 = arith.addf %118, %119 : vector<2x32xf32>
    %121 = arith.negf %120 : vector<2x32xf32>
    %122 = math.exp %121 : vector<2x32xf32>
    %cst_33 = arith.constant 1.000000e+00 : f32
    %123 = vector.broadcast %cst_33 : f32 to vector<2x32xf32>
    %124 = arith.addf %123, %122 : vector<2x32xf32>
    %125 = arith.divf %123, %124 : vector<2x32xf32>
    %126 = vector.extract_strided_slice %116 {offsets = [0, 32], sizes = [2, 32], strides = [1, 1]} : vector<2x96xf32> to vector<2x32xf32>
    %127 = vector.extract_strided_slice %117 {offsets = [0, 32], sizes = [2, 32], strides = [1, 1]} : vector<2x96xf32> to vector<2x32xf32>
    %128 = arith.addf %126, %127 : vector<2x32xf32>
    %129 = arith.negf %128 : vector<2x32xf32>
    %130 = math.exp %129 : vector<2x32xf32>
    %cst_34 = arith.constant 1.000000e+00 : f32
    %131 = vector.broadcast %cst_34 : f32 to vector<2x32xf32>
    %132 = arith.addf %131, %130 : vector<2x32xf32>
    %133 = arith.divf %131, %132 : vector<2x32xf32>
    %134 = vector.extract_strided_slice %116 {offsets = [0, 64], sizes = [2, 32], strides = [1, 1]} : vector<2x96xf32> to vector<2x32xf32>
    %135 = vector.extract_strided_slice %117 {offsets = [0, 64], sizes = [2, 32], strides = [1, 1]} : vector<2x96xf32> to vector<2x32xf32>
    %136 = vector.broadcast %4 : vector<1x32xf32> to vector<2x32xf32>
    %137 = arith.addf %135, %136 : vector<2x32xf32>
    %138 = arith.mulf %125, %137 : vector<2x32xf32>
    %139 = arith.addf %134, %138 : vector<2x32xf32>
    %140 = math.tanh %139 : vector<2x32xf32>
    %cst_35 = arith.constant 1.000000e+00 : f32
    %141 = vector.broadcast %cst_35 : f32 to vector<2x32xf32>
    %142 = arith.subf %141, %133 : vector<2x32xf32>
    %143 = arith.mulf %142, %140 : vector<2x32xf32>
    %144 = arith.mulf %133, %109 : vector<2x32xf32>
    %145 = arith.addf %143, %144 : vector<2x32xf32>
    %146 = arith.index_cast %c3_i32 : i32 to index
    %c0_36 = arith.constant 0 : index
    %c0_37 = arith.constant 0 : index
    %147 = vector.load %arg5[%146, %c0_36, %c0_37] : memref<8x2x32xf32, #tpu.memory_space<vmem>>, vector<1x2x32xf32>
    %148 = vector.shape_cast %147 : vector<1x2x32xf32> to vector<2x32xf32>
    %149 = vector.shape_cast %145 : vector<2x32xf32> to vector<1x2x32xf32>
    tpu.vector_store %arg5[%146, %c0_36, %c0_37], %149 {strides = array<i32>} : memref<8x2x32xf32, #tpu.memory_space<vmem>>, vector<1x2x32xf32>,
    %c4_i32 = arith.constant 4 : i32
    %150 = arith.index_cast %c4_i32 : i32 to index
    %c0_38 = arith.constant 0 : index
    %c0_39 = arith.constant 0 : index
    %151 = vector.load %arg1[%150, %c0_38, %c0_39] : memref<8x2x96xf32, #tpu.memory_space<vmem>>, vector<1x2x96xf32>
    %152 = vector.shape_cast %151 : vector<1x2x96xf32> to vector<2x96xf32>
    %cst_40 = arith.constant dense<0.000000e+00> : vector<2x96xf32>
    %153 = tpu.matmul %145, %3, %cst_40 {dimension_numbers = #tpu.dot_dimension_numbers<[1], [0], [0], [1], [0, 0, 1, 1], [], []>} : vector<2x32xf32>, vector<32x96xf32>, vector<2x96xf32> -> vector<2x96xf32>
    %154 = vector.extract_strided_slice %152 {offsets = [0, 0], sizes = [2, 32], strides = [1, 1]} : vector<2x96xf32> to vector<2x32xf32>
    %155 = vector.extract_strided_slice %153 {offsets = [0, 0], sizes = [2, 32], strides = [1, 1]} : vector<2x96xf32> to vector<2x32xf32>
    %156 = arith.addf %154, %155 : vector<2x32xf32>
    %157 = arith.negf %156 : vector<2x32xf32>
    %158 = math.exp %157 : vector<2x32xf32>
    %cst_41 = arith.constant 1.000000e+00 : f32
    %159 = vector.broadcast %cst_41 : f32 to vector<2x32xf32>
    %160 = arith.addf %159, %158 : vector<2x32xf32>
    %161 = arith.divf %159, %160 : vector<2x32xf32>
    %162 = vector.extract_strided_slice %152 {offsets = [0, 32], sizes = [2, 32], strides = [1, 1]} : vector<2x96xf32> to vector<2x32xf32>
    %163 = vector.extract_strided_slice %153 {offsets = [0, 32], sizes = [2, 32], strides = [1, 1]} : vector<2x96xf32> to vector<2x32xf32>
    %164 = arith.addf %162, %163 : vector<2x32xf32>
    %165 = arith.negf %164 : vector<2x32xf32>
    %166 = math.exp %165 : vector<2x32xf32>
    %cst_42 = arith.constant 1.000000e+00 : f32
    %167 = vector.broadcast %cst_42 : f32 to vector<2x32xf32>
    %168 = arith.addf %167, %166 : vector<2x32xf32>
    %169 = arith.divf %167, %168 : vector<2x32xf32>
    %170 = vector.extract_strided_slice %152 {offsets = [0, 64], sizes = [2, 32], strides = [1, 1]} : vector<2x96xf32> to vector<2x32xf32>
    %171 = vector.extract_strided_slice %153 {offsets = [0, 64], sizes = [2, 32], strides = [1, 1]} : vector<2x96xf32> to vector<2x32xf32>
    %172 = vector.broadcast %4 : vector<1x32xf32> to vector<2x32xf32>
    %173 = arith.addf %171, %172 : vector<2x32xf32>
    %174 = arith.mulf %161, %173 : vector<2x32xf32>
    %175 = arith.addf %170, %174 : vector<2x32xf32>
    %176 = math.tanh %175 : vector<2x32xf32>
    %cst_43 = arith.constant 1.000000e+00 : f32
    %177 = vector.broadcast %cst_43 : f32 to vector<2x32xf32>
    %178 = arith.subf %177, %169 : vector<2x32xf32>
    %179 = arith.mulf %178, %176 : vector<2x32xf32>
    %180 = arith.mulf %169, %145 : vector<2x32xf32>
    %181 = arith.addf %179, %180 : vector<2x32xf32>
    %182 = arith.index_cast %c4_i32 : i32 to index
    %c0_44 = arith.constant 0 : index
    %c0_45 = arith.constant 0 : index
    %183 = vector.load %arg5[%182, %c0_44, %c0_45] : memref<8x2x32xf32, #tpu.memory_space<vmem>>, vector<1x2x32xf32>
    %184 = vector.shape_cast %183 : vector<1x2x32xf32> to vector<2x32xf32>
    %185 = vector.shape_cast %181 : vector<2x32xf32> to vector<1x2x32xf32>
    tpu.vector_store %arg5[%182, %c0_44, %c0_45], %185 {strides = array<i32>} : memref<8x2x32xf32, #tpu.memory_space<vmem>>, vector<1x2x32xf32>,
    %c5_i32 = arith.constant 5 : i32
    %186 = arith.index_cast %c5_i32 : i32 to index
    %c0_46 = arith.constant 0 : index
    %c0_47 = arith.constant 0 : index
    %187 = vector.load %arg1[%186, %c0_46, %c0_47] : memref<8x2x96xf32, #tpu.memory_space<vmem>>, vector<1x2x96xf32>
    %188 = vector.shape_cast %187 : vector<1x2x96xf32> to vector<2x96xf32>
    %cst_48 = arith.constant dense<0.000000e+00> : vector<2x96xf32>
    %189 = tpu.matmul %181, %3, %cst_48 {dimension_numbers = #tpu.dot_dimension_numbers<[1], [0], [0], [1], [0, 0, 1, 1], [], []>} : vector<2x32xf32>, vector<32x96xf32>, vector<2x96xf32> -> vector<2x96xf32>
    %190 = vector.extract_strided_slice %188 {offsets = [0, 0], sizes = [2, 32], strides = [1, 1]} : vector<2x96xf32> to vector<2x32xf32>
    %191 = vector.extract_strided_slice %189 {offsets = [0, 0], sizes = [2, 32], strides = [1, 1]} : vector<2x96xf32> to vector<2x32xf32>
    %192 = arith.addf %190, %191 : vector<2x32xf32>
    %193 = arith.negf %192 : vector<2x32xf32>
    %194 = math.exp %193 : vector<2x32xf32>
    %cst_49 = arith.constant 1.000000e+00 : f32
    %195 = vector.broadcast %cst_49 : f32 to vector<2x32xf32>
    %196 = arith.addf %195, %194 : vector<2x32xf32>
    %197 = arith.divf %195, %196 : vector<2x32xf32>
    %198 = vector.extract_strided_slice %188 {offsets = [0, 32], sizes = [2, 32], strides = [1, 1]} : vector<2x96xf32> to vector<2x32xf32>
    %199 = vector.extract_strided_slice %189 {offsets = [0, 32], sizes = [2, 32], strides = [1, 1]} : vector<2x96xf32> to vector<2x32xf32>
    %200 = arith.addf %198, %199 : vector<2x32xf32>
    %201 = arith.negf %200 : vector<2x32xf32>
    %202 = math.exp %201 : vector<2x32xf32>
    %cst_50 = arith.constant 1.000000e+00 : f32
    %203 = vector.broadcast %cst_50 : f32 to vector<2x32xf32>
    %204 = arith.addf %203, %202 : vector<2x32xf32>
    %205 = arith.divf %203, %204 : vector<2x32xf32>
    %206 = vector.extract_strided_slice %188 {offsets = [0, 64], sizes = [2, 32], strides = [1, 1]} : vector<2x96xf32> to vector<2x32xf32>
    %207 = vector.extract_strided_slice %189 {offsets = [0, 64], sizes = [2, 32], strides = [1, 1]} : vector<2x96xf32> to vector<2x32xf32>
    %208 = vector.broadcast %4 : vector<1x32xf32> to vector<2x32xf32>
    %209 = arith.addf %207, %208 : vector<2x32xf32>
    %210 = arith.mulf %197, %209 : vector<2x32xf32>
    %211 = arith.addf %206, %210 : vector<2x32xf32>
    %212 = math.tanh %211 : vector<2x32xf32>
    %cst_51 = arith.constant 1.000000e+00 : f32
    %213 = vector.broadcast %cst_51 : f32 to vector<2x32xf32>
    %214 = arith.subf %213, %205 : vector<2x32xf32>
    %215 = arith.mulf %214, %212 : vector<2x32xf32>
    %216 = arith.mulf %205, %181 : vector<2x32xf32>
    %217 = arith.addf %215, %216 : vector<2x32xf32>
    %218 = arith.index_cast %c5_i32 : i32 to index
    %c0_52 = arith.constant 0 : index
    %c0_53 = arith.constant 0 : index
    %219 = vector.load %arg5[%218, %c0_52, %c0_53] : memref<8x2x32xf32, #tpu.memory_space<vmem>>, vector<1x2x32xf32>
    %220 = vector.shape_cast %219 : vector<1x2x32xf32> to vector<2x32xf32>
    %221 = vector.shape_cast %217 : vector<2x32xf32> to vector<1x2x32xf32>
    tpu.vector_store %arg5[%218, %c0_52, %c0_53], %221 {strides = array<i32>} : memref<8x2x32xf32, #tpu.memory_space<vmem>>, vector<1x2x32xf32>,
    %c6_i32 = arith.constant 6 : i32
    %222 = arith.index_cast %c6_i32 : i32 to index
    %c0_54 = arith.constant 0 : index
    %c0_55 = arith.constant 0 : index
    %223 = vector.load %arg1[%222, %c0_54, %c0_55] : memref<8x2x96xf32, #tpu.memory_space<vmem>>, vector<1x2x96xf32>
    %224 = vector.shape_cast %223 : vector<1x2x96xf32> to vector<2x96xf32>
    %cst_56 = arith.constant dense<0.000000e+00> : vector<2x96xf32>
    %225 = tpu.matmul %217, %3, %cst_56 {dimension_numbers = #tpu.dot_dimension_numbers<[1], [0], [0], [1], [0, 0, 1, 1], [], []>} : vector<2x32xf32>, vector<32x96xf32>, vector<2x96xf32> -> vector<2x96xf32>
    %226 = vector.extract_strided_slice %224 {offsets = [0, 0], sizes = [2, 32], strides = [1, 1]} : vector<2x96xf32> to vector<2x32xf32>
    %227 = vector.extract_strided_slice %225 {offsets = [0, 0], sizes = [2, 32], strides = [1, 1]} : vector<2x96xf32> to vector<2x32xf32>
    %228 = arith.addf %226, %227 : vector<2x32xf32>
    %229 = arith.negf %228 : vector<2x32xf32>
    %230 = math.exp %229 : vector<2x32xf32>
    %cst_57 = arith.constant 1.000000e+00 : f32
    %231 = vector.broadcast %cst_57 : f32 to vector<2x32xf32>
    %232 = arith.addf %231, %230 : vector<2x32xf32>
    %233 = arith.divf %231, %232 : vector<2x32xf32>
    %234 = vector.extract_strided_slice %224 {offsets = [0, 32], sizes = [2, 32], strides = [1, 1]} : vector<2x96xf32> to vector<2x32xf32>
    %235 = vector.extract_strided_slice %225 {offsets = [0, 32], sizes = [2, 32], strides = [1, 1]} : vector<2x96xf32> to vector<2x32xf32>
    %236 = arith.addf %234, %235 : vector<2x32xf32>
    %237 = arith.negf %236 : vector<2x32xf32>
    %238 = math.exp %237 : vector<2x32xf32>
    %cst_58 = arith.constant 1.000000e+00 : f32
    %239 = vector.broadcast %cst_58 : f32 to vector<2x32xf32>
    %240 = arith.addf %239, %238 : vector<2x32xf32>
    %241 = arith.divf %239, %240 : vector<2x32xf32>
    %242 = vector.extract_strided_slice %224 {offsets = [0, 64], sizes = [2, 32], strides = [1, 1]} : vector<2x96xf32> to vector<2x32xf32>
    %243 = vector.extract_strided_slice %225 {offsets = [0, 64], sizes = [2, 32], strides = [1, 1]} : vector<2x96xf32> to vector<2x32xf32>
    %244 = vector.broadcast %4 : vector<1x32xf32> to vector<2x32xf32>
    %245 = arith.addf %243, %244 : vector<2x32xf32>
    %246 = arith.mulf %233, %245 : vector<2x32xf32>
    %247 = arith.addf %242, %246 : vector<2x32xf32>
    %248 = math.tanh %247 : vector<2x32xf32>
    %cst_59 = arith.constant 1.000000e+00 : f32
    %249 = vector.broadcast %cst_59 : f32 to vector<2x32xf32>
    %250 = arith.subf %249, %241 : vector<2x32xf32>
    %251 = arith.mulf %250, %248 : vector<2x32xf32>
    %252 = arith.mulf %241, %217 : vector<2x32xf32>
    %253 = arith.addf %251, %252 : vector<2x32xf32>
    %254 = arith.index_cast %c6_i32 : i32 to index
    %c0_60 = arith.constant 0 : index
    %c0_61 = arith.constant 0 : index
    %255 = vector.load %arg5[%254, %c0_60, %c0_61] : memref<8x2x32xf32, #tpu.memory_space<vmem>>, vector<1x2x32xf32>
    %256 = vector.shape_cast %255 : vector<1x2x32xf32> to vector<2x32xf32>
    %257 = vector.shape_cast %253 : vector<2x32xf32> to vector<1x2x32xf32>
    tpu.vector_store %arg5[%254, %c0_60, %c0_61], %257 {strides = array<i32>} : memref<8x2x32xf32, #tpu.memory_space<vmem>>, vector<1x2x32xf32>,
    %c7_i32 = arith.constant 7 : i32
    %258 = arith.index_cast %c7_i32 : i32 to index
    %c0_62 = arith.constant 0 : index
    %c0_63 = arith.constant 0 : index
    %259 = vector.load %arg1[%258, %c0_62, %c0_63] : memref<8x2x96xf32, #tpu.memory_space<vmem>>, vector<1x2x96xf32>
    %260 = vector.shape_cast %259 : vector<1x2x96xf32> to vector<2x96xf32>
    %cst_64 = arith.constant dense<0.000000e+00> : vector<2x96xf32>
    %261 = tpu.matmul %253, %3, %cst_64 {dimension_numbers = #tpu.dot_dimension_numbers<[1], [0], [0], [1], [0, 0, 1, 1], [], []>} : vector<2x32xf32>, vector<32x96xf32>, vector<2x96xf32> -> vector<2x96xf32>
    %262 = vector.extract_strided_slice %260 {offsets = [0, 0], sizes = [2, 32], strides = [1, 1]} : vector<2x96xf32> to vector<2x32xf32>
    %263 = vector.extract_strided_slice %261 {offsets = [0, 0], sizes = [2, 32], strides = [1, 1]} : vector<2x96xf32> to vector<2x32xf32>
    %264 = arith.addf %262, %263 : vector<2x32xf32>
    %265 = arith.negf %264 : vector<2x32xf32>
    %266 = math.exp %265 : vector<2x32xf32>
    %cst_65 = arith.constant 1.000000e+00 : f32
    %267 = vector.broadcast %cst_65 : f32 to vector<2x32xf32>
    %268 = arith.addf %267, %266 : vector<2x32xf32>
    %269 = arith.divf %267, %268 : vector<2x32xf32>
    %270 = vector.extract_strided_slice %260 {offsets = [0, 32], sizes = [2, 32], strides = [1, 1]} : vector<2x96xf32> to vector<2x32xf32>
    %271 = vector.extract_strided_slice %261 {offsets = [0, 32], sizes = [2, 32], strides = [1, 1]} : vector<2x96xf32> to vector<2x32xf32>
    %272 = arith.addf %270, %271 : vector<2x32xf32>
    %273 = arith.negf %272 : vector<2x32xf32>
    %274 = math.exp %273 : vector<2x32xf32>
    %cst_66 = arith.constant 1.000000e+00 : f32
    %275 = vector.broadcast %cst_66 : f32 to vector<2x32xf32>
    %276 = arith.addf %275, %274 : vector<2x32xf32>
    %277 = arith.divf %275, %276 : vector<2x32xf32>
    %278 = vector.extract_strided_slice %260 {offsets = [0, 64], sizes = [2, 32], strides = [1, 1]} : vector<2x96xf32> to vector<2x32xf32>
    %279 = vector.extract_strided_slice %261 {offsets = [0, 64], sizes = [2, 32], strides = [1, 1]} : vector<2x96xf32> to vector<2x32xf32>
    %280 = vector.broadcast %4 : vector<1x32xf32> to vector<2x32xf32>
    %281 = arith.addf %279, %280 : vector<2x32xf32>
    %282 = arith.mulf %269, %281 : vector<2x32xf32>
    %283 = arith.addf %278, %282 : vector<2x32xf32>
    %284 = math.tanh %283 : vector<2x32xf32>
    %cst_67 = arith.constant 1.000000e+00 : f32
    %285 = vector.broadcast %cst_67 : f32 to vector<2x32xf32>
    %286 = arith.subf %285, %277 : vector<2x32xf32>
    %287 = arith.mulf %286, %284 : vector<2x32xf32>
    %288 = arith.mulf %277, %253 : vector<2x32xf32>
    %289 = arith.addf %287, %288 : vector<2x32xf32>
    %290 = arith.index_cast %c7_i32 : i32 to index
    %c0_68 = arith.constant 0 : index
    %c0_69 = arith.constant 0 : index
    %291 = vector.load %arg5[%290, %c0_68, %c0_69] : memref<8x2x32xf32, #tpu.memory_space<vmem>>, vector<1x2x32xf32>
    %292 = vector.shape_cast %291 : vector<1x2x32xf32> to vector<2x32xf32>
    %293 = vector.shape_cast %289 : vector<2x32xf32> to vector<1x2x32xf32>
    tpu.vector_store %arg5[%290, %c0_68, %c0_69], %293 {strides = array<i32>} : memref<8x2x32xf32, #tpu.memory_space<vmem>>, vector<1x2x32xf32>,
    %c8_i32 = arith.constant 8 : i32
    %c0_70 = arith.constant 0 : index
    %c0_71 = arith.constant 0 : index
    %294 = vector.load %arg6[%c0_70, %c0_71] : memref<2x32xf32, #tpu.memory_space<vmem>>, vector<2x32xf32>
    tpu.vector_store %arg6[%c0_70, %c0_71], %289 {strides = array<i32>} : memref<2x32xf32, #tpu.memory_space<vmem>>, vector<2x32xf32>,
    return
  }
  func.func @transform_0(%arg0: i32) -> (i32, i32, i32) {
    %c0_i32 = arith.constant 0 : i32
    %c0_i32_0 = arith.constant 0 : i32
    %c0_i32_1 = arith.constant 0 : i32
    return %arg0, %c0_i32, %c0_i32_0 : i32, i32, i32
  }
  func.func @transform_1(%arg0: i32) -> (i32, i32) {
    %c0_i32 = arith.constant 0 : i32
    %c0_i32_0 = arith.constant 0 : i32
    %c0_i32_1 = arith.constant 0 : i32
    return %c0_i32, %c0_i32_0 : i32, i32
  }
  func.func @transform_2(%arg0: i32) -> (i32, i32) {
    %c0_i32 = arith.constant 0 : i32
    %c0_i32_0 = arith.constant 0 : i32
    %c0_i32_1 = arith.constant 0 : i32
    return %c0_i32, %c0_i32_0 : i32, i32
  }
  func.func @transform_3(%arg0: i32) -> (i32, i32) {
    %c0_i32 = arith.constant 0 : i32
    %c0_i32_0 = arith.constant 0 : i32
    %c0_i32_1 = arith.constant 0 : i32
    return %c0_i32, %c0_i32_0 : i32, i32
  }
  func.func @transform_4(%arg0: i32) -> (i32, i32, i32) {
    %c0_i32 = arith.constant 0 : i32
    %c0_i32_0 = arith.constant 0 : i32
    %c0_i32_1 = arith.constant 0 : i32
    return %arg0, %c0_i32, %c0_i32_0 : i32, i32, i32
  }
  func.func @transform_5(%arg0: i32) -> (i32, i32) {
    %c0_i32 = arith.constant 0 : i32
    %c0_i32_0 = arith.constant 0 : i32
    %c0_i32_1 = arith.constant 0 : i32
    return %c0_i32, %c0_i32_0 : i32, i32
  }
}

module attributes {stable_mosaic.version = 11 : i64} {
  func.func @gru_recurrence_kernel(%arg0: i32, %arg1: memref<8x2x96xf32, #tpu.memory_space<vmem>>, %arg2: memref<2x32xf32, #tpu.memory_space<vmem>>, %arg3: memref<32x96xf32, #tpu.memory_space<vmem>>, %arg4: memref<1x32xf32, #tpu.memory_space<vmem>>, %arg5: memref<8x2x32xf32, #tpu.memory_space<vmem>>, %arg6: memref<2x32xf32, #tpu.memory_space<vmem>>) attributes {dimension_semantics = [#tpu.dimension_semantics<arbitrary>], iteration_bounds = array<i64: 1>, scalar_prefetch = 0 : i64, scratch_operands = 0 : i64, tpu.core_type = #tpu.core_type<tc>, window_params = [{transform_indices = @transform_0, window_bounds = array<i64: 8, 2, 96>}, {pipeline_mode = #tpu.pipeline_mode<synchronous>, transform_indices = @transform_1, window_bounds = array<i64: 2, 32>}, {pipeline_mode = #tpu.pipeline_mode<synchronous>, transform_indices = @transform_2, window_bounds = array<i64: 32, 96>}, {pipeline_mode = #tpu.pipeline_mode<synchronous>, transform_indices = @transform_3, window_bounds = array<i64: 1, 32>}, {transform_indices = @transform_4, window_bounds = array<i64: 8, 2, 32>}, {pipeline_mode = #tpu.pipeline_mode<synchronous>, transform_indices = @transform_5, window_bounds = array<i64: 2, 32>}]} {
    %c0_i32 = arith.constant 0 : i32
    %0 = arith.cmpi eq, %arg0, %c0_i32 : i32
    %1 = arith.extui %0 : i1 to i32
    %c0_i32_0 = arith.constant 0 : i32
    %2 = arith.cmpi ne, %1, %c0_i32_0 : i32
    scf.if %2 {
      %c0_72 = arith.constant 0 : index
      %c0_73 = arith.constant 0 : index
      %295 = vector.load %arg2[%c0_72, %c0_73] : memref<2x32xf32, #tpu.memory_space<vmem>>, vector<2x32xf32>
      %c0_74 = arith.constant 0 : index
      %c0_75 = arith.constant 0 : index
      %296 = vector.load %arg6[%c0_74, %c0_75] : memref<2x32xf32, #tpu.memory_space<vmem>>, vector<2x32xf32>
      tpu.vector_store %arg6[%c0_74, %c0_75], %295 {strides = array<i32>} : memref<2x32xf32, #tpu.memory_space<vmem>>, vector<2x32xf32>,
    } else {
    }
    %c0 = arith.constant 0 : index
    %c0_1 = arith.constant 0 : index
    %3 = vector.load %arg3[%c0, %c0_1] : memref<32x96xf32, #tpu.memory_space<vmem>>, vector<32x96xf32>
    %c0_2 = arith.constant 0 : index
    %c0_3 = arith.constant 0 : index
    %4 = vector.load %arg4[%c0_2, %c0_3] : memref<1x32xf32, #tpu.memory_space<vmem>>, vector<1x32xf32>
    %c0_4 = arith.constant 0 : index
    %c0_5 = arith.constant 0 : index
    %5 = vector.load %arg6[%c0_4, %c0_5] : memref<2x32xf32, #tpu.memory_space<vmem>>, vector<2x32xf32>
    %c0_i32_6 = arith.constant 0 : i32
    %6 = arith.index_cast %c0_i32_6 : i32 to index
    %c0_7 = arith.constant 0 : index
    %c0_8 = arith.constant 0 : index
    %7 = vector.load %arg1[%6, %c0_7, %c0_8] : memref<8x2x96xf32, #tpu.memory_space<vmem>>, vector<1x2x96xf32>
    %8 = vector.shape_cast %7 : vector<1x2x96xf32> to vector<2x96xf32>
    %cst = arith.constant dense<0.000000e+00> : vector<2x96xf32>
    %9 = tpu.matmul %5, %3, %cst {dimension_numbers = #tpu.dot_dimension_numbers<[1], [0], [0], [1], [0, 0, 1, 1], [], []>} : vector<2x32xf32>, vector<32x96xf32>, vector<2x96xf32> -> vector<2x96xf32>
    %10 = vector.extract_strided_slice %8 {offsets = [0, 0], sizes = [2, 32], strides = [1, 1]} : vector<2x96xf32> to vector<2x32xf32>
    %11 = vector.extract_strided_slice %9 {offsets = [0, 0], sizes = [2, 32], strides = [1, 1]} : vector<2x96xf32> to vector<2x32xf32>
    %12 = arith.addf %10, %11 : vector<2x32xf32>
    %13 = arith.negf %12 : vector<2x32xf32>
    %14 = math.exp %13 : vector<2x32xf32>
    %cst_9 = arith.constant 1.000000e+00 : f32
    %15 = vector.broadcast %cst_9 : f32 to vector<2x32xf32>
    %16 = arith.addf %15, %14 : vector<2x32xf32>
    %17 = arith.divf %15, %16 : vector<2x32xf32>
    %18 = vector.extract_strided_slice %8 {offsets = [0, 32], sizes = [2, 32], strides = [1, 1]} : vector<2x96xf32> to vector<2x32xf32>
    %19 = vector.extract_strided_slice %9 {offsets = [0, 32], sizes = [2, 32], strides = [1, 1]} : vector<2x96xf32> to vector<2x32xf32>
    %20 = arith.addf %18, %19 : vector<2x32xf32>
    %21 = arith.negf %20 : vector<2x32xf32>
    %22 = math.exp %21 : vector<2x32xf32>
    %cst_10 = arith.constant 1.000000e+00 : f32
    %23 = vector.broadcast %cst_10 : f32 to vector<2x32xf32>
    %24 = arith.addf %23, %22 : vector<2x32xf32>
    %25 = arith.divf %23, %24 : vector<2x32xf32>
    %26 = vector.extract_strided_slice %8 {offsets = [0, 64], sizes = [2, 32], strides = [1, 1]} : vector<2x96xf32> to vector<2x32xf32>
    %27 = vector.extract_strided_slice %9 {offsets = [0, 64], sizes = [2, 32], strides = [1, 1]} : vector<2x96xf32> to vector<2x32xf32>
    %28 = vector.broadcast %4 : vector<1x32xf32> to vector<2x32xf32>
    %29 = arith.addf %27, %28 : vector<2x32xf32>
    %30 = arith.mulf %17, %29 : vector<2x32xf32>
    %31 = arith.addf %26, %30 : vector<2x32xf32>
    %32 = math.tanh %31 : vector<2x32xf32>
    %cst_11 = arith.constant 1.000000e+00 : f32
    %33 = vector.broadcast %cst_11 : f32 to vector<2x32xf32>
    %34 = arith.subf %33, %25 : vector<2x32xf32>
    %35 = arith.mulf %34, %32 : vector<2x32xf32>
    %36 = arith.mulf %25, %5 : vector<2x32xf32>
    %37 = arith.addf %35, %36 : vector<2x32xf32>
    %38 = arith.index_cast %c0_i32_6 : i32 to index
    %c0_12 = arith.constant 0 : index
    %c0_13 = arith.constant 0 : index
    %39 = vector.load %arg5[%38, %c0_12, %c0_13] : memref<8x2x32xf32, #tpu.memory_space<vmem>>, vector<1x2x32xf32>
    %40 = vector.shape_cast %39 : vector<1x2x32xf32> to vector<2x32xf32>
    %41 = vector.shape_cast %37 : vector<2x32xf32> to vector<1x2x32xf32>
    tpu.vector_store %arg5[%38, %c0_12, %c0_13], %41 {strides = array<i32>} : memref<8x2x32xf32, #tpu.memory_space<vmem>>, vector<1x2x32xf32>,
    %c1_i32 = arith.constant 1 : i32
    %42 = arith.index_cast %c1_i32 : i32 to index
    %c0_14 = arith.constant 0 : index
    %c0_15 = arith.constant 0 : index
    %43 = vector.load %arg1[%42, %c0_14, %c0_15] : memref<8x2x96xf32, #tpu.memory_space<vmem>>, vector<1x2x96xf32>
    %44 = vector.shape_cast %43 : vector<1x2x96xf32> to vector<2x96xf32>
    %cst_16 = arith.constant dense<0.000000e+00> : vector<2x96xf32>
    %45 = tpu.matmul %37, %3, %cst_16 {dimension_numbers = #tpu.dot_dimension_numbers<[1], [0], [0], [1], [0, 0, 1, 1], [], []>} : vector<2x32xf32>, vector<32x96xf32>, vector<2x96xf32> -> vector<2x96xf32>
    %46 = vector.extract_strided_slice %44 {offsets = [0, 0], sizes = [2, 32], strides = [1, 1]} : vector<2x96xf32> to vector<2x32xf32>
    %47 = vector.extract_strided_slice %45 {offsets = [0, 0], sizes = [2, 32], strides = [1, 1]} : vector<2x96xf32> to vector<2x32xf32>
    %48 = arith.addf %46, %47 : vector<2x32xf32>
    %49 = arith.negf %48 : vector<2x32xf32>
    %50 = math.exp %49 : vector<2x32xf32>
    %cst_17 = arith.constant 1.000000e+00 : f32
    %51 = vector.broadcast %cst_17 : f32 to vector<2x32xf32>
    %52 = arith.addf %51, %50 : vector<2x32xf32>
    %53 = arith.divf %51, %52 : vector<2x32xf32>
    %54 = vector.extract_strided_slice %44 {offsets = [0, 32], sizes = [2, 32], strides = [1, 1]} : vector<2x96xf32> to vector<2x32xf32>
    %55 = vector.extract_strided_slice %45 {offsets = [0, 32], sizes = [2, 32], strides = [1, 1]} : vector<2x96xf32> to vector<2x32xf32>
    %56 = arith.addf %54, %55 : vector<2x32xf32>
    %57 = arith.negf %56 : vector<2x32xf32>
    %58 = math.exp %57 : vector<2x32xf32>
    %cst_18 = arith.constant 1.000000e+00 : f32
    %59 = vector.broadcast %cst_18 : f32 to vector<2x32xf32>
    %60 = arith.addf %59, %58 : vector<2x32xf32>
    %61 = arith.divf %59, %60 : vector<2x32xf32>
    %62 = vector.extract_strided_slice %44 {offsets = [0, 64], sizes = [2, 32], strides = [1, 1]} : vector<2x96xf32> to vector<2x32xf32>
    %63 = vector.extract_strided_slice %45 {offsets = [0, 64], sizes = [2, 32], strides = [1, 1]} : vector<2x96xf32> to vector<2x32xf32>
    %64 = vector.broadcast %4 : vector<1x32xf32> to vector<2x32xf32>
    %65 = arith.addf %63, %64 : vector<2x32xf32>
    %66 = arith.mulf %53, %65 : vector<2x32xf32>
    %67 = arith.addf %62, %66 : vector<2x32xf32>
    %68 = math.tanh %67 : vector<2x32xf32>
    %cst_19 = arith.constant 1.000000e+00 : f32
    %69 = vector.broadcast %cst_19 : f32 to vector<2x32xf32>
    %70 = arith.subf %69, %61 : vector<2x32xf32>
    %71 = arith.mulf %70, %68 : vector<2x32xf32>
    %72 = arith.mulf %61, %37 : vector<2x32xf32>
    %73 = arith.addf %71, %72 : vector<2x32xf32>
    %74 = arith.index_cast %c1_i32 : i32 to index
    %c0_20 = arith.constant 0 : index
    %c0_21 = arith.constant 0 : index
    %75 = vector.load %arg5[%74, %c0_20, %c0_21] : memref<8x2x32xf32, #tpu.memory_space<vmem>>, vector<1x2x32xf32>
    %76 = vector.shape_cast %75 : vector<1x2x32xf32> to vector<2x32xf32>
    %77 = vector.shape_cast %73 : vector<2x32xf32> to vector<1x2x32xf32>
    tpu.vector_store %arg5[%74, %c0_20, %c0_21], %77 {strides = array<i32>} : memref<8x2x32xf32, #tpu.memory_space<vmem>>, vector<1x2x32xf32>,
    %c2_i32 = arith.constant 2 : i32
    %78 = arith.index_cast %c2_i32 : i32 to index
    %c0_22 = arith.constant 0 : index
    %c0_23 = arith.constant 0 : index
    %79 = vector.load %arg1[%78, %c0_22, %c0_23] : memref<8x2x96xf32, #tpu.memory_space<vmem>>, vector<1x2x96xf32>
    %80 = vector.shape_cast %79 : vector<1x2x96xf32> to vector<2x96xf32>
    %cst_24 = arith.constant dense<0.000000e+00> : vector<2x96xf32>
    %81 = tpu.matmul %73, %3, %cst_24 {dimension_numbers = #tpu.dot_dimension_numbers<[1], [0], [0], [1], [0, 0, 1, 1], [], []>} : vector<2x32xf32>, vector<32x96xf32>, vector<2x96xf32> -> vector<2x96xf32>
    %82 = vector.extract_strided_slice %80 {offsets = [0, 0], sizes = [2, 32], strides = [1, 1]} : vector<2x96xf32> to vector<2x32xf32>
    %83 = vector.extract_strided_slice %81 {offsets = [0, 0], sizes = [2, 32], strides = [1, 1]} : vector<2x96xf32> to vector<2x32xf32>
    %84 = arith.addf %82, %83 : vector<2x32xf32>
    %85 = arith.negf %84 : vector<2x32xf32>
    %86 = math.exp %85 : vector<2x32xf32>
    %cst_25 = arith.constant 1.000000e+00 : f32
    %87 = vector.broadcast %cst_25 : f32 to vector<2x32xf32>
    %88 = arith.addf %87, %86 : vector<2x32xf32>
    %89 = arith.divf %87, %88 : vector<2x32xf32>
    %90 = vector.extract_strided_slice %80 {offsets = [0, 32], sizes = [2, 32], strides = [1, 1]} : vector<2x96xf32> to vector<2x32xf32>
    %91 = vector.extract_strided_slice %81 {offsets = [0, 32], sizes = [2, 32], strides = [1, 1]} : vector<2x96xf32> to vector<2x32xf32>
    %92 = arith.addf %90, %91 : vector<2x32xf32>
    %93 = arith.negf %92 : vector<2x32xf32>
    %94 = math.exp %93 : vector<2x32xf32>
    %cst_26 = arith.constant 1.000000e+00 : f32
    %95 = vector.broadcast %cst_26 : f32 to vector<2x32xf32>
    %96 = arith.addf %95, %94 : vector<2x32xf32>
    %97 = arith.divf %95, %96 : vector<2x32xf32>
    %98 = vector.extract_strided_slice %80 {offsets = [0, 64], sizes = [2, 32], strides = [1, 1]} : vector<2x96xf32> to vector<2x32xf32>
    %99 = vector.extract_strided_slice %81 {offsets = [0, 64], sizes = [2, 32], strides = [1, 1]} : vector<2x96xf32> to vector<2x32xf32>
    %100 = vector.broadcast %4 : vector<1x32xf32> to vector<2x32xf32>
    %101 = arith.addf %99, %100 : vector<2x32xf32>
    %102 = arith.mulf %89, %101 : vector<2x32xf32>
    %103 = arith.addf %98, %102 : vector<2x32xf32>
    %104 = math.tanh %103 : vector<2x32xf32>
    %cst_27 = arith.constant 1.000000e+00 : f32
    %105 = vector.broadcast %cst_27 : f32 to vector<2x32xf32>
    %106 = arith.subf %105, %97 : vector<2x32xf32>
    %107 = arith.mulf %106, %104 : vector<2x32xf32>
    %108 = arith.mulf %97, %73 : vector<2x32xf32>
    %109 = arith.addf %107, %108 : vector<2x32xf32>
    %110 = arith.index_cast %c2_i32 : i32 to index
    %c0_28 = arith.constant 0 : index
    %c0_29 = arith.constant 0 : index
    %111 = vector.load %arg5[%110, %c0_28, %c0_29] : memref<8x2x32xf32, #tpu.memory_space<vmem>>, vector<1x2x32xf32>
    %112 = vector.shape_cast %111 : vector<1x2x32xf32> to vector<2x32xf32>
    %113 = vector.shape_cast %109 : vector<2x32xf32> to vector<1x2x32xf32>
    tpu.vector_store %arg5[%110, %c0_28, %c0_29], %113 {strides = array<i32>} : memref<8x2x32xf32, #tpu.memory_space<vmem>>, vector<1x2x32xf32>,
    %c3_i32 = arith.constant 3 : i32
    %114 = arith.index_cast %c3_i32 : i32 to index
    %c0_30 = arith.constant 0 : index
    %c0_31 = arith.constant 0 : index
    %115 = vector.load %arg1[%114, %c0_30, %c0_31] : memref<8x2x96xf32, #tpu.memory_space<vmem>>, vector<1x2x96xf32>
    %116 = vector.shape_cast %115 : vector<1x2x96xf32> to vector<2x96xf32>
    %cst_32 = arith.constant dense<0.000000e+00> : vector<2x96xf32>
    %117 = tpu.matmul %109, %3, %cst_32 {dimension_numbers = #tpu.dot_dimension_numbers<[1], [0], [0], [1], [0, 0, 1, 1], [], []>} : vector<2x32xf32>, vector<32x96xf32>, vector<2x96xf32> -> vector<2x96xf32>
    %118 = vector.extract_strided_slice %116 {offsets = [0, 0], sizes = [2, 32], strides = [1, 1]} : vector<2x96xf32> to vector<2x32xf32>
    %119 = vector.extract_strided_slice %117 {offsets = [0, 0], sizes = [2, 32], strides = [1, 1]} : vector<2x96xf32> to vector<2x32xf32>
    %120 = arith.addf %118, %119 : vector<2x32xf32>
    %121 = arith.negf %120 : vector<2x32xf32>
    %122 = math.exp %121 : vector<2x32xf32>
    %cst_33 = arith.constant 1.000000e+00 : f32
    %123 = vector.broadcast %cst_33 : f32 to vector<2x32xf32>
    %124 = arith.addf %123, %122 : vector<2x32xf32>
    %125 = arith.divf %123, %124 : vector<2x32xf32>
    %126 = vector.extract_strided_slice %116 {offsets = [0, 32], sizes = [2, 32], strides = [1, 1]} : vector<2x96xf32> to vector<2x32xf32>
    %127 = vector.extract_strided_slice %117 {offsets = [0, 32], sizes = [2, 32], strides = [1, 1]} : vector<2x96xf32> to vector<2x32xf32>
    %128 = arith.addf %126, %127 : vector<2x32xf32>
    %129 = arith.negf %128 : vector<2x32xf32>
    %130 = math.exp %129 : vector<2x32xf32>
    %cst_34 = arith.constant 1.000000e+00 : f32
    %131 = vector.broadcast %cst_34 : f32 to vector<2x32xf32>
    %132 = arith.addf %131, %130 : vector<2x32xf32>
    %133 = arith.divf %131, %132 : vector<2x32xf32>
    %134 = vector.extract_strided_slice %116 {offsets = [0, 64], sizes = [2, 32], strides = [1, 1]} : vector<2x96xf32> to vector<2x32xf32>
    %135 = vector.extract_strided_slice %117 {offsets = [0, 64], sizes = [2, 32], strides = [1, 1]} : vector<2x96xf32> to vector<2x32xf32>
    %136 = vector.broadcast %4 : vector<1x32xf32> to vector<2x32xf32>
    %137 = arith.addf %135, %136 : vector<2x32xf32>
    %138 = arith.mulf %125, %137 : vector<2x32xf32>
    %139 = arith.addf %134, %138 : vector<2x32xf32>
    %140 = math.tanh %139 : vector<2x32xf32>
    %cst_35 = arith.constant 1.000000e+00 : f32
    %141 = vector.broadcast %cst_35 : f32 to vector<2x32xf32>
    %142 = arith.subf %141, %133 : vector<2x32xf32>
    %143 = arith.mulf %142, %140 : vector<2x32xf32>
    %144 = arith.mulf %133, %109 : vector<2x32xf32>
    %145 = arith.addf %143, %144 : vector<2x32xf32>
    %146 = arith.index_cast %c3_i32 : i32 to index
    %c0_36 = arith.constant 0 : index
    %c0_37 = arith.constant 0 : index
    %147 = vector.load %arg5[%146, %c0_36, %c0_37] : memref<8x2x32xf32, #tpu.memory_space<vmem>>, vector<1x2x32xf32>
    %148 = vector.shape_cast %147 : vector<1x2x32xf32> to vector<2x32xf32>
    %149 = vector.shape_cast %145 : vector<2x32xf32> to vector<1x2x32xf32>
    tpu.vector_store %arg5[%146, %c0_36, %c0_37], %149 {strides = array<i32>} : memref<8x2x32xf32, #tpu.memory_space<vmem>>, vector<1x2x32xf32>,
    %c4_i32 = arith.constant 4 : i32
    %150 = arith.index_cast %c4_i32 : i32 to index
    %c0_38 = arith.constant 0 : index
    %c0_39 = arith.constant 0 : index
    %151 = vector.load %arg1[%150, %c0_38, %c0_39] : memref<8x2x96xf32, #tpu.memory_space<vmem>>, vector<1x2x96xf32>
    %152 = vector.shape_cast %151 : vector<1x2x96xf32> to vector<2x96xf32>
    %cst_40 = arith.constant dense<0.000000e+00> : vector<2x96xf32>
    %153 = tpu.matmul %145, %3, %cst_40 {dimension_numbers = #tpu.dot_dimension_numbers<[1], [0], [0], [1], [0, 0, 1, 1], [], []>} : vector<2x32xf32>, vector<32x96xf32>, vector<2x96xf32> -> vector<2x96xf32>
    %154 = vector.extract_strided_slice %152 {offsets = [0, 0], sizes = [2, 32], strides = [1, 1]} : vector<2x96xf32> to vector<2x32xf32>
    %155 = vector.extract_strided_slice %153 {offsets = [0, 0], sizes = [2, 32], strides = [1, 1]} : vector<2x96xf32> to vector<2x32xf32>
    %156 = arith.addf %154, %155 : vector<2x32xf32>
    %157 = arith.negf %156 : vector<2x32xf32>
    %158 = math.exp %157 : vector<2x32xf32>
    %cst_41 = arith.constant 1.000000e+00 : f32
    %159 = vector.broadcast %cst_41 : f32 to vector<2x32xf32>
    %160 = arith.addf %159, %158 : vector<2x32xf32>
    %161 = arith.divf %159, %160 : vector<2x32xf32>
    %162 = vector.extract_strided_slice %152 {offsets = [0, 32], sizes = [2, 32], strides = [1, 1]} : vector<2x96xf32> to vector<2x32xf32>
    %163 = vector.extract_strided_slice %153 {offsets = [0, 32], sizes = [2, 32], strides = [1, 1]} : vector<2x96xf32> to vector<2x32xf32>
    %164 = arith.addf %162, %163 : vector<2x32xf32>
    %165 = arith.negf %164 : vector<2x32xf32>
    %166 = math.exp %165 : vector<2x32xf32>
    %cst_42 = arith.constant 1.000000e+00 : f32
    %167 = vector.broadcast %cst_42 : f32 to vector<2x32xf32>
    %168 = arith.addf %167, %166 : vector<2x32xf32>
    %169 = arith.divf %167, %168 : vector<2x32xf32>
    %170 = vector.extract_strided_slice %152 {offsets = [0, 64], sizes = [2, 32], strides = [1, 1]} : vector<2x96xf32> to vector<2x32xf32>
    %171 = vector.extract_strided_slice %153 {offsets = [0, 64], sizes = [2, 32], strides = [1, 1]} : vector<2x96xf32> to vector<2x32xf32>
    %172 = vector.broadcast %4 : vector<1x32xf32> to vector<2x32xf32>
    %173 = arith.addf %171, %172 : vector<2x32xf32>
    %174 = arith.mulf %161, %173 : vector<2x32xf32>
    %175 = arith.addf %170, %174 : vector<2x32xf32>
    %176 = math.tanh %175 : vector<2x32xf32>
    %cst_43 = arith.constant 1.000000e+00 : f32
    %177 = vector.broadcast %cst_43 : f32 to vector<2x32xf32>
    %178 = arith.subf %177, %169 : vector<2x32xf32>
    %179 = arith.mulf %178, %176 : vector<2x32xf32>
    %180 = arith.mulf %169, %145 : vector<2x32xf32>
    %181 = arith.addf %179, %180 : vector<2x32xf32>
    %182 = arith.index_cast %c4_i32 : i32 to index
    %c0_44 = arith.constant 0 : index
    %c0_45 = arith.constant 0 : index
    %183 = vector.load %arg5[%182, %c0_44, %c0_45] : memref<8x2x32xf32, #tpu.memory_space<vmem>>, vector<1x2x32xf32>
    %184 = vector.shape_cast %183 : vector<1x2x32xf32> to vector<2x32xf32>
    %185 = vector.shape_cast %181 : vector<2x32xf32> to vector<1x2x32xf32>
    tpu.vector_store %arg5[%182, %c0_44, %c0_45], %185 {strides = array<i32>} : memref<8x2x32xf32, #tpu.memory_space<vmem>>, vector<1x2x32xf32>,
    %c5_i32 = arith.constant 5 : i32
    %186 = arith.index_cast %c5_i32 : i32 to index
    %c0_46 = arith.constant 0 : index
    %c0_47 = arith.constant 0 : index
    %187 = vector.load %arg1[%186, %c0_46, %c0_47] : memref<8x2x96xf32, #tpu.memory_space<vmem>>, vector<1x2x96xf32>
    %188 = vector.shape_cast %187 : vector<1x2x96xf32> to vector<2x96xf32>
    %cst_48 = arith.constant dense<0.000000e+00> : vector<2x96xf32>
    %189 = tpu.matmul %181, %3, %cst_48 {dimension_numbers = #tpu.dot_dimension_numbers<[1], [0], [0], [1], [0, 0, 1, 1], [], []>} : vector<2x32xf32>, vector<32x96xf32>, vector<2x96xf32> -> vector<2x96xf32>
    %190 = vector.extract_strided_slice %188 {offsets = [0, 0], sizes = [2, 32], strides = [1, 1]} : vector<2x96xf32> to vector<2x32xf32>
    %191 = vector.extract_strided_slice %189 {offsets = [0, 0], sizes = [2, 32], strides = [1, 1]} : vector<2x96xf32> to vector<2x32xf32>
    %192 = arith.addf %190, %191 : vector<2x32xf32>
    %193 = arith.negf %192 : vector<2x32xf32>
    %194 = math.exp %193 : vector<2x32xf32>
    %cst_49 = arith.constant 1.000000e+00 : f32
    %195 = vector.broadcast %cst_49 : f32 to vector<2x32xf32>
    %196 = arith.addf %195, %194 : vector<2x32xf32>
    %197 = arith.divf %195, %196 : vector<2x32xf32>
    %198 = vector.extract_strided_slice %188 {offsets = [0, 32], sizes = [2, 32], strides = [1, 1]} : vector<2x96xf32> to vector<2x32xf32>
    %199 = vector.extract_strided_slice %189 {offsets = [0, 32], sizes = [2, 32], strides = [1, 1]} : vector<2x96xf32> to vector<2x32xf32>
    %200 = arith.addf %198, %199 : vector<2x32xf32>
    %201 = arith.negf %200 : vector<2x32xf32>
    %202 = math.exp %201 : vector<2x32xf32>
    %cst_50 = arith.constant 1.000000e+00 : f32
    %203 = vector.broadcast %cst_50 : f32 to vector<2x32xf32>
    %204 = arith.addf %203, %202 : vector<2x32xf32>
    %205 = arith.divf %203, %204 : vector<2x32xf32>
    %206 = vector.extract_strided_slice %188 {offsets = [0, 64], sizes = [2, 32], strides = [1, 1]} : vector<2x96xf32> to vector<2x32xf32>
    %207 = vector.extract_strided_slice %189 {offsets = [0, 64], sizes = [2, 32], strides = [1, 1]} : vector<2x96xf32> to vector<2x32xf32>
    %208 = vector.broadcast %4 : vector<1x32xf32> to vector<2x32xf32>
    %209 = arith.addf %207, %208 : vector<2x32xf32>
    %210 = arith.mulf %197, %209 : vector<2x32xf32>
    %211 = arith.addf %206, %210 : vector<2x32xf32>
    %212 = math.tanh %211 : vector<2x32xf32>
    %cst_51 = arith.constant 1.000000e+00 : f32
    %213 = vector.broadcast %cst_51 : f32 to vector<2x32xf32>
    %214 = arith.subf %213, %205 : vector<2x32xf32>
    %215 = arith.mulf %214, %212 : vector<2x32xf32>
    %216 = arith.mulf %205, %181 : vector<2x32xf32>
    %217 = arith.addf %215, %216 : vector<2x32xf32>
    %218 = arith.index_cast %c5_i32 : i32 to index
    %c0_52 = arith.constant 0 : index
    %c0_53 = arith.constant 0 : index
    %219 = vector.load %arg5[%218, %c0_52, %c0_53] : memref<8x2x32xf32, #tpu.memory_space<vmem>>, vector<1x2x32xf32>
    %220 = vector.shape_cast %219 : vector<1x2x32xf32> to vector<2x32xf32>
    %221 = vector.shape_cast %217 : vector<2x32xf32> to vector<1x2x32xf32>
    tpu.vector_store %arg5[%218, %c0_52, %c0_53], %221 {strides = array<i32>} : memref<8x2x32xf32, #tpu.memory_space<vmem>>, vector<1x2x32xf32>,
    %c6_i32 = arith.constant 6 : i32
    %222 = arith.index_cast %c6_i32 : i32 to index
    %c0_54 = arith.constant 0 : index
    %c0_55 = arith.constant 0 : index
    %223 = vector.load %arg1[%222, %c0_54, %c0_55] : memref<8x2x96xf32, #tpu.memory_space<vmem>>, vector<1x2x96xf32>
    %224 = vector.shape_cast %223 : vector<1x2x96xf32> to vector<2x96xf32>
    %cst_56 = arith.constant dense<0.000000e+00> : vector<2x96xf32>
    %225 = tpu.matmul %217, %3, %cst_56 {dimension_numbers = #tpu.dot_dimension_numbers<[1], [0], [0], [1], [0, 0, 1, 1], [], []>} : vector<2x32xf32>, vector<32x96xf32>, vector<2x96xf32> -> vector<2x96xf32>
    %226 = vector.extract_strided_slice %224 {offsets = [0, 0], sizes = [2, 32], strides = [1, 1]} : vector<2x96xf32> to vector<2x32xf32>
    %227 = vector.extract_strided_slice %225 {offsets = [0, 0], sizes = [2, 32], strides = [1, 1]} : vector<2x96xf32> to vector<2x32xf32>
    %228 = arith.addf %226, %227 : vector<2x32xf32>
    %229 = arith.negf %228 : vector<2x32xf32>
    %230 = math.exp %229 : vector<2x32xf32>
    %cst_57 = arith.constant 1.000000e+00 : f32
    %231 = vector.broadcast %cst_57 : f32 to vector<2x32xf32>
    %232 = arith.addf %231, %230 : vector<2x32xf32>
    %233 = arith.divf %231, %232 : vector<2x32xf32>
    %234 = vector.extract_strided_slice %224 {offsets = [0, 32], sizes = [2, 32], strides = [1, 1]} : vector<2x96xf32> to vector<2x32xf32>
    %235 = vector.extract_strided_slice %225 {offsets = [0, 32], sizes = [2, 32], strides = [1, 1]} : vector<2x96xf32> to vector<2x32xf32>
    %236 = arith.addf %234, %235 : vector<2x32xf32>
    %237 = arith.negf %236 : vector<2x32xf32>
    %238 = math.exp %237 : vector<2x32xf32>
    %cst_58 = arith.constant 1.000000e+00 : f32
    %239 = vector.broadcast %cst_58 : f32 to vector<2x32xf32>
    %240 = arith.addf %239, %238 : vector<2x32xf32>
    %241 = arith.divf %239, %240 : vector<2x32xf32>
    %242 = vector.extract_strided_slice %224 {offsets = [0, 64], sizes = [2, 32], strides = [1, 1]} : vector<2x96xf32> to vector<2x32xf32>
    %243 = vector.extract_strided_slice %225 {offsets = [0, 64], sizes = [2, 32], strides = [1, 1]} : vector<2x96xf32> to vector<2x32xf32>
    %244 = vector.broadcast %4 : vector<1x32xf32> to vector<2x32xf32>
    %245 = arith.addf %243, %244 : vector<2x32xf32>
    %246 = arith.mulf %233, %245 : vector<2x32xf32>
    %247 = arith.addf %242, %246 : vector<2x32xf32>
    %248 = math.tanh %247 : vector<2x32xf32>
    %cst_59 = arith.constant 1.000000e+00 : f32
    %249 = vector.broadcast %cst_59 : f32 to vector<2x32xf32>
    %250 = arith.subf %249, %241 : vector<2x32xf32>
    %251 = arith.mulf %250, %248 : vector<2x32xf32>
    %252 = arith.mulf %241, %217 : vector<2x32xf32>
    %253 = arith.addf %251, %252 : vector<2x32xf32>
    %254 = arith.index_cast %c6_i32 : i32 to index
    %c0_60 = arith.constant 0 : index
    %c0_61 = arith.constant 0 : index
    %255 = vector.load %arg5[%254, %c0_60, %c0_61] : memref<8x2x32xf32, #tpu.memory_space<vmem>>, vector<1x2x32xf32>
    %256 = vector.shape_cast %255 : vector<1x2x32xf32> to vector<2x32xf32>
    %257 = vector.shape_cast %253 : vector<2x32xf32> to vector<1x2x32xf32>
    tpu.vector_store %arg5[%254, %c0_60, %c0_61], %257 {strides = array<i32>} : memref<8x2x32xf32, #tpu.memory_space<vmem>>, vector<1x2x32xf32>,
    %c7_i32 = arith.constant 7 : i32
    %258 = arith.index_cast %c7_i32 : i32 to index
    %c0_62 = arith.constant 0 : index
    %c0_63 = arith.constant 0 : index
    %259 = vector.load %arg1[%258, %c0_62, %c0_63] : memref<8x2x96xf32, #tpu.memory_space<vmem>>, vector<1x2x96xf32>
    %260 = vector.shape_cast %259 : vector<1x2x96xf32> to vector<2x96xf32>
    %cst_64 = arith.constant dense<0.000000e+00> : vector<2x96xf32>
    %261 = tpu.matmul %253, %3, %cst_64 {dimension_numbers = #tpu.dot_dimension_numbers<[1], [0], [0], [1], [0, 0, 1, 1], [], []>} : vector<2x32xf32>, vector<32x96xf32>, vector<2x96xf32> -> vector<2x96xf32>
    %262 = vector.extract_strided_slice %260 {offsets = [0, 0], sizes = [2, 32], strides = [1, 1]} : vector<2x96xf32> to vector<2x32xf32>
    %263 = vector.extract_strided_slice %261 {offsets = [0, 0], sizes = [2, 32], strides = [1, 1]} : vector<2x96xf32> to vector<2x32xf32>
    %264 = arith.addf %262, %263 : vector<2x32xf32>
    %265 = arith.negf %264 : vector<2x32xf32>
    %266 = math.exp %265 : vector<2x32xf32>
    %cst_65 = arith.constant 1.000000e+00 : f32
    %267 = vector.broadcast %cst_65 : f32 to vector<2x32xf32>
    %268 = arith.addf %267, %266 : vector<2x32xf32>
    %269 = arith.divf %267, %268 : vector<2x32xf32>
    %270 = vector.extract_strided_slice %260 {offsets = [0, 32], sizes = [2, 32], strides = [1, 1]} : vector<2x96xf32> to vector<2x32xf32>
    %271 = vector.extract_strided_slice %261 {offsets = [0, 32], sizes = [2, 32], strides = [1, 1]} : vector<2x96xf32> to vector<2x32xf32>
    %272 = arith.addf %270, %271 : vector<2x32xf32>
    %273 = arith.negf %272 : vector<2x32xf32>
    %274 = math.exp %273 : vector<2x32xf32>
    %cst_66 = arith.constant 1.000000e+00 : f32
    %275 = vector.broadcast %cst_66 : f32 to vector<2x32xf32>
    %276 = arith.addf %275, %274 : vector<2x32xf32>
    %277 = arith.divf %275, %276 : vector<2x32xf32>
    %278 = vector.extract_strided_slice %260 {offsets = [0, 64], sizes = [2, 32], strides = [1, 1]} : vector<2x96xf32> to vector<2x32xf32>
    %279 = vector.extract_strided_slice %261 {offsets = [0, 64], sizes = [2, 32], strides = [1, 1]} : vector<2x96xf32> to vector<2x32xf32>
    %280 = vector.broadcast %4 : vector<1x32xf32> to vector<2x32xf32>
    %281 = arith.addf %279, %280 : vector<2x32xf32>
    %282 = arith.mulf %269, %281 : vector<2x32xf32>
    %283 = arith.addf %278, %282 : vector<2x32xf32>
    %284 = math.tanh %283 : vector<2x32xf32>
    %cst_67 = arith.constant 1.000000e+00 : f32
    %285 = vector.broadcast %cst_67 : f32 to vector<2x32xf32>
    %286 = arith.subf %285, %277 : vector<2x32xf32>
    %287 = arith.mulf %286, %284 : vector<2x32xf32>
    %288 = arith.mulf %277, %253 : vector<2x32xf32>
    %289 = arith.addf %287, %288 : vector<2x32xf32>
    %290 = arith.index_cast %c7_i32 : i32 to index
    %c0_68 = arith.constant 0 : index
    %c0_69 = arith.constant 0 : index
    %291 = vector.load %arg5[%290, %c0_68, %c0_69] : memref<8x2x32xf32, #tpu.memory_space<vmem>>, vector<1x2x32xf32>
    %292 = vector.shape_cast %291 : vector<1x2x32xf32> to vector<2x32xf32>
    %293 = vector.shape_cast %289 : vector<2x32xf32> to vector<1x2x32xf32>
    tpu.vector_store %arg5[%290, %c0_68, %c0_69], %293 {strides = array<i32>} : memref<8x2x32xf32, #tpu.memory_space<vmem>>, vector<1x2x32xf32>,
    %c8_i32 = arith.constant 8 : i32
    %c0_70 = arith.constant 0 : index
    %c0_71 = arith.constant 0 : index
    %294 = vector.load %arg6[%c0_70, %c0_71] : memref<2x32xf32, #tpu.memory_space<vmem>>, vector<2x32xf32>
    tpu.vector_store %arg6[%c0_70, %c0_71], %289 {strides = array<i32>} : memref<2x32xf32, #tpu.memory_space<vmem>>, vector<2x32xf32>,
    return
  }
  func.func @transform_0(%arg0: i32) -> (i32, i32, i32) {
    %c0_i32 = arith.constant 0 : i32
    %c0_i32_0 = arith.constant 0 : i32
    %c0_i32_1 = arith.constant 0 : i32
    return %arg0, %c0_i32, %c0_i32_0 : i32, i32, i32
  }
  func.func @transform_1(%arg0: i32) -> (i32, i32) {
    %c0_i32 = arith.constant 0 : i32
    %c0_i32_0 = arith.constant 0 : i32
    %c0_i32_1 = arith.constant 0 : i32
    return %c0_i32, %c0_i32_0 : i32, i32
  }
  func.func @transform_2(%arg0: i32) -> (i32, i32) {
    %c0_i32 = arith.constant 0 : i32
    %c0_i32_0 = arith.constant 0 : i32
    %c0_i32_1 = arith.constant 0 : i32
    return %c0_i32, %c0_i32_0 : i32, i32
  }
  func.func @transform_3(%arg0: i32) -> (i32, i32) {
    %c0_i32 = arith.constant 0 : i32
    %c0_i32_0 = arith.constant 0 : i32
    %c0_i32_1 = arith.constant 0 : i32
    return %c0_i32, %c0_i32_0 : i32, i32
  }
  func.func @transform_4(%arg0: i32) -> (i32, i32, i32) {
    %c0_i32 = arith.constant 0 : i32
    %c0_i32_0 = arith.constant 0 : i32
    %c0_i32_1 = arith.constant 0 : i32
    return %arg0, %c0_i32, %c0_i32_0 : i32, i32, i32
  }
  func.func @transform_5(%arg0: i32) -> (i32, i32) {
    %c0_i32 = arith.constant 0 : i32
    %c0_i32_0 = arith.constant 0 : i32
    %c0_i32_1 = arith.constant 0 : i32
    return %c0_i32, %c0_i32_0 : i32, i32
  }
}

module attributes {stable_mosaic.version = 11 : i64} {
  func.func @gru_recurrence_kernel(%arg0: i32, %arg1: memref<8x2x96xf32, #tpu.memory_space<vmem>>, %arg2: memref<2x32xf32, #tpu.memory_space<vmem>>, %arg3: memref<32x96xf32, #tpu.memory_space<vmem>>, %arg4: memref<1x32xf32, #tpu.memory_space<vmem>>, %arg5: memref<8x2x32xf32, #tpu.memory_space<vmem>>, %arg6: memref<2x32xf32, #tpu.memory_space<vmem>>) attributes {dimension_semantics = [#tpu.dimension_semantics<arbitrary>], iteration_bounds = array<i64: 1>, scalar_prefetch = 0 : i64, scratch_operands = 0 : i64, tpu.core_type = #tpu.core_type<tc>, window_params = [{transform_indices = @transform_0, window_bounds = array<i64: 8, 2, 96>}, {pipeline_mode = #tpu.pipeline_mode<synchronous>, transform_indices = @transform_1, window_bounds = array<i64: 2, 32>}, {pipeline_mode = #tpu.pipeline_mode<synchronous>, transform_indices = @transform_2, window_bounds = array<i64: 32, 96>}, {pipeline_mode = #tpu.pipeline_mode<synchronous>, transform_indices = @transform_3, window_bounds = array<i64: 1, 32>}, {transform_indices = @transform_4, window_bounds = array<i64: 8, 2, 32>}, {pipeline_mode = #tpu.pipeline_mode<synchronous>, transform_indices = @transform_5, window_bounds = array<i64: 2, 32>}]} {
    %c0_i32 = arith.constant 0 : i32
    %0 = arith.cmpi eq, %arg0, %c0_i32 : i32
    %1 = arith.extui %0 : i1 to i32
    %c0_i32_0 = arith.constant 0 : i32
    %2 = arith.cmpi ne, %1, %c0_i32_0 : i32
    scf.if %2 {
      %c0_72 = arith.constant 0 : index
      %c0_73 = arith.constant 0 : index
      %295 = vector.load %arg2[%c0_72, %c0_73] : memref<2x32xf32, #tpu.memory_space<vmem>>, vector<2x32xf32>
      %c0_74 = arith.constant 0 : index
      %c0_75 = arith.constant 0 : index
      %296 = vector.load %arg6[%c0_74, %c0_75] : memref<2x32xf32, #tpu.memory_space<vmem>>, vector<2x32xf32>
      tpu.vector_store %arg6[%c0_74, %c0_75], %295 {strides = array<i32>} : memref<2x32xf32, #tpu.memory_space<vmem>>, vector<2x32xf32>,
    } else {
    }
    %c0 = arith.constant 0 : index
    %c0_1 = arith.constant 0 : index
    %3 = vector.load %arg3[%c0, %c0_1] : memref<32x96xf32, #tpu.memory_space<vmem>>, vector<32x96xf32>
    %c0_2 = arith.constant 0 : index
    %c0_3 = arith.constant 0 : index
    %4 = vector.load %arg4[%c0_2, %c0_3] : memref<1x32xf32, #tpu.memory_space<vmem>>, vector<1x32xf32>
    %c0_4 = arith.constant 0 : index
    %c0_5 = arith.constant 0 : index
    %5 = vector.load %arg6[%c0_4, %c0_5] : memref<2x32xf32, #tpu.memory_space<vmem>>, vector<2x32xf32>
    %c0_i32_6 = arith.constant 0 : i32
    %6 = arith.index_cast %c0_i32_6 : i32 to index
    %c0_7 = arith.constant 0 : index
    %c0_8 = arith.constant 0 : index
    %7 = vector.load %arg1[%6, %c0_7, %c0_8] : memref<8x2x96xf32, #tpu.memory_space<vmem>>, vector<1x2x96xf32>
    %8 = vector.shape_cast %7 : vector<1x2x96xf32> to vector<2x96xf32>
    %cst = arith.constant dense<0.000000e+00> : vector<2x96xf32>
    %9 = tpu.matmul %5, %3, %cst {dimension_numbers = #tpu.dot_dimension_numbers<[1], [0], [0], [1], [0, 0, 1, 1], [], []>} : vector<2x32xf32>, vector<32x96xf32>, vector<2x96xf32> -> vector<2x96xf32>
    %10 = vector.extract_strided_slice %8 {offsets = [0, 0], sizes = [2, 32], strides = [1, 1]} : vector<2x96xf32> to vector<2x32xf32>
    %11 = vector.extract_strided_slice %9 {offsets = [0, 0], sizes = [2, 32], strides = [1, 1]} : vector<2x96xf32> to vector<2x32xf32>
    %12 = arith.addf %10, %11 : vector<2x32xf32>
    %13 = arith.negf %12 : vector<2x32xf32>
    %14 = math.exp %13 : vector<2x32xf32>
    %cst_9 = arith.constant 1.000000e+00 : f32
    %15 = vector.broadcast %cst_9 : f32 to vector<2x32xf32>
    %16 = arith.addf %15, %14 : vector<2x32xf32>
    %17 = arith.divf %15, %16 : vector<2x32xf32>
    %18 = vector.extract_strided_slice %8 {offsets = [0, 32], sizes = [2, 32], strides = [1, 1]} : vector<2x96xf32> to vector<2x32xf32>
    %19 = vector.extract_strided_slice %9 {offsets = [0, 32], sizes = [2, 32], strides = [1, 1]} : vector<2x96xf32> to vector<2x32xf32>
    %20 = arith.addf %18, %19 : vector<2x32xf32>
    %21 = arith.negf %20 : vector<2x32xf32>
    %22 = math.exp %21 : vector<2x32xf32>
    %cst_10 = arith.constant 1.000000e+00 : f32
    %23 = vector.broadcast %cst_10 : f32 to vector<2x32xf32>
    %24 = arith.addf %23, %22 : vector<2x32xf32>
    %25 = arith.divf %23, %24 : vector<2x32xf32>
    %26 = vector.extract_strided_slice %8 {offsets = [0, 64], sizes = [2, 32], strides = [1, 1]} : vector<2x96xf32> to vector<2x32xf32>
    %27 = vector.extract_strided_slice %9 {offsets = [0, 64], sizes = [2, 32], strides = [1, 1]} : vector<2x96xf32> to vector<2x32xf32>
    %28 = vector.broadcast %4 : vector<1x32xf32> to vector<2x32xf32>
    %29 = arith.addf %27, %28 : vector<2x32xf32>
    %30 = arith.mulf %17, %29 : vector<2x32xf32>
    %31 = arith.addf %26, %30 : vector<2x32xf32>
    %32 = math.tanh %31 : vector<2x32xf32>
    %cst_11 = arith.constant 1.000000e+00 : f32
    %33 = vector.broadcast %cst_11 : f32 to vector<2x32xf32>
    %34 = arith.subf %33, %25 : vector<2x32xf32>
    %35 = arith.mulf %34, %32 : vector<2x32xf32>
    %36 = arith.mulf %25, %5 : vector<2x32xf32>
    %37 = arith.addf %35, %36 : vector<2x32xf32>
    %38 = arith.index_cast %c0_i32_6 : i32 to index
    %c0_12 = arith.constant 0 : index
    %c0_13 = arith.constant 0 : index
    %39 = vector.load %arg5[%38, %c0_12, %c0_13] : memref<8x2x32xf32, #tpu.memory_space<vmem>>, vector<1x2x32xf32>
    %40 = vector.shape_cast %39 : vector<1x2x32xf32> to vector<2x32xf32>
    %41 = vector.shape_cast %37 : vector<2x32xf32> to vector<1x2x32xf32>
    tpu.vector_store %arg5[%38, %c0_12, %c0_13], %41 {strides = array<i32>} : memref<8x2x32xf32, #tpu.memory_space<vmem>>, vector<1x2x32xf32>,
    %c1_i32 = arith.constant 1 : i32
    %42 = arith.index_cast %c1_i32 : i32 to index
    %c0_14 = arith.constant 0 : index
    %c0_15 = arith.constant 0 : index
    %43 = vector.load %arg1[%42, %c0_14, %c0_15] : memref<8x2x96xf32, #tpu.memory_space<vmem>>, vector<1x2x96xf32>
    %44 = vector.shape_cast %43 : vector<1x2x96xf32> to vector<2x96xf32>
    %cst_16 = arith.constant dense<0.000000e+00> : vector<2x96xf32>
    %45 = tpu.matmul %37, %3, %cst_16 {dimension_numbers = #tpu.dot_dimension_numbers<[1], [0], [0], [1], [0, 0, 1, 1], [], []>} : vector<2x32xf32>, vector<32x96xf32>, vector<2x96xf32> -> vector<2x96xf32>
    %46 = vector.extract_strided_slice %44 {offsets = [0, 0], sizes = [2, 32], strides = [1, 1]} : vector<2x96xf32> to vector<2x32xf32>
    %47 = vector.extract_strided_slice %45 {offsets = [0, 0], sizes = [2, 32], strides = [1, 1]} : vector<2x96xf32> to vector<2x32xf32>
    %48 = arith.addf %46, %47 : vector<2x32xf32>
    %49 = arith.negf %48 : vector<2x32xf32>
    %50 = math.exp %49 : vector<2x32xf32>
    %cst_17 = arith.constant 1.000000e+00 : f32
    %51 = vector.broadcast %cst_17 : f32 to vector<2x32xf32>
    %52 = arith.addf %51, %50 : vector<2x32xf32>
    %53 = arith.divf %51, %52 : vector<2x32xf32>
    %54 = vector.extract_strided_slice %44 {offsets = [0, 32], sizes = [2, 32], strides = [1, 1]} : vector<2x96xf32> to vector<2x32xf32>
    %55 = vector.extract_strided_slice %45 {offsets = [0, 32], sizes = [2, 32], strides = [1, 1]} : vector<2x96xf32> to vector<2x32xf32>
    %56 = arith.addf %54, %55 : vector<2x32xf32>
    %57 = arith.negf %56 : vector<2x32xf32>
    %58 = math.exp %57 : vector<2x32xf32>
    %cst_18 = arith.constant 1.000000e+00 : f32
    %59 = vector.broadcast %cst_18 : f32 to vector<2x32xf32>
    %60 = arith.addf %59, %58 : vector<2x32xf32>
    %61 = arith.divf %59, %60 : vector<2x32xf32>
    %62 = vector.extract_strided_slice %44 {offsets = [0, 64], sizes = [2, 32], strides = [1, 1]} : vector<2x96xf32> to vector<2x32xf32>
    %63 = vector.extract_strided_slice %45 {offsets = [0, 64], sizes = [2, 32], strides = [1, 1]} : vector<2x96xf32> to vector<2x32xf32>
    %64 = vector.broadcast %4 : vector<1x32xf32> to vector<2x32xf32>
    %65 = arith.addf %63, %64 : vector<2x32xf32>
    %66 = arith.mulf %53, %65 : vector<2x32xf32>
    %67 = arith.addf %62, %66 : vector<2x32xf32>
    %68 = math.tanh %67 : vector<2x32xf32>
    %cst_19 = arith.constant 1.000000e+00 : f32
    %69 = vector.broadcast %cst_19 : f32 to vector<2x32xf32>
    %70 = arith.subf %69, %61 : vector<2x32xf32>
    %71 = arith.mulf %70, %68 : vector<2x32xf32>
    %72 = arith.mulf %61, %37 : vector<2x32xf32>
    %73 = arith.addf %71, %72 : vector<2x32xf32>
    %74 = arith.index_cast %c1_i32 : i32 to index
    %c0_20 = arith.constant 0 : index
    %c0_21 = arith.constant 0 : index
    %75 = vector.load %arg5[%74, %c0_20, %c0_21] : memref<8x2x32xf32, #tpu.memory_space<vmem>>, vector<1x2x32xf32>
    %76 = vector.shape_cast %75 : vector<1x2x32xf32> to vector<2x32xf32>
    %77 = vector.shape_cast %73 : vector<2x32xf32> to vector<1x2x32xf32>
    tpu.vector_store %arg5[%74, %c0_20, %c0_21], %77 {strides = array<i32>} : memref<8x2x32xf32, #tpu.memory_space<vmem>>, vector<1x2x32xf32>,
    %c2_i32 = arith.constant 2 : i32
    %78 = arith.index_cast %c2_i32 : i32 to index
    %c0_22 = arith.constant 0 : index
    %c0_23 = arith.constant 0 : index
    %79 = vector.load %arg1[%78, %c0_22, %c0_23] : memref<8x2x96xf32, #tpu.memory_space<vmem>>, vector<1x2x96xf32>
    %80 = vector.shape_cast %79 : vector<1x2x96xf32> to vector<2x96xf32>
    %cst_24 = arith.constant dense<0.000000e+00> : vector<2x96xf32>
    %81 = tpu.matmul %73, %3, %cst_24 {dimension_numbers = #tpu.dot_dimension_numbers<[1], [0], [0], [1], [0, 0, 1, 1], [], []>} : vector<2x32xf32>, vector<32x96xf32>, vector<2x96xf32> -> vector<2x96xf32>
    %82 = vector.extract_strided_slice %80 {offsets = [0, 0], sizes = [2, 32], strides = [1, 1]} : vector<2x96xf32> to vector<2x32xf32>
    %83 = vector.extract_strided_slice %81 {offsets = [0, 0], sizes = [2, 32], strides = [1, 1]} : vector<2x96xf32> to vector<2x32xf32>
    %84 = arith.addf %82, %83 : vector<2x32xf32>
    %85 = arith.negf %84 : vector<2x32xf32>
    %86 = math.exp %85 : vector<2x32xf32>
    %cst_25 = arith.constant 1.000000e+00 : f32
    %87 = vector.broadcast %cst_25 : f32 to vector<2x32xf32>
    %88 = arith.addf %87, %86 : vector<2x32xf32>
    %89 = arith.divf %87, %88 : vector<2x32xf32>
    %90 = vector.extract_strided_slice %80 {offsets = [0, 32], sizes = [2, 32], strides = [1, 1]} : vector<2x96xf32> to vector<2x32xf32>
    %91 = vector.extract_strided_slice %81 {offsets = [0, 32], sizes = [2, 32], strides = [1, 1]} : vector<2x96xf32> to vector<2x32xf32>
    %92 = arith.addf %90, %91 : vector<2x32xf32>
    %93 = arith.negf %92 : vector<2x32xf32>
    %94 = math.exp %93 : vector<2x32xf32>
    %cst_26 = arith.constant 1.000000e+00 : f32
    %95 = vector.broadcast %cst_26 : f32 to vector<2x32xf32>
    %96 = arith.addf %95, %94 : vector<2x32xf32>
    %97 = arith.divf %95, %96 : vector<2x32xf32>
    %98 = vector.extract_strided_slice %80 {offsets = [0, 64], sizes = [2, 32], strides = [1, 1]} : vector<2x96xf32> to vector<2x32xf32>
    %99 = vector.extract_strided_slice %81 {offsets = [0, 64], sizes = [2, 32], strides = [1, 1]} : vector<2x96xf32> to vector<2x32xf32>
    %100 = vector.broadcast %4 : vector<1x32xf32> to vector<2x32xf32>
    %101 = arith.addf %99, %100 : vector<2x32xf32>
    %102 = arith.mulf %89, %101 : vector<2x32xf32>
    %103 = arith.addf %98, %102 : vector<2x32xf32>
    %104 = math.tanh %103 : vector<2x32xf32>
    %cst_27 = arith.constant 1.000000e+00 : f32
    %105 = vector.broadcast %cst_27 : f32 to vector<2x32xf32>
    %106 = arith.subf %105, %97 : vector<2x32xf32>
    %107 = arith.mulf %106, %104 : vector<2x32xf32>
    %108 = arith.mulf %97, %73 : vector<2x32xf32>
    %109 = arith.addf %107, %108 : vector<2x32xf32>
    %110 = arith.index_cast %c2_i32 : i32 to index
    %c0_28 = arith.constant 0 : index
    %c0_29 = arith.constant 0 : index
    %111 = vector.load %arg5[%110, %c0_28, %c0_29] : memref<8x2x32xf32, #tpu.memory_space<vmem>>, vector<1x2x32xf32>
    %112 = vector.shape_cast %111 : vector<1x2x32xf32> to vector<2x32xf32>
    %113 = vector.shape_cast %109 : vector<2x32xf32> to vector<1x2x32xf32>
    tpu.vector_store %arg5[%110, %c0_28, %c0_29], %113 {strides = array<i32>} : memref<8x2x32xf32, #tpu.memory_space<vmem>>, vector<1x2x32xf32>,
    %c3_i32 = arith.constant 3 : i32
    %114 = arith.index_cast %c3_i32 : i32 to index
    %c0_30 = arith.constant 0 : index
    %c0_31 = arith.constant 0 : index
    %115 = vector.load %arg1[%114, %c0_30, %c0_31] : memref<8x2x96xf32, #tpu.memory_space<vmem>>, vector<1x2x96xf32>
    %116 = vector.shape_cast %115 : vector<1x2x96xf32> to vector<2x96xf32>
    %cst_32 = arith.constant dense<0.000000e+00> : vector<2x96xf32>
    %117 = tpu.matmul %109, %3, %cst_32 {dimension_numbers = #tpu.dot_dimension_numbers<[1], [0], [0], [1], [0, 0, 1, 1], [], []>} : vector<2x32xf32>, vector<32x96xf32>, vector<2x96xf32> -> vector<2x96xf32>
    %118 = vector.extract_strided_slice %116 {offsets = [0, 0], sizes = [2, 32], strides = [1, 1]} : vector<2x96xf32> to vector<2x32xf32>
    %119 = vector.extract_strided_slice %117 {offsets = [0, 0], sizes = [2, 32], strides = [1, 1]} : vector<2x96xf32> to vector<2x32xf32>
    %120 = arith.addf %118, %119 : vector<2x32xf32>
    %121 = arith.negf %120 : vector<2x32xf32>
    %122 = math.exp %121 : vector<2x32xf32>
    %cst_33 = arith.constant 1.000000e+00 : f32
    %123 = vector.broadcast %cst_33 : f32 to vector<2x32xf32>
    %124 = arith.addf %123, %122 : vector<2x32xf32>
    %125 = arith.divf %123, %124 : vector<2x32xf32>
    %126 = vector.extract_strided_slice %116 {offsets = [0, 32], sizes = [2, 32], strides = [1, 1]} : vector<2x96xf32> to vector<2x32xf32>
    %127 = vector.extract_strided_slice %117 {offsets = [0, 32], sizes = [2, 32], strides = [1, 1]} : vector<2x96xf32> to vector<2x32xf32>
    %128 = arith.addf %126, %127 : vector<2x32xf32>
    %129 = arith.negf %128 : vector<2x32xf32>
    %130 = math.exp %129 : vector<2x32xf32>
    %cst_34 = arith.constant 1.000000e+00 : f32
    %131 = vector.broadcast %cst_34 : f32 to vector<2x32xf32>
    %132 = arith.addf %131, %130 : vector<2x32xf32>
    %133 = arith.divf %131, %132 : vector<2x32xf32>
    %134 = vector.extract_strided_slice %116 {offsets = [0, 64], sizes = [2, 32], strides = [1, 1]} : vector<2x96xf32> to vector<2x32xf32>
    %135 = vector.extract_strided_slice %117 {offsets = [0, 64], sizes = [2, 32], strides = [1, 1]} : vector<2x96xf32> to vector<2x32xf32>
    %136 = vector.broadcast %4 : vector<1x32xf32> to vector<2x32xf32>
    %137 = arith.addf %135, %136 : vector<2x32xf32>
    %138 = arith.mulf %125, %137 : vector<2x32xf32>
    %139 = arith.addf %134, %138 : vector<2x32xf32>
    %140 = math.tanh %139 : vector<2x32xf32>
    %cst_35 = arith.constant 1.000000e+00 : f32
    %141 = vector.broadcast %cst_35 : f32 to vector<2x32xf32>
    %142 = arith.subf %141, %133 : vector<2x32xf32>
    %143 = arith.mulf %142, %140 : vector<2x32xf32>
    %144 = arith.mulf %133, %109 : vector<2x32xf32>
    %145 = arith.addf %143, %144 : vector<2x32xf32>
    %146 = arith.index_cast %c3_i32 : i32 to index
    %c0_36 = arith.constant 0 : index
    %c0_37 = arith.constant 0 : index
    %147 = vector.load %arg5[%146, %c0_36, %c0_37] : memref<8x2x32xf32, #tpu.memory_space<vmem>>, vector<1x2x32xf32>
    %148 = vector.shape_cast %147 : vector<1x2x32xf32> to vector<2x32xf32>
    %149 = vector.shape_cast %145 : vector<2x32xf32> to vector<1x2x32xf32>
    tpu.vector_store %arg5[%146, %c0_36, %c0_37], %149 {strides = array<i32>} : memref<8x2x32xf32, #tpu.memory_space<vmem>>, vector<1x2x32xf32>,
    %c4_i32 = arith.constant 4 : i32
    %150 = arith.index_cast %c4_i32 : i32 to index
    %c0_38 = arith.constant 0 : index
    %c0_39 = arith.constant 0 : index
    %151 = vector.load %arg1[%150, %c0_38, %c0_39] : memref<8x2x96xf32, #tpu.memory_space<vmem>>, vector<1x2x96xf32>
    %152 = vector.shape_cast %151 : vector<1x2x96xf32> to vector<2x96xf32>
    %cst_40 = arith.constant dense<0.000000e+00> : vector<2x96xf32>
    %153 = tpu.matmul %145, %3, %cst_40 {dimension_numbers = #tpu.dot_dimension_numbers<[1], [0], [0], [1], [0, 0, 1, 1], [], []>} : vector<2x32xf32>, vector<32x96xf32>, vector<2x96xf32> -> vector<2x96xf32>
    %154 = vector.extract_strided_slice %152 {offsets = [0, 0], sizes = [2, 32], strides = [1, 1]} : vector<2x96xf32> to vector<2x32xf32>
    %155 = vector.extract_strided_slice %153 {offsets = [0, 0], sizes = [2, 32], strides = [1, 1]} : vector<2x96xf32> to vector<2x32xf32>
    %156 = arith.addf %154, %155 : vector<2x32xf32>
    %157 = arith.negf %156 : vector<2x32xf32>
    %158 = math.exp %157 : vector<2x32xf32>
    %cst_41 = arith.constant 1.000000e+00 : f32
    %159 = vector.broadcast %cst_41 : f32 to vector<2x32xf32>
    %160 = arith.addf %159, %158 : vector<2x32xf32>
    %161 = arith.divf %159, %160 : vector<2x32xf32>
    %162 = vector.extract_strided_slice %152 {offsets = [0, 32], sizes = [2, 32], strides = [1, 1]} : vector<2x96xf32> to vector<2x32xf32>
    %163 = vector.extract_strided_slice %153 {offsets = [0, 32], sizes = [2, 32], strides = [1, 1]} : vector<2x96xf32> to vector<2x32xf32>
    %164 = arith.addf %162, %163 : vector<2x32xf32>
    %165 = arith.negf %164 : vector<2x32xf32>
    %166 = math.exp %165 : vector<2x32xf32>
    %cst_42 = arith.constant 1.000000e+00 : f32
    %167 = vector.broadcast %cst_42 : f32 to vector<2x32xf32>
    %168 = arith.addf %167, %166 : vector<2x32xf32>
    %169 = arith.divf %167, %168 : vector<2x32xf32>
    %170 = vector.extract_strided_slice %152 {offsets = [0, 64], sizes = [2, 32], strides = [1, 1]} : vector<2x96xf32> to vector<2x32xf32>
    %171 = vector.extract_strided_slice %153 {offsets = [0, 64], sizes = [2, 32], strides = [1, 1]} : vector<2x96xf32> to vector<2x32xf32>
    %172 = vector.broadcast %4 : vector<1x32xf32> to vector<2x32xf32>
    %173 = arith.addf %171, %172 : vector<2x32xf32>
    %174 = arith.mulf %161, %173 : vector<2x32xf32>
    %175 = arith.addf %170, %174 : vector<2x32xf32>
    %176 = math.tanh %175 : vector<2x32xf32>
    %cst_43 = arith.constant 1.000000e+00 : f32
    %177 = vector.broadcast %cst_43 : f32 to vector<2x32xf32>
    %178 = arith.subf %177, %169 : vector<2x32xf32>
    %179 = arith.mulf %178, %176 : vector<2x32xf32>
    %180 = arith.mulf %169, %145 : vector<2x32xf32>
    %181 = arith.addf %179, %180 : vector<2x32xf32>
    %182 = arith.index_cast %c4_i32 : i32 to index
    %c0_44 = arith.constant 0 : index
    %c0_45 = arith.constant 0 : index
    %183 = vector.load %arg5[%182, %c0_44, %c0_45] : memref<8x2x32xf32, #tpu.memory_space<vmem>>, vector<1x2x32xf32>
    %184 = vector.shape_cast %183 : vector<1x2x32xf32> to vector<2x32xf32>
    %185 = vector.shape_cast %181 : vector<2x32xf32> to vector<1x2x32xf32>
    tpu.vector_store %arg5[%182, %c0_44, %c0_45], %185 {strides = array<i32>} : memref<8x2x32xf32, #tpu.memory_space<vmem>>, vector<1x2x32xf32>,
    %c5_i32 = arith.constant 5 : i32
    %186 = arith.index_cast %c5_i32 : i32 to index
    %c0_46 = arith.constant 0 : index
    %c0_47 = arith.constant 0 : index
    %187 = vector.load %arg1[%186, %c0_46, %c0_47] : memref<8x2x96xf32, #tpu.memory_space<vmem>>, vector<1x2x96xf32>
    %188 = vector.shape_cast %187 : vector<1x2x96xf32> to vector<2x96xf32>
    %cst_48 = arith.constant dense<0.000000e+00> : vector<2x96xf32>
    %189 = tpu.matmul %181, %3, %cst_48 {dimension_numbers = #tpu.dot_dimension_numbers<[1], [0], [0], [1], [0, 0, 1, 1], [], []>} : vector<2x32xf32>, vector<32x96xf32>, vector<2x96xf32> -> vector<2x96xf32>
    %190 = vector.extract_strided_slice %188 {offsets = [0, 0], sizes = [2, 32], strides = [1, 1]} : vector<2x96xf32> to vector<2x32xf32>
    %191 = vector.extract_strided_slice %189 {offsets = [0, 0], sizes = [2, 32], strides = [1, 1]} : vector<2x96xf32> to vector<2x32xf32>
    %192 = arith.addf %190, %191 : vector<2x32xf32>
    %193 = arith.negf %192 : vector<2x32xf32>
    %194 = math.exp %193 : vector<2x32xf32>
    %cst_49 = arith.constant 1.000000e+00 : f32
    %195 = vector.broadcast %cst_49 : f32 to vector<2x32xf32>
    %196 = arith.addf %195, %194 : vector<2x32xf32>
    %197 = arith.divf %195, %196 : vector<2x32xf32>
    %198 = vector.extract_strided_slice %188 {offsets = [0, 32], sizes = [2, 32], strides = [1, 1]} : vector<2x96xf32> to vector<2x32xf32>
    %199 = vector.extract_strided_slice %189 {offsets = [0, 32], sizes = [2, 32], strides = [1, 1]} : vector<2x96xf32> to vector<2x32xf32>
    %200 = arith.addf %198, %199 : vector<2x32xf32>
    %201 = arith.negf %200 : vector<2x32xf32>
    %202 = math.exp %201 : vector<2x32xf32>
    %cst_50 = arith.constant 1.000000e+00 : f32
    %203 = vector.broadcast %cst_50 : f32 to vector<2x32xf32>
    %204 = arith.addf %203, %202 : vector<2x32xf32>
    %205 = arith.divf %203, %204 : vector<2x32xf32>
    %206 = vector.extract_strided_slice %188 {offsets = [0, 64], sizes = [2, 32], strides = [1, 1]} : vector<2x96xf32> to vector<2x32xf32>
    %207 = vector.extract_strided_slice %189 {offsets = [0, 64], sizes = [2, 32], strides = [1, 1]} : vector<2x96xf32> to vector<2x32xf32>
    %208 = vector.broadcast %4 : vector<1x32xf32> to vector<2x32xf32>
    %209 = arith.addf %207, %208 : vector<2x32xf32>
    %210 = arith.mulf %197, %209 : vector<2x32xf32>
    %211 = arith.addf %206, %210 : vector<2x32xf32>
    %212 = math.tanh %211 : vector<2x32xf32>
    %cst_51 = arith.constant 1.000000e+00 : f32
    %213 = vector.broadcast %cst_51 : f32 to vector<2x32xf32>
    %214 = arith.subf %213, %205 : vector<2x32xf32>
    %215 = arith.mulf %214, %212 : vector<2x32xf32>
    %216 = arith.mulf %205, %181 : vector<2x32xf32>
    %217 = arith.addf %215, %216 : vector<2x32xf32>
    %218 = arith.index_cast %c5_i32 : i32 to index
    %c0_52 = arith.constant 0 : index
    %c0_53 = arith.constant 0 : index
    %219 = vector.load %arg5[%218, %c0_52, %c0_53] : memref<8x2x32xf32, #tpu.memory_space<vmem>>, vector<1x2x32xf32>
    %220 = vector.shape_cast %219 : vector<1x2x32xf32> to vector<2x32xf32>
    %221 = vector.shape_cast %217 : vector<2x32xf32> to vector<1x2x32xf32>
    tpu.vector_store %arg5[%218, %c0_52, %c0_53], %221 {strides = array<i32>} : memref<8x2x32xf32, #tpu.memory_space<vmem>>, vector<1x2x32xf32>,
    %c6_i32 = arith.constant 6 : i32
    %222 = arith.index_cast %c6_i32 : i32 to index
    %c0_54 = arith.constant 0 : index
    %c0_55 = arith.constant 0 : index
    %223 = vector.load %arg1[%222, %c0_54, %c0_55] : memref<8x2x96xf32, #tpu.memory_space<vmem>>, vector<1x2x96xf32>
    %224 = vector.shape_cast %223 : vector<1x2x96xf32> to vector<2x96xf32>
    %cst_56 = arith.constant dense<0.000000e+00> : vector<2x96xf32>
    %225 = tpu.matmul %217, %3, %cst_56 {dimension_numbers = #tpu.dot_dimension_numbers<[1], [0], [0], [1], [0, 0, 1, 1], [], []>} : vector<2x32xf32>, vector<32x96xf32>, vector<2x96xf32> -> vector<2x96xf32>
    %226 = vector.extract_strided_slice %224 {offsets = [0, 0], sizes = [2, 32], strides = [1, 1]} : vector<2x96xf32> to vector<2x32xf32>
    %227 = vector.extract_strided_slice %225 {offsets = [0, 0], sizes = [2, 32], strides = [1, 1]} : vector<2x96xf32> to vector<2x32xf32>
    %228 = arith.addf %226, %227 : vector<2x32xf32>
    %229 = arith.negf %228 : vector<2x32xf32>
    %230 = math.exp %229 : vector<2x32xf32>
    %cst_57 = arith.constant 1.000000e+00 : f32
    %231 = vector.broadcast %cst_57 : f32 to vector<2x32xf32>
    %232 = arith.addf %231, %230 : vector<2x32xf32>
    %233 = arith.divf %231, %232 : vector<2x32xf32>
    %234 = vector.extract_strided_slice %224 {offsets = [0, 32], sizes = [2, 32], strides = [1, 1]} : vector<2x96xf32> to vector<2x32xf32>
    %235 = vector.extract_strided_slice %225 {offsets = [0, 32], sizes = [2, 32], strides = [1, 1]} : vector<2x96xf32> to vector<2x32xf32>
    %236 = arith.addf %234, %235 : vector<2x32xf32>
    %237 = arith.negf %236 : vector<2x32xf32>
    %238 = math.exp %237 : vector<2x32xf32>
    %cst_58 = arith.constant 1.000000e+00 : f32
    %239 = vector.broadcast %cst_58 : f32 to vector<2x32xf32>
    %240 = arith.addf %239, %238 : vector<2x32xf32>
    %241 = arith.divf %239, %240 : vector<2x32xf32>
    %242 = vector.extract_strided_slice %224 {offsets = [0, 64], sizes = [2, 32], strides = [1, 1]} : vector<2x96xf32> to vector<2x32xf32>
    %243 = vector.extract_strided_slice %225 {offsets = [0, 64], sizes = [2, 32], strides = [1, 1]} : vector<2x96xf32> to vector<2x32xf32>
    %244 = vector.broadcast %4 : vector<1x32xf32> to vector<2x32xf32>
    %245 = arith.addf %243, %244 : vector<2x32xf32>
    %246 = arith.mulf %233, %245 : vector<2x32xf32>
    %247 = arith.addf %242, %246 : vector<2x32xf32>
    %248 = math.tanh %247 : vector<2x32xf32>
    %cst_59 = arith.constant 1.000000e+00 : f32
    %249 = vector.broadcast %cst_59 : f32 to vector<2x32xf32>
    %250 = arith.subf %249, %241 : vector<2x32xf32>
    %251 = arith.mulf %250, %248 : vector<2x32xf32>
    %252 = arith.mulf %241, %217 : vector<2x32xf32>
    %253 = arith.addf %251, %252 : vector<2x32xf32>
    %254 = arith.index_cast %c6_i32 : i32 to index
    %c0_60 = arith.constant 0 : index
    %c0_61 = arith.constant 0 : index
    %255 = vector.load %arg5[%254, %c0_60, %c0_61] : memref<8x2x32xf32, #tpu.memory_space<vmem>>, vector<1x2x32xf32>
    %256 = vector.shape_cast %255 : vector<1x2x32xf32> to vector<2x32xf32>
    %257 = vector.shape_cast %253 : vector<2x32xf32> to vector<1x2x32xf32>
    tpu.vector_store %arg5[%254, %c0_60, %c0_61], %257 {strides = array<i32>} : memref<8x2x32xf32, #tpu.memory_space<vmem>>, vector<1x2x32xf32>,
    %c7_i32 = arith.constant 7 : i32
    %258 = arith.index_cast %c7_i32 : i32 to index
    %c0_62 = arith.constant 0 : index
    %c0_63 = arith.constant 0 : index
    %259 = vector.load %arg1[%258, %c0_62, %c0_63] : memref<8x2x96xf32, #tpu.memory_space<vmem>>, vector<1x2x96xf32>
    %260 = vector.shape_cast %259 : vector<1x2x96xf32> to vector<2x96xf32>
    %cst_64 = arith.constant dense<0.000000e+00> : vector<2x96xf32>
    %261 = tpu.matmul %253, %3, %cst_64 {dimension_numbers = #tpu.dot_dimension_numbers<[1], [0], [0], [1], [0, 0, 1, 1], [], []>} : vector<2x32xf32>, vector<32x96xf32>, vector<2x96xf32> -> vector<2x96xf32>
    %262 = vector.extract_strided_slice %260 {offsets = [0, 0], sizes = [2, 32], strides = [1, 1]} : vector<2x96xf32> to vector<2x32xf32>
    %263 = vector.extract_strided_slice %261 {offsets = [0, 0], sizes = [2, 32], strides = [1, 1]} : vector<2x96xf32> to vector<2x32xf32>
    %264 = arith.addf %262, %263 : vector<2x32xf32>
    %265 = arith.negf %264 : vector<2x32xf32>
    %266 = math.exp %265 : vector<2x32xf32>
    %cst_65 = arith.constant 1.000000e+00 : f32
    %267 = vector.broadcast %cst_65 : f32 to vector<2x32xf32>
    %268 = arith.addf %267, %266 : vector<2x32xf32>
    %269 = arith.divf %267, %268 : vector<2x32xf32>
    %270 = vector.extract_strided_slice %260 {offsets = [0, 32], sizes = [2, 32], strides = [1, 1]} : vector<2x96xf32> to vector<2x32xf32>
    %271 = vector.extract_strided_slice %261 {offsets = [0, 32], sizes = [2, 32], strides = [1, 1]} : vector<2x96xf32> to vector<2x32xf32>
    %272 = arith.addf %270, %271 : vector<2x32xf32>
    %273 = arith.negf %272 : vector<2x32xf32>
    %274 = math.exp %273 : vector<2x32xf32>
    %cst_66 = arith.constant 1.000000e+00 : f32
    %275 = vector.broadcast %cst_66 : f32 to vector<2x32xf32>
    %276 = arith.addf %275, %274 : vector<2x32xf32>
    %277 = arith.divf %275, %276 : vector<2x32xf32>
    %278 = vector.extract_strided_slice %260 {offsets = [0, 64], sizes = [2, 32], strides = [1, 1]} : vector<2x96xf32> to vector<2x32xf32>
    %279 = vector.extract_strided_slice %261 {offsets = [0, 64], sizes = [2, 32], strides = [1, 1]} : vector<2x96xf32> to vector<2x32xf32>
    %280 = vector.broadcast %4 : vector<1x32xf32> to vector<2x32xf32>
    %281 = arith.addf %279, %280 : vector<2x32xf32>
    %282 = arith.mulf %269, %281 : vector<2x32xf32>
    %283 = arith.addf %278, %282 : vector<2x32xf32>
    %284 = math.tanh %283 : vector<2x32xf32>
    %cst_67 = arith.constant 1.000000e+00 : f32
    %285 = vector.broadcast %cst_67 : f32 to vector<2x32xf32>
    %286 = arith.subf %285, %277 : vector<2x32xf32>
    %287 = arith.mulf %286, %284 : vector<2x32xf32>
    %288 = arith.mulf %277, %253 : vector<2x32xf32>
    %289 = arith.addf %287, %288 : vector<2x32xf32>
    %290 = arith.index_cast %c7_i32 : i32 to index
    %c0_68 = arith.constant 0 : index
    %c0_69 = arith.constant 0 : index
    %291 = vector.load %arg5[%290, %c0_68, %c0_69] : memref<8x2x32xf32, #tpu.memory_space<vmem>>, vector<1x2x32xf32>
    %292 = vector.shape_cast %291 : vector<1x2x32xf32> to vector<2x32xf32>
    %293 = vector.shape_cast %289 : vector<2x32xf32> to vector<1x2x32xf32>
    tpu.vector_store %arg5[%290, %c0_68, %c0_69], %293 {strides = array<i32>} : memref<8x2x32xf32, #tpu.memory_space<vmem>>, vector<1x2x32xf32>,
    %c8_i32 = arith.constant 8 : i32
    %c0_70 = arith.constant 0 : index
    %c0_71 = arith.constant 0 : index
    %294 = vector.load %arg6[%c0_70, %c0_71] : memref<2x32xf32, #tpu.memory_space<vmem>>, vector<2x32xf32>
    tpu.vector_store %arg6[%c0_70, %c0_71], %289 {strides = array<i32>} : memref<2x32xf32, #tpu.memory_space<vmem>>, vector<2x32xf32>,
    return
  }
  func.func @transform_0(%arg0: i32) -> (i32, i32, i32) {
    %c0_i32 = arith.constant 0 : i32
    %c0_i32_0 = arith.constant 0 : i32
    %c0_i32_1 = arith.constant 0 : i32
    return %arg0, %c0_i32, %c0_i32_0 : i32, i32, i32
  }
  func.func @transform_1(%arg0: i32) -> (i32, i32) {
    %c0_i32 = arith.constant 0 : i32
    %c0_i32_0 = arith.constant 0 : i32
    %c0_i32_1 = arith.constant 0 : i32
    return %c0_i32, %c0_i32_0 : i32, i32
  }
  func.func @transform_2(%arg0: i32) -> (i32, i32) {
    %c0_i32 = arith.constant 0 : i32
    %c0_i32_0 = arith.constant 0 : i32
    %c0_i32_1 = arith.constant 0 : i32
    return %c0_i32, %c0_i32_0 : i32, i32
  }
  func.func @transform_3(%arg0: i32) -> (i32, i32) {
    %c0_i32 = arith.constant 0 : i32
    %c0_i32_0 = arith.constant 0 : i32
    %c0_i32_1 = arith.constant 0 : i32
    return %c0_i32, %c0_i32_0 : i32, i32
  }
  func.func @transform_4(%arg0: i32) -> (i32, i32, i32) {
    %c0_i32 = arith.constant 0 : i32
    %c0_i32_0 = arith.constant 0 : i32
    %c0_i32_1 = arith.constant 0 : i32
    return %arg0, %c0_i32, %c0_i32_0 : i32, i32, i32
  }
  func.func @transform_5(%arg0: i32) -> (i32, i32) {
    %c0_i32 = arith.constant 0 : i32
    %c0_i32_0 = arith.constant 0 : i32
    %c0_i32_1 = arith.constant 0 : i32
    return %c0_i32, %c0_i32_0 : i32, i32
  }
}

module attributes {stable_mosaic.version = 11 : i64} {
  func.func @linear_kernel(%arg0: i32, %arg1: memref<16x32xf32, #tpu.memory_space<vmem>>, %arg2: memref<32x60xf32, #tpu.memory_space<vmem>>, %arg3: memref<1x60xf32, #tpu.memory_space<vmem>>, %arg4: memref<16x60xf32, #tpu.memory_space<vmem>>) attributes {dimension_semantics = [#tpu.dimension_semantics<parallel>], iteration_bounds = array<i64: 1>, scalar_prefetch = 0 : i64, scratch_operands = 0 : i64, tpu.core_type = #tpu.core_type<tc>, window_params = [{transform_indices = @transform_0, window_bounds = array<i64: 16, 32>}, {pipeline_mode = #tpu.pipeline_mode<synchronous>, transform_indices = @transform_1, window_bounds = array<i64: 32, 60>}, {pipeline_mode = #tpu.pipeline_mode<synchronous>, transform_indices = @transform_2, window_bounds = array<i64: 1, 60>}, {transform_indices = @transform_3, window_bounds = array<i64: 16, 60>}]} {
    %c0 = arith.constant 0 : index
    %c0_0 = arith.constant 0 : index
    %0 = vector.load %arg1[%c0, %c0_0] : memref<16x32xf32, #tpu.memory_space<vmem>>, vector<16x32xf32>
    %c0_1 = arith.constant 0 : index
    %c0_2 = arith.constant 0 : index
    %1 = vector.load %arg2[%c0_1, %c0_2] : memref<32x60xf32, #tpu.memory_space<vmem>>, vector<32x60xf32>
    %cst = arith.constant dense<0.000000e+00> : vector<16x60xf32>
    %2 = tpu.matmul %0, %1, %cst {dimension_numbers = #tpu.dot_dimension_numbers<[1], [0], [0], [1], [0, 0, 1, 1], [], []>} : vector<16x32xf32>, vector<32x60xf32>, vector<16x60xf32> -> vector<16x60xf32>
    %c0_3 = arith.constant 0 : index
    %c0_4 = arith.constant 0 : index
    %3 = vector.load %arg3[%c0_3, %c0_4] : memref<1x60xf32, #tpu.memory_space<vmem>>, vector<1x60xf32>
    %4 = vector.broadcast %3 : vector<1x60xf32> to vector<16x60xf32>
    %5 = arith.addf %2, %4 : vector<16x60xf32>
    %c0_5 = arith.constant 0 : index
    %c0_6 = arith.constant 0 : index
    %6 = vector.load %arg4[%c0_5, %c0_6] : memref<16x60xf32, #tpu.memory_space<vmem>>, vector<16x60xf32>
    tpu.vector_store %arg4[%c0_5, %c0_6], %5 {strides = array<i32>} : memref<16x60xf32, #tpu.memory_space<vmem>>, vector<16x60xf32>,
    return
  }
  func.func @transform_0(%arg0: i32) -> (i32, i32) {
    %c0_i32 = arith.constant 0 : i32
    %c0_i32_0 = arith.constant 0 : i32
    return %arg0, %c0_i32 : i32, i32
  }
  func.func @transform_1(%arg0: i32) -> (i32, i32) {
    %c0_i32 = arith.constant 0 : i32
    %c0_i32_0 = arith.constant 0 : i32
    %c0_i32_1 = arith.constant 0 : i32
    return %c0_i32, %c0_i32_0 : i32, i32
  }
  func.func @transform_2(%arg0: i32) -> (i32, i32) {
    %c0_i32 = arith.constant 0 : i32
    %c0_i32_0 = arith.constant 0 : i32
    %c0_i32_1 = arith.constant 0 : i32
    return %c0_i32, %c0_i32_0 : i32, i32
  }
  func.func @transform_3(%arg0: i32) -> (i32, i32) {
    %c0_i32 = arith.constant 0 : i32
    %c0_i32_0 = arith.constant 0 : i32
    return %arg0, %c0_i32 : i32, i32
  }
}

</mosaic_0001>

<llo_original>
// kernel: gru_seq2seq_forward.9
$region0: #{gru_seq2seq_forward.9}
  #allocation0 [shape = 'u32[]', space=smem, size = 0x4, offset = 0x4, fixed_abs, tag = 'smem constant byte address 0x4 - core index']
  #allocation1 [shape = 'u32[144,128]{1,0:T(1,128)}', space=vmem, size = 0x12000, scoped, tag = 'internal scratch']
  %s0 = inlined_call_operand.vmem [shape: f32[16,32], index: 0, kind: input, shape index: {}]
  %s1 = inlined_call_operand.vmem [shape: f32[32,96], index: 1, kind: input, shape index: {}]
  %s2 = inlined_call_operand.vmem [shape: f32[1,96], index: 2, kind: input, shape index: {}]
  %s3 = inlined_call_operand.vmem [shape: f32[16,96], index: 3, kind: output, shape index: {}]
  %s4 = sld [smem:[#allocation0]]
  $region22: #{gru_seq2seq_forward.9} parent=0
    _
  %s6 = ssub.s32 1, %s4
  %s7 = scalar_select 0, %s6, %s4
  // Predicated region
  $region2: #{gru_seq2seq_forward.9} parent=0 // pred_check
    _
  $region3: #{gru_seq2seq_forward.9} parent=0 // pred_check_branch
    %9 = sbr.rel (0) target = $region5
  $region4: #{gru_seq2seq_forward.9} parent=0 // pred_region
    _
  $region5: #{gru_seq2seq_forward.9} parent=0 // pred_fallthru
    _
  // Predicated region
  $region6: #{gru_seq2seq_forward.9} parent=0 // pred_check
    _
  $region7: #{gru_seq2seq_forward.9} parent=0 // pred_check_branch
    %11 = sbr.rel (0) target = $region9
  $region8: #{gru_seq2seq_forward.9} parent=0 // pred_region
    _
  $region9: #{gru_seq2seq_forward.9} parent=0 // pred_fallthru
    _
  // Predicated region
  $region10: #{gru_seq2seq_forward.9} parent=0 // pred_check
    _
  $region11: #{gru_seq2seq_forward.9} parent=0 // pred_check_branch
    %13 = sbr.rel (0) target = $region13
  $region12: #{gru_seq2seq_forward.9} parent=0 // pred_region
    _
  $region13: #{gru_seq2seq_forward.9} parent=0 // pred_fallthru
    _
  %v14 = vld [vmem:[%s0] sm:$0xff]
  %v15 = vld [vmem:[%s0 + $0x8] sm:$0xff]
  %v16 = vld [vmem:[%s1] sm:$0xff]
  %v17 = vld [vmem:[%s1 + $0x8] sm:$0xff]
  %v18 = vld [vmem:[%s1 + $0x10] sm:$0xff]
  %v19 = vld [vmem:[%s1 + $0x18] sm:$0xff]
  %v20 = vld [vmem:[%s2] sm:$0x1]
  %v22 = vlaneseq
  %v23 = vshrl.u32 %v22, 7
  %v24 = vsub.s32 0, %v23
  %v25 = vrot.slane %v20, %v24
  %vm27 = vcmask 261120
  %v29 = vsel %vm27, %v14, 0
  %v32 = vsel %vm27, %v15, 0
  %34 = vmatprep.subr.mxu0 0.0
  %35 = vmatpush1.msra.mxu0 %v16
  %36 = vmatprep.subr.mxu0 0.0
  %37 = vmatpush1.msra.mxu0 %v17
  %38 = vmatprep.subr.mxu0 0.0
  %39 = vmatpush1.msra.mxu0 %v18
  %40 = vmatprep.subr.mxu0 0.0
  %41 = vmatpush1.msra.mxu0 %v19
  %42 = vmatprep.subr.mxu0 0.0
  %43 = vmatpush1.msra.mxu0 0.0
  %44 = vmatprep.subr.mxu0 0.0
  %45 = vmatpush1.msra.mxu0 0.0
  %46 = vmatprep.subr.mxu0 0.0
  %47 = vmatpush1.msra.mxu0 0.0
  %48 = vmatprep.subr.mxu0 0.0
  %49 = vmatpush1.msra.mxu0 0.0
  %50 = vmatprep.subr.mxu0 0.0
  %51 = vmatpush1.msra.mxu0 0.0
  %52 = vmatprep.subr.mxu0 0.0
  %53 = vmatpush1.msra.mxu0 0.0
  %54 = vmatprep.subr.mxu0 0.0
  %55 = vmatpush1.msra.mxu0 0.0
  %56 = vmatprep.subr.mxu0 0.0
  %57 = vmatpush1.msra.mxu0 0.0
  %58 = vmatprep.subr.mxu0 0.0
  %59 = vmatpush1.msra.mxu0 0.0
  %60 = vmatprep.subr.mxu0 0.0
  %61 = vmatpush1.msra.mxu0 0.0
  %62 = vmatprep.subr.mxu0 0.0
  %63 = vmatpush1.msra.mxu0 0.0
  %64 = vmatprep.subr.mxu0 0.0
  %65 = vmatpush1.msra.mxu0 0.0
  %66 = vmatprep.subr.mxu0 0.0
  %67 = vmatpush1.msra.mxu0 0.0
  %68 = vmatprep.subr.mxu0 0.0
  %69 = vmatpush1.msra.mxu0 0.0
  %70 = vmatprep.subr.mxu0 0.0
  %71 = vmatpush1.msra.mxu0 0.0
  %72 = vmatprep.subr.mxu0 0.0
  %73 = vmatpush1.msra.mxu0 0.0
  %74 = vmatprep.subr.mxu0 0.0
  %75 = vmatpush1.msra.mxu0 0.0
  %76 = vmatprep.subr.mxu0 0.0
  %77 = vmatpush1.msra.mxu0 0.0
  %78 = vmatprep.subr.mxu0 0.0
  %79 = vmatpush1.msra.mxu0 0.0
  %80 = vmatprep.subr.mxu0 0.0
  %81 = vmatpush1.msra.mxu0 0.0
  %82 = vmatprep.subr.mxu0 0.0
  %83 = vmatpush1.msra.mxu0 0.0
  %84 = vmatprep.subr.mxu0 0.0
  %85 = vmatpush1.msra.mxu0 0.0
  %86 = vmatprep.subr.mxu0 0.0
  %87 = vmatpush1.msra.mxu0 0.0
  %88 = vmatprep.subr.mxu0 0.0
  %89 = vmatpush1.msra.mxu0 0.0
  %90 = vmatprep.subr.mxu0 0.0
  %91 = vmatpush1.msra.mxu0 0.0
  %92 = vmatprep.subr.mxu0 0.0
  %93 = vmatpush1.msra.mxu0 0.0
  %94 = vmatprep.subr.mxu0 0.0
  %95 = vmatpush1.msra.mxu0 0.0
  %96 = vmatprep.subr.mxu0 0.0
  %97 = vmatpush1.msra.mxu0 0.0
  %98 = vmatprep.mubr.f32.mxu0 0.0
  %99 = vmatmul.mubr.f32.gmra.mrb[0].mxu0 %v29
  %v100 = vpop.f32.mrb[0].mxu0
  %v101 = vadd.f32 %v25, %v100
  %v102 = vpop.f32.mrb[0].mxu0
  %103 = vmatprep.mubr.f32.mxu0 0.0
  %104 = vmatmul.mubr.f32.gmra.mrb[0].mxu0 %v32
  %v105 = vpop.f32.mrb[0].mxu0
  %v106 = vadd.f32 %v25, %v105
  %v107 = vpop.f32.mrb[0].mxu0
  %108 = vdwg.mxu0
  %vm109 = vcmask 785408
  %110 = vst.msk [vmem:[%s3] sm:$0xff] %vm109, %v101
  %111 = vst.msk [vmem:[%s3 + $0x8] sm:$0xff] %vm109, %v106
  // Predicated region
  $region14: #{gru_seq2seq_forward.9} parent=0 // pred_check
    _
  $region15: #{gru_seq2seq_forward.9} parent=0 // pred_check_branch
    %113 = sbr.rel (0) target = $region17
  $region16: #{gru_seq2seq_forward.9} parent=0 // pred_region
    _
  $region17: #{gru_seq2seq_forward.9} parent=0 // pred_fallthru
    _
  // Predicated region
  $region18: #{gru_seq2seq_forward.9} parent=0 // pred_check
    _
  $region19: #{gru_seq2seq_forward.9} parent=0 // pred_check_branch
    %115 = sbr.rel (0) target = $region21
  $region20: #{gru_seq2seq_forward.9} parent=0 // pred_region
    _
  $region21: #{gru_seq2seq_forward.9} parent=0 // pred_fallthru
    _

// kernel: gru_seq2seq_forward.10
$region0: #{gru_seq2seq_forward.10}
  #allocation0 [shape = 'u32[]', space=smem, size = 0x4, offset = 0x4, fixed_abs, tag = 'smem constant byte address 0x4 - core index']
  #allocation1 [shape = 'u32[144,128]{1,0:T(1,128)}', space=vmem, size = 0x12000, scoped, tag = 'internal scratch']
  %s0 = inlined_call_operand.vmem [shape: f32[8,2,96], index: 0, kind: input, shape index: {}]
  %s1 = inlined_call_operand.vmem [shape: f32[2,32], index: 1, kind: input, shape index: {}]
  %s2 = inlined_call_operand.vmem [shape: f32[32,96], index: 2, kind: input, shape index: {}]
  %s3 = inlined_call_operand.vmem [shape: f32[1,32], index: 3, kind: input, shape index: {}]
  %s4 = inlined_call_operand.vmem [shape: f32[8,2,32], index: 4, kind: output, shape index: {0}]
  %s5 = inlined_call_operand.vmem [shape: f32[2,32], index: 5, kind: output, shape index: {1}]
  %6 = xla_tuple %s4, %s5
  %s7 = sld [smem:[#allocation0]]
  $region38: #{gru_seq2seq_forward.10} parent=0
    _
  %s9 = ssub.s32 1, %s7
  %s10 = scalar_select 0, %s9, %s7
  // Predicated region
  $region2: #{gru_seq2seq_forward.10} parent=0 // pred_check
    _
  $region3: #{gru_seq2seq_forward.10} parent=0 // pred_check_branch
    %12 = sbr.rel (0) target = $region5
  $region4: #{gru_seq2seq_forward.10} parent=0 // pred_region
    _
  $region5: #{gru_seq2seq_forward.10} parent=0 // pred_fallthru
    _
  // Predicated region
  $region6: #{gru_seq2seq_forward.10} parent=0 // pred_check
    _
  $region7: #{gru_seq2seq_forward.10} parent=0 // pred_check_branch
    %14 = sbr.rel (0) target = $region9
  $region8: #{gru_seq2seq_forward.10} parent=0 // pred_region
    _
  $region9: #{gru_seq2seq_forward.10} parent=0 // pred_fallthru
    _
  // Predicated region
  $region10: #{gru_seq2seq_forward.10} parent=0 // pred_check
    _
  $region11: #{gru_seq2seq_forward.10} parent=0 // pred_check_branch
    %16 = sbr.rel (0) target = $region13
  $region12: #{gru_seq2seq_forward.10} parent=0 // pred_region
    _
  $region13: #{gru_seq2seq_forward.10} parent=0 // pred_fallthru
    _
  // Predicated region
  $region14: #{gru_seq2seq_forward.10} parent=0 // pred_check
    _
  $region15: #{gru_seq2seq_forward.10} parent=0 // pred_check_branch
    %18 = sbr.rel (0) target = $region17
  $region16: #{gru_seq2seq_forward.10} parent=0 // pred_region
    _
  $region17: #{gru_seq2seq_forward.10} parent=0 // pred_fallthru
    _
  %p19 = scmp.eq.s32.totalorder 0, 0
  // Predicated region
  $region18: #{gru_seq2seq_forward.10} parent=0 // pred_check
    %p20 = pneg %p19
  $region19: #{gru_seq2seq_forward.10} parent=0 // pred_check_branch
    %22 = sbr.rel (%p20) target = $region21
  $region20: #{gru_seq2seq_forward.10} parent=0 // pred_region
    %v23 = vld [vmem:[%s1] sm:$0x3]
    %vm24 = vcmask 254976
    %25 = vst.msk [vmem:[%s5] sm:$0x3] %vm24, %v23
  $region21: #{gru_seq2seq_forward.10} parent=0 // pred_fallthru
    _
  %v26 = vld [vmem:[%s2] sm:$0xff]
  %v27 = vld [vmem:[%s2 + $0x8] sm:$0xff]
  %v28 = vld [vmem:[%s2 + $0x10] sm:$0xff]
  %v29 = vld [vmem:[%s2 + $0x18] sm:$0xff]
  %v30 = vld [vmem:[%s3] sm:$0x1]
  %v31 = vld [vmem:[%s5] sm:$0x3]
  %v32 = vld [vmem:[%s0] sm:$0x3]
  %vm33 = vcmask 261120
  %v35 = vsel %vm33, %v31, 0
  %37 = vmatprep.subr.mxu0 0.0
  %38 = vmatpush1.msra.mxu0 %v26
  %39 = vmatprep.subr.mxu0 0.0
  %40 = vmatpush1.msra.mxu0 %v27
  %41 = vmatprep.subr.mxu0 0.0
  %42 = vmatpush1.msra.mxu0 %v28
  %43 = vmatprep.subr.mxu0 0.0
  %44 = vmatpush1.msra.mxu0 %v29
  %45 = vmatprep.subr.mxu0 0.0
  %46 = vmatpush1.msra.mxu0 0.0
  %47 = vmatprep.subr.mxu0 0.0
  %48 = vmatpush1.msra.mxu0 0.0
  %49 = vmatprep.subr.mxu0 0.0
  %50 = vmatpush1.msra.mxu0 0.0
  %51 = vmatprep.subr.mxu0 0.0
  %52 = vmatpush1.msra.mxu0 0.0
  %53 = vmatprep.subr.mxu0 0.0
  %54 = vmatpush1.msra.mxu0 0.0
  %55 = vmatprep.subr.mxu0 0.0
  %56 = vmatpush1.msra.mxu0 0.0
  %57 = vmatprep.subr.mxu0 0.0
  %58 = vmatpush1.msra.mxu0 0.0
  %59 = vmatprep.subr.mxu0 0.0
  %60 = vmatpush1.msra.mxu0 0.0
  %61 = vmatprep.subr.mxu0 0.0
  %62 = vmatpush1.msra.mxu0 0.0
  %63 = vmatprep.subr.mxu0 0.0
  %64 = vmatpush1.msra.mxu0 0.0
  %65 = vmatprep.subr.mxu0 0.0
  %66 = vmatpush1.msra.mxu0 0.0
  %67 = vmatprep.subr.mxu0 0.0
  %68 = vmatpush1.msra.mxu0 0.0
  %69 = vmatprep.subr.mxu0 0.0
  %70 = vmatpush1.msra.mxu0 0.0
  %71 = vmatprep.subr.mxu0 0.0
  %72 = vmatpush1.msra.mxu0 0.0
  %73 = vmatprep.subr.mxu0 0.0
  %74 = vmatpush1.msra.mxu0 0.0
  %75 = vmatprep.subr.mxu0 0.0
  %76 = vmatpush1.msra.mxu0 0.0
  %77 = vmatprep.subr.mxu0 0.0
  %78 = vmatpush1.msra.mxu0 0.0
  %79 = vmatprep.subr.mxu0 0.0
  %80 = vmatpush1.msra.mxu0 0.0
  %81 = vmatprep.subr.mxu0 0.0
  %82 = vmatpush1.msra.mxu0 0.0
  %83 = vmatprep.subr.mxu0 0.0
  %84 = vmatpush1.msra.mxu0 0.0
  %85 = vmatprep.subr.mxu0 0.0
  %86 = vmatpush1.msra.mxu0 0.0
  %87 = vmatprep.subr.mxu0 0.0
  %88 = vmatpush1.msra.mxu0 0.0
  %89 = vmatprep.subr.mxu0 0.0
  %90 = vmatpush1.msra.mxu0 0.0
  %91 = vmatprep.subr.mxu0 0.0
  %92 = vmatpush1.msra.mxu0 0.0
  %93 = vmatprep.subr.mxu0 0.0
  %94 = vmatpush1.msra.mxu0 0.0
  %95 = vmatprep.subr.mxu0 0.0
  %96 = vmatpush1.msra.mxu0 0.0
  %97 = vmatprep.subr.mxu0 0.0
  %98 = vmatpush1.msra.mxu0 0.0
  %99 = vmatprep.subr.mxu0 0.0
  %100 = vmatpush1.msra.mxu0 0.0
  %101 = vmatprep.mubr.f32.mxu0 0.0
  %102 = vmatmul.mubr.f32.gmra.mrb[0].mxu0 %v35
  %v103 = vpop.f32.mrb[0].mxu0
  %v104 = vadd.f32 0.0, %v103
  %v105 = vpop.f32.mrb[0].mxu0
  %106 = vdwg.mxu0
  %v107 = vadd.f32 %v32, %v104
  %v108 = vxor.u32 %v107, 2147483648
  %v109 = vmul.f32 %v108, 1.442695
  %v110 = vpow.pop %v109
  %v111 = vadd.f32 %v110, 1.0
  %v112 = vrcp.pop %v111
  %v113 = vmul.f32 1.0, %v112
  %v115 = vlaneseq
  %v116 = vshrl.u32 %v115, 7
  %v117 = vsub.s32 0, %v116
  %v118 = vrot.slane %v30, %v117
  %119 = vrot.lane.b32.xlu0 %v118, 64
  %v120 = vpop.permute.xlu0 %119
  %v122 = vadd.f32 %v104, %v120
  %124 = vrot.lane.b32.xlu0 %v122, 64
  %v125 = vpop.permute.xlu0 %124
  %v127 = vmul.f32 %v113, %v125
  %129 = vrot.lane.b32.xlu0 %v127, 64
  %v130 = vpop.permute.xlu0 %129
  %v132 = vadd.f32 %v32, %v130
  %v133 = vtanh.pop %v132
  %v134 = vsub.f32 1.0, %v113
  %136 = vrot.lane.b32.xlu0 %v133, 96
  %v137 = vpop.permute.xlu0 %136
  %v139 = vmul.f32 %v134, %v137
  %140 = vrot.lane.b32.xlu0 %v31, 32
  %v141 = vpop.permute.xlu0 %140
  %v143 = vmul.f32 %v113, %v141
  %v144 = vadd.f32 %v139, %v143
  %146 = vrot.lane.b32.xlu0 %v144, 96
  %v147 = vpop.permute.xlu0 %146
  %vm149 = vcmask 254976
  %150 = vst.msk [vmem:[%s4] sm:$0x3] %vm149, %v147
  %s151 = scalar_lea.vmem %s0, 2
  %v152 = vld [vmem:[%s151] sm:$0x3]
  %v153 = vsel %vm33, %v147, 0
  %155 = vmatprep.subr.mxu0 0.0
  %156 = vmatpush1.msra.mxu0 %v26
  %157 = vmatprep.subr.mxu0 0.0
  %158 = vmatpush1.msra.mxu0 %v27
  %159 = vmatprep.subr.mxu0 0.0
  %160 = vmatpush1.msra.mxu0 %v28
  %161 = vmatprep.subr.mxu0 0.0
  %162 = vmatpush1.msra.mxu0 %v29
  %163 = vmatprep.subr.mxu0 0.0
  %164 = vmatpush1.msra.mxu0 0.0
  %165 = vmatprep.subr.mxu0 0.0
  %166 = vmatpush1.msra.mxu0 0.0
  %167 = vmatprep.subr.mxu0 0.0
  %168 = vmatpush1.msra.mxu0 0.0
  %169 = vmatprep.subr.mxu0 0.0
  %170 = vmatpush1.msra.mxu0 0.0
  %171 = vmatprep.subr.mxu0 0.0
  %172 = vmatpush1.msra.mxu0 0.0
  %173 = vmatprep.subr.mxu0 0.0
  %174 = vmatpush1.msra.mxu0 0.0
  %175 = vmatprep.subr.mxu0 0.0
  %176 = vmatpush1.msra.mxu0 0.0
  %177 = vmatprep.subr.mxu0 0.0
  %178 = vmatpush1.msra.mxu0 0.0
  %179 = vmatprep.subr.mxu0 0.0
  %180 = vmatpush1.msra.mxu0 0.0
  %181 = vmatprep.subr.mxu0 0.0
  %182 = vmatpush1.msra.mxu0 0.0
  %183 = vmatprep.subr.mxu0 0.0
  %184 = vmatpush1.msra.mxu0 0.0
  %185 = vmatprep.subr.mxu0 0.0
  %186 = vmatpush1.msra.mxu0 0.0
  %187 = vmatprep.subr.mxu0 0.0
  %188 = vmatpush1.msra.mxu0 0.0
  %189 = vmatprep.subr.mxu0 0.0
  %190 = vmatpush1.msra.mxu0 0.0
  %191 = vmatprep.subr.mxu0 0.0
  %192 = vmatpush1.msra.mxu0 0.0
  %193 = vmatprep.subr.mxu0 0.0
  %194 = vmatpush1.msra.mxu0 0.0
  %195 = vmatprep.subr.mxu0 0.0
  %196 = vmatpush1.msra.mxu0 0.0
  %197 = vmatprep.subr.mxu0 0.0
  %198 = vmatpush1.msra.mxu0 0.0
  %199 = vmatprep.subr.mxu0 0.0
  %200 = vmatpush1.msra.mxu0 0.0
  %201 = vmatprep.subr.mxu0 0.0
  %202 = vmatpush1.msra.mxu0 0.0
  %203 = vmatprep.subr.mxu0 0.0
  %204 = vmatpush1.msra.mxu0 0.0
  %205 = vmatprep.subr.mxu0 0.0
  %206 = vmatpush1.msra.mxu0 0.0
  %207 = vmatprep.subr.mxu0 0.0
  %208 = vmatpush1.msra.mxu0 0.0
  %209 = vmatprep.subr.mxu0 0.0
  %210 = vmatpush1.msra.mxu0 0.0
  %211 = vmatprep.subr.mxu0 0.0
  %212 = vmatpush1.msra.mxu0 0.0
  %213 = vmatprep.subr.mxu0 0.0
  %214 = vmatpush1.msra.mxu0 0.0
  %215 = vmatprep.subr.mxu0 0.0
  %216 = vmatpush1.msra.mxu0 0.0
  %217 = vmatprep.subr.mxu0 0.0
  %218 = vmatpush1.msra.mxu0 0.0
  %219 = vmatprep.mubr.f32.mxu0 0.0
  %220 = vmatmul.mubr.f32.gmra.mrb[0].mxu0 %v153
  %v221 = vpop.f32.mrb[0].mxu0
  %v222 = vadd.f32 0.0, %v221
  %v223 = vpop.f32.mrb[0].mxu0
  %224 = vdwg.mxu0
  %v225 = vadd.f32 %v152, %v222
  %v226 = vxor.u32 %v225, 2147483648
  %v227 = vmul.f32 %v226, 1.442695
  %v228 = vpow.pop %v227
  %v229 = vadd.f32 %v228, 1.0
  %v230 = vrcp.pop %v229
  %v231 = vmul.f32 1.0, %v230
  %v232 = vadd.f32 %v222, %v120
  %234 = vrot.lane.b32.xlu0 %v232, 64
  %v235 = vpop.permute.xlu0 %234
  %v237 = vmul.f32 %v231, %v235
  %239 = vrot.lane.b32.xlu0 %v237, 64
  %v240 = vpop.permute.xlu0 %239
  %v242 = vadd.f32 %v152, %v240
  %v243 = vtanh.pop %v242
  %v244 = vsub.f32 1.0, %v231
  %246 = vrot.lane.b32.xlu0 %v243, 96
  %v247 = vpop.permute.xlu0 %246
  %v249 = vmul.f32 %v244, %v247
  %v250 = vmul.f32 %v231, %v144
  %v251 = vadd.f32 %v249, %v250
  %253 = vrot.lane.b32.xlu0 %v251, 96
  %v254 = vpop.permute.xlu0 %253
  %s256 = scalar_lea.vmem %s4, 2
  %257 = vst.msk [vmem:[%s256] sm:$0x3] %vm149, %v254
  %s258 = scalar_lea.vmem %s0, 4
  %v259 = vld [vmem:[%s258] sm:$0x3]
  %v260 = vsel %vm33, %v254, 0
  %262 = vmatprep.subr.mxu0 0.0
  %263 = vmatpush1.msra.mxu0 %v26
  %264 = vmatprep.subr.mxu0 0.0
  %265 = vmatpush1.msra.mxu0 %v27
  %266 = vmatprep.subr.mxu0 0.0
  %267 = vmatpush1.msra.mxu0 %v28
  %268 = vmatprep.subr.mxu0 0.0
  %269 = vmatpush1.msra.mxu0 %v29
  %270 = vmatprep.subr.mxu0 0.0
  %271 = vmatpush1.msra.mxu0 0.0
  %272 = vmatprep.subr.mxu0 0.0
  %273 = vmatpush1.msra.mxu0 0.0
  %274 = vmatprep.subr.mxu0 0.0
  %275 = vmatpush1.msra.mxu0 0.0
  %276 = vmatprep.subr.mxu0 0.0
  %277 = vmatpush1.msra.mxu0 0.0
  %278 = vmatprep.subr.mxu0 0.0
  %279 = vmatpush1.msra.mxu0 0.0
  %280 = vmatprep.subr.mxu0 0.0
  %281 = vmatpush1.msra.mxu0 0.0
  %282 = vmatprep.subr.mxu0 0.0
  %283 = vmatpush1.msra.mxu0 0.0
  %284 = vmatprep.subr.mxu0 0.0
  %285 = vmatpush1.msra.mxu0 0.0
  %286 = vmatprep.subr.mxu0 0.0
  %287 = vmatpush1.msra.mxu0 0.0
  %288 = vmatprep.subr.mxu0 0.0
  %289 = vmatpush1.msra.mxu0 0.0
  %290 = vmatprep.subr.mxu0 0.0
  %291 = vmatpush1.msra.mxu0 0.0
  %292 = vmatprep.subr.mxu0 0.0
  %293 = vmatpush1.msra.mxu0 0.0
  %294 = vmatprep.subr.mxu0 0.0
  %295 = vmatpush1.msra.mxu0 0.0
  %296 = vmatprep.subr.mxu0 0.0
  %297 = vmatpush1.msra.mxu0 0.0
  %298 = vmatprep.subr.mxu0 0.0
  %299 = vmatpush1.msra.mxu0 0.0
  %300 = vmatprep.subr.mxu0 0.0
  %301 = vmatpush1.msra.mxu0 0.0
  %302 = vmatprep.subr.mxu0 0.0
  %303 = vmatpush1.msra.mxu0 0.0
  %304 = vmatprep.subr.mxu0 0.0
  %305 = vmatpush1.msra.mxu0 0.0
  %306 = vmatprep.subr.mxu0 0.0
  %307 = vmatpush1.msra.mxu0 0.0
  %308 = vmatprep.subr.mxu0 0.0
  %309 = vmatpush1.msra.mxu0 0.0
  %310 = vmatprep.subr.mxu0 0.0
  %311 = vmatpush1.msra.mxu0 0.0
  %312 = vmatprep.subr.mxu0 0.0
  %313 = vmatpush1.msra.mxu0 0.0
  %314 = vmatprep.subr.mxu0 0.0
  %315 = vmatpush1.msra.mxu0 0.0
  %316 = vmatprep.subr.mxu0 0.0
  %317 = vmatpush1.msra.mxu0 0.0
  %318 = vmatprep.subr.mxu0 0.0
  %319 = vmatpush1.msra.mxu0 0.0
  %320 = vmatprep.subr.mxu0 0.0
  %321 = vmatpush1.msra.mxu0 0.0
  %322 = vmatprep.subr.mxu0 0.0
  %323 = vmatpush1.msra.mxu0 0.0
  %324 = vmatprep.subr.mxu0 0.0
  %325 = vmatpush1.msra.mxu0 0.0
  %326 = vmatprep.mubr.f32.mxu0 0.0
  %327 = vmatmul.mubr.f32.gmra.mrb[0].mxu0 %v260
  %v328 = vpop.f32.mrb[0].mxu0
  %v329 = vadd.f32 0.0, %v328
  %v330 = vpop.f32.mrb[0].mxu0
  %331 = vdwg.mxu0
  %v332 = vadd.f32 %v259, %v329
  %v333 = vxor.u32 %v332, 2147483648
  %v334 = vmul.f32 %v333, 1.442695
  %v335 = vpow.pop %v334
  %v336 = vadd.f32 %v335, 1.0
  %v337 = vrcp.pop %v336
  %v338 = vmul.f32 1.0, %v337
  %v339 = vadd.f32 %v329, %v120
  %341 = vrot.lane.b32.xlu0 %v339, 64
  %v342 = vpop.permute.xlu0 %341
  %v344 = vmul.f32 %v338, %v342
  %346 = vrot.lane.b32.xlu0 %v344, 64
  %v347 = vpop.permute.xlu0 %346
  %v349 = vadd.f32 %v259, %v347
  %v350 = vtanh.pop %v349
  %v351 = vsub.f32 1.0, %v338
  %353 = vrot.lane.b32.xlu0 %v350, 96
  %v354 = vpop.permute.xlu0 %353
  %v356 = vmul.f32 %v351, %v354
  %v357 = vmul.f32 %v338, %v251
  %v358 = vadd.f32 %v356, %v357
  %360 = vrot.lane.b32.xlu0 %v358, 96
  %v361 = vpop.permute.xlu0 %360
  %s363 = scalar_lea.vmem %s4, 4
  %364 = vst.msk [vmem:[%s363] sm:$0x3] %vm149, %v361
  %s365 = scalar_lea.vmem %s0, 6
  %v366 = vld [vmem:[%s365] sm:$0x3]
  %v367 = vsel %vm33, %v361, 0
  %369 = vmatprep.subr.mxu0 0.0
  %370 = vmatpush1.msra.mxu0 %v26
  %371 = vmatprep.subr.mxu0 0.0
  %372 = vmatpush1.msra.mxu0 %v27
  %373 = vmatprep.subr.mxu0 0.0
  %374 = vmatpush1.msra.mxu0 %v28
  %375 = vmatprep.subr.mxu0 0.0
  %376 = vmatpush1.msra.mxu0 %v29
  %377 = vmatprep.subr.mxu0 0.0
  %378 = vmatpush1.msra.mxu0 0.0
  %379 = vmatprep.subr.mxu0 0.0
  %380 = vmatpush1.msra.mxu0 0.0
  %381 = vmatprep.subr.mxu0 0.0
  %382 = vmatpush1.msra.mxu0 0.0
  %383 = vmatprep.subr.mxu0 0.0
  %384 = vmatpush1.msra.mxu0 0.0
  %385 = vmatprep.subr.mxu0 0.0
  %386 = vmatpush1.msra.mxu0 0.0
  %387 = vmatprep.subr.mxu0 0.0
  %388 = vmatpush1.msra.mxu0 0.0
  %389 = vmatprep.subr.mxu0 0.0
  %390 = vmatpush1.msra.mxu0 0.0
  %391 = vmatprep.subr.mxu0 0.0
  %392 = vmatpush1.msra.mxu0 0.0
  %393 = vmatprep.subr.mxu0 0.0
  %394 = vmatpush1.msra.mxu0 0.0
  %395 = vmatprep.subr.mxu0 0.0
  %396 = vmatpush1.msra.mxu0 0.0
  %397 = vmatprep.subr.mxu0 0.0
  %398 = vmatpush1.msra.mxu0 0.0
  %399 = vmatprep.subr.mxu0 0.0
  %400 = vmatpush1.msra.mxu0 0.0
  %401 = vmatprep.subr.mxu0 0.0
  %402 = vmatpush1.msra.mxu0 0.0
  %403 = vmatprep.subr.mxu0 0.0
  %404 = vmatpush1.msra.mxu0 0.0
  %405 = vmatprep.subr.mxu0 0.0
  %406 = vmatpush1.msra.mxu0 0.0
  %407 = vmatprep.subr.mxu0 0.0
  %408 = vmatpush1.msra.mxu0 0.0
  %409 = vmatprep.subr.mxu0 0.0
  %410 = vmatpush1.msra.mxu0 0.0
  %411 = vmatprep.subr.mxu0 0.0
  %412 = vmatpush1.msra.mxu0 0.0
  %413 = vmatprep.subr.mxu0 0.0
  %414 = vmatpush1.msra.mxu0 0.0
  %415 = vmatprep.subr.mxu0 0.0
  %416 = vmatpush1.msra.mxu0 0.0
  %417 = vmatprep.subr.mxu0 0.0
  %418 = vmatpush1.msra.mxu0 0.0
  %419 = vmatprep.subr.mxu0 0.0
  %420 = vmatpush1.msra.mxu0 0.0
  %421 = vmatprep.subr.mxu0 0.0
  %422 = vmatpush1.msra.mxu0 0.0
  %423 = vmatprep.subr.mxu0 0.0
  %424 = vmatpush1.msra.mxu0 0.0
  %425 = vmatprep.subr.mxu0 0.0
  %426 = vmatpush1.msra.mxu0 0.0
  %427 = vmatprep.subr.mxu0 0.0
  %428 = vmatpush1.msra.mxu0 0.0
  %429 = vmatprep.subr.mxu0 0.0
  %430 = vmatpush1.msra.mxu0 0.0
  %431 = vmatprep.subr.mxu0 0.0
  %432 = vmatpush1.msra.mxu0 0.0
  %433 = vmatprep.mubr.f32.mxu0 0.0
  %434 = vmatmul.mubr.f32.gmra.mrb[0].mxu0 %v367
  %v435 = vpop.f32.mrb[0].mxu0
  %v436 = vadd.f32 0.0, %v435
  %v437 = vpop.f32.mrb[0].mxu0
  %438 = vdwg.mxu0
  %v439 = vadd.f32 %v366, %v436
  %v440 = vxor.u32 %v439, 2147483648
  %v441 = vmul.f32 %v440, 1.442695
  %v442 = vpow.pop %v441
  %v443 = vadd.f32 %v442, 1.0
  %v444 = vrcp.pop %v443
  %v445 = vmul.f32 1.0, %v444
  %v446 = vadd.f32 %v436, %v120
  %448 = vrot.lane.b32.xlu0 %v446, 64
  %v449 = vpop.permute.xlu0 %448
  %v451 = vmul.f32 %v445, %v449
  %453 = vrot.lane.b32.xlu0 %v451, 64
  %v454 = vpop.permute.xlu0 %453
  %v456 = vadd.f32 %v366, %v454
  %v457 = vtanh.pop %v456
  %v458 = vsub.f32 1.0, %v445
  %460 = vrot.lane.b32.xlu0 %v457, 96
  %v461 = vpop.permute.xlu0 %460
  %v463 = vmul.f32 %v458, %v461
  %v464 = vmul.f32 %v445, %v358
  %v465 = vadd.f32 %v463, %v464
  %467 = vrot.lane.b32.xlu0 %v465, 96
  %v468 = vpop.permute.xlu0 %467
  %s470 = scalar_lea.vmem %s4, 6
  %471 = vst.msk [vmem:[%s470] sm:$0x3] %vm149, %v468
  %s472 = scalar_lea.vmem %s0, 8
  %v473 = vld [vmem:[%s472] sm:$0x3]
  %v474 = vsel %vm33, %v468, 0
  %476 = vmatprep.subr.mxu0 0.0
  %477 = vmatpush1.msra.mxu0 %v26
  %478 = vmatprep.subr.mxu0 0.0
  %479 = vmatpush1.msra.mxu0 %v27
  %480 = vmatprep.subr.mxu0 0.0
  %481 = vmatpush1.msra.mxu0 %v28
  %482 = vmatprep.subr.mxu0 0.0
  %483 = vmatpush1.msra.mxu0 %v29
  %484 = vmatprep.subr.mxu0 0.0
  %485 = vmatpush1.msra.mxu0 0.0
  %486 = vmatprep.subr.mxu0 0.0
  %487 = vmatpush1.msra.mxu0 0.0
  %488 = vmatprep.subr.mxu0 0.0
  %489 = vmatpush1.msra.mxu0 0.0
  %490 = vmatprep.subr.mxu0 0.0
  %491 = vmatpush1.msra.mxu0 0.0
  %492 = vmatprep.subr.mxu0 0.0
  %493 = vmatpush1.msra.mxu0 0.0
  %494 = vmatprep.subr.mxu0 0.0
  %495 = vmatpush1.msra.mxu0 0.0
  %496 = vmatprep.subr.mxu0 0.0
  %497 = vmatpush1.msra.mxu0 0.0
  %498 = vmatprep.subr.mxu0 0.0
  %499 = vmatpush1.msra.mxu0 0.0
  %500 = vmatprep.subr.mxu0 0.0
  %501 = vmatpush1.msra.mxu0 0.0
  %502 = vmatprep.subr.mxu0 0.0
  %503 = vmatpush1.msra.mxu0 0.0
  %504 = vmatprep.subr.mxu0 0.0
  %505 = vmatpush1.msra.mxu0 0.0
  %506 = vmatprep.subr.mxu0 0.0
  %507 = vmatpush1.msra.mxu0 0.0
  %508 = vmatprep.subr.mxu0 0.0
  %509 = vmatpush1.msra.mxu0 0.0
  %510 = vmatprep.subr.mxu0 0.0
  %511 = vmatpush1.msra.mxu0 0.0
  %512 = vmatprep.subr.mxu0 0.0
  %513 = vmatpush1.msra.mxu0 0.0
  %514 = vmatprep.subr.mxu0 0.0
  %515 = vmatpush1.msra.mxu0 0.0
  %516 = vmatprep.subr.mxu0 0.0
  %517 = vmatpush1.msra.mxu0 0.0
  %518 = vmatprep.subr.mxu0 0.0
  %519 = vmatpush1.msra.mxu0 0.0
  %520 = vmatprep.subr.mxu0 0.0
  %521 = vmatpush1.msra.mxu0 0.0
  %522 = vmatprep.subr.mxu0 0.0
  %523 = vmatpush1.msra.mxu0 0.0
  %524 = vmatprep.subr.mxu0 0.0
  %525 = vmatpush1.msra.mxu0 0.0
  %526 = vmatprep.subr.mxu0 0.0
  %527 = vmatpush1.msra.mxu0 0.0
  %528 = vmatprep.subr.mxu0 0.0
  %529 = vmatpush1.msra.mxu0 0.0
  %530 = vmatprep.subr.mxu0 0.0
  %531 = vmatpush1.msra.mxu0 0.0
  %532 = vmatprep.subr.mxu0 0.0
  %533 = vmatpush1.msra.mxu0 0.0
  %534 = vmatprep.subr.mxu0 0.0
  %535 = vmatpush1.msra.mxu0 0.0
  %536 = vmatprep.subr.mxu0 0.0
  %537 = vmatpush1.msra.mxu0 0.0
  %538 = vmatprep.subr.mxu0 0.0
  %539 = vmatpush1.msra.mxu0 0.0
  %540 = vmatprep.mubr.f32.mxu0 0.0
  %541 = vmatmul.mubr.f32.gmra.mrb[0].mxu0 %v474
  %v542 = vpop.f32.mrb[0].mxu0
  %v543 = vadd.f32 0.0, %v542
  %v544 = vpop.f32.mrb[0].mxu0
  %545 = vdwg.mxu0
  %v546 = vadd.f32 %v473, %v543
  %v547 = vxor.u32 %v546, 2147483648
  %v548 = vmul.f32 %v547, 1.442695
  %v549 = vpow.pop %v548
  %v550 = vadd.f32 %v549, 1.0
  %v551 = vrcp.pop %v550
  %v552 = vmul.f32 1.0, %v551
  %v553 = vadd.f32 %v543, %v120
  %555 = vrot.lane.b32.xlu0 %v553, 64
  %v556 = vpop.permute.xlu0 %555
  %v558 = vmul.f32 %v552, %v556
  %560 = vrot.lane.b32.xlu0 %v558, 64
  %v561 = vpop.permute.xlu0 %560
  %v563 = vadd.f32 %v473, %v561
  %v564 = vtanh.pop %v563
  %v565 = vsub.f32 1.0, %v552
  %567 = vrot.lane.b32.xlu0 %v564, 96
  %v568 = vpop.permute.xlu0 %567
  %v570 = vmul.f32 %v565, %v568
  %v571 = vmul.f32 %v552, %v465
  %v572 = vadd.f32 %v570, %v571
  %574 = vrot.lane.b32.xlu0 %v572, 96
  %v575 = vpop.permute.xlu0 %574
  %s577 = scalar_lea.vmem %s4, 8
  %578 = vst.msk [vmem:[%s577] sm:$0x3] %vm149, %v575
  %s579 = scalar_lea.vmem %s0, 10
  %v580 = vld [vmem:[%s579] sm:$0x3]
  %v581 = vsel %vm33, %v575, 0
  %583 = vmatprep.subr.mxu0 0.0
  %584 = vmatpush1.msra.mxu0 %v26
  %585 = vmatprep.subr.mxu0 0.0
  %586 = vmatpush1.msra.mxu0 %v27
  %587 = vmatprep.subr.mxu0 0.0
  %588 = vmatpush1.msra.mxu0 %v28
  %589 = vmatprep.subr.mxu0 0.0
  %590 = vmatpush1.msra.mxu0 %v29
  %591 = vmatprep.subr.mxu0 0.0
  %592 = vmatpush1.msra.mxu0 0.0
  %593 = vmatprep.subr.mxu0 0.0
  %594 = vmatpush1.msra.mxu0 0.0
  %595 = vmatprep.subr.mxu0 0.0
  %596 = vmatpush1.msra.mxu0 0.0
  %597 = vmatprep.subr.mxu0 0.0
  %598 = vmatpush1.msra.mxu0 0.0
  %599 = vmatprep.subr.mxu0 0.0
  %600 = vmatpush1.msra.mxu0 0.0
  %601 = vmatprep.subr.mxu0 0.0
  %602 = vmatpush1.msra.mxu0 0.0
  %603 = vmatprep.subr.mxu0 0.0
  %604 = vmatpush1.msra.mxu0 0.0
  %605 = vmatprep.subr.mxu0 0.0
  %606 = vmatpush1.msra.mxu0 0.0
  %607 = vmatprep.subr.mxu0 0.0
  %608 = vmatpush1.msra.mxu0 0.0
  %609 = vmatprep.subr.mxu0 0.0
  %610 = vmatpush1.msra.mxu0 0.0
  %611 = vmatprep.subr.mxu0 0.0
  %612 = vmatpush1.msra.mxu0 0.0
  %613 = vmatprep.subr.mxu0 0.0
  %614 = vmatpush1.msra.mxu0 0.0
  %615 = vmatprep.subr.mxu0 0.0
  %616 = vmatpush1.msra.mxu0 0.0
  %617 = vmatprep.subr.mxu0 0.0
  %618 = vmatpush1.msra.mxu0 0.0
  %619 = vmatprep.subr.mxu0 0.0
  %620 = vmatpush1.msra.mxu0 0.0
  %621 = vmatprep.subr.mxu0 0.0
  %622 = vmatpush1.msra.mxu0 0.0
  %623 = vmatprep.subr.mxu0 0.0
  %624 = vmatpush1.msra.mxu0 0.0
  %625 = vmatprep.subr.mxu0 0.0
  %626 = vmatpush1.msra.mxu0 0.0
  %627 = vmatprep.subr.mxu0 0.0
  %628 = vmatpush1.msra.mxu0 0.0
  %629 = vmatprep.subr.mxu0 0.0
  %630 = vmatpush1.msra.mxu0 0.0
  %631 = vmatprep.subr.mxu0 0.0
  %632 = vmatpush1.msra.mxu0 0.0
  %633 = vmatprep.subr.mxu0 0.0
  %634 = vmatpush1.msra.mxu0 0.0
  %635 = vmatprep.subr.mxu0 0.0
  %636 = vmatpush1.msra.mxu0 0.0
  %637 = vmatprep.subr.mxu0 0.0
  %638 = vmatpush1.msra.mxu0 0.0
  %639 = vmatprep.subr.mxu0 0.0
  %640 = vmatpush1.msra.mxu0 0.0
  %641 = vmatprep.subr.mxu0 0.0
  %642 = vmatpush1.msra.mxu0 0.0
  %643 = vmatprep.subr.mxu0 0.0
  %644 = vmatpush1.msra.mxu0 0.0
  %645 = vmatprep.subr.mxu0 0.0
  %646 = vmatpush1.msra.mxu0 0.0
  %647 = vmatprep.mubr.f32.mxu0 0.0
  %648 = vmatmul.mubr.f32.gmra.mrb[0].mxu0 %v581
  %v649 = vpop.f32.mrb[0].mxu0
  %v650 = vadd.f32 0.0, %v649
  %v651 = vpop.f32.mrb[0].mxu0
  %652 = vdwg.mxu0
  %v653 = vadd.f32 %v580, %v650
  %v654 = vxor.u32 %v653, 2147483648
  %v655 = vmul.f32 %v654, 1.442695
  %v656 = vpow.pop %v655
  %v657 = vadd.f32 %v656, 1.0
  %v658 = vrcp.pop %v657
  %v659 = vmul.f32 1.0, %v658
  %v660 = vadd.f32 %v650, %v120
  %662 = vrot.lane.b32.xlu0 %v660, 64
  %v663 = vpop.permute.xlu0 %662
  %v665 = vmul.f32 %v659, %v663
  %667 = vrot.lane.b32.xlu0 %v665, 64
  %v668 = vpop.permute.xlu0 %667
  %v670 = vadd.f32 %v580, %v668
  %v671 = vtanh.pop %v670
  %v672 = vsub.f32 1.0, %v659
  %674 = vrot.lane.b32.xlu0 %v671, 96
  %v675 = vpop.permute.xlu0 %674
  %v677 = vmul.f32 %v672, %v675
  %v678 = vmul.f32 %v659, %v572
  %v679 = vadd.f32 %v677, %v678
  %681 = vrot.lane.b32.xlu0 %v679, 96
  %v682 = vpop.permute.xlu0 %681
  %s684 = scalar_lea.vmem %s4, 10
  %685 = vst.msk [vmem:[%s684] sm:$0x3] %vm149, %v682
  %s686 = scalar_lea.vmem %s0, 12
  %v687 = vld [vmem:[%s686] sm:$0x3]
  %v688 = vsel %vm33, %v682, 0
  %690 = vmatprep.subr.mxu0 0.0
  %691 = vmatpush1.msra.mxu0 %v26
  %692 = vmatprep.subr.mxu0 0.0
  %693 = vmatpush1.msra.mxu0 %v27
  %694 = vmatprep.subr.mxu0 0.0
  %695 = vmatpush1.msra.mxu0 %v28
  %696 = vmatprep.subr.mxu0 0.0
  %697 = vmatpush1.msra.mxu0 %v29
  %698 = vmatprep.subr.mxu0 0.0
  %699 = vmatpush1.msra.mxu0 0.0
  %700 = vmatprep.subr.mxu0 0.0
  %701 = vmatpush1.msra.mxu0 0.0
  %702 = vmatprep.subr.mxu0 0.0
  %703 = vmatpush1.msra.mxu0 0.0
  %704 = vmatprep.subr.mxu0 0.0
  %705 = vmatpush1.msra.mxu0 0.0
  %706 = vmatprep.subr.mxu0 0.0
  %707 = vmatpush1.msra.mxu0 0.0
  %708 = vmatprep.subr.mxu0 0.0
  %709 = vmatpush1.msra.mxu0 0.0
  %710 = vmatprep.subr.mxu0 0.0
  %711 = vmatpush1.msra.mxu0 0.0
  %712 = vmatprep.subr.mxu0 0.0
  %713 = vmatpush1.msra.mxu0 0.0
  %714 = vmatprep.subr.mxu0 0.0
  %715 = vmatpush1.msra.mxu0 0.0
  %716 = vmatprep.subr.mxu0 0.0
  %717 = vmatpush1.msra.mxu0 0.0
  %718 = vmatprep.subr.mxu0 0.0
  %719 = vmatpush1.msra.mxu0 0.0
  %720 = vmatprep.subr.mxu0 0.0
  %721 = vmatpush1.msra.mxu0 0.0
  %722 = vmatprep.subr.mxu0 0.0
  %723 = vmatpush1.msra.mxu0 0.0
  %724 = vmatprep.subr.mxu0 0.0
  %725 = vmatpush1.msra.mxu0 0.0
  %726 = vmatprep.subr.mxu0 0.0
  %727 = vmatpush1.msra.mxu0 0.0
  %728 = vmatprep.subr.mxu0 0.0
  %729 = vmatpush1.msra.mxu0 0.0
  %730 = vmatprep.subr.mxu0 0.0
  %731 = vmatpush1.msra.mxu0 0.0
  %732 = vmatprep.subr.mxu0 0.0
  %733 = vmatpush1.msra.mxu0 0.0
  %734 = vmatprep.subr.mxu0 0.0
  %735 = vmatpush1.msra.mxu0 0.0
  %736 = vmatprep.subr.mxu0 0.0
  %737 = vmatpush1.msra.mxu0 0.0
  %738 = vmatprep.subr.mxu0 0.0
  %739 = vmatpush1.msra.mxu0 0.0
  %740 = vmatprep.subr.mxu0 0.0
  %741 = vmatpush1.msra.mxu0 0.0
  %742 = vmatprep.subr.mxu0 0.0
  %743 = vmatpush1.msra.mxu0 0.0
  %744 = vmatprep.subr.mxu0 0.0
  %745 = vmatpush1.msra.mxu0 0.0
  %746 = vmatprep.subr.mxu0 0.0
  %747 = vmatpush1.msra.mxu0 0.0
  %748 = vmatprep.subr.mxu0 0.0
  %749 = vmatpush1.msra.mxu0 0.0
  %750 = vmatprep.subr.mxu0 0.0
  %751 = vmatpush1.msra.mxu0 0.0
  %752 = vmatprep.subr.mxu0 0.0
  %753 = vmatpush1.msra.mxu0 0.0
  %754 = vmatprep.mubr.f32.mxu0 0.0
  %755 = vmatmul.mubr.f32.gmra.mrb[0].mxu0 %v688
  %v756 = vpop.f32.mrb[0].mxu0
  %v757 = vadd.f32 0.0, %v756
  %v758 = vpop.f32.mrb[0].mxu0
  %759 = vdwg.mxu0
  %v760 = vadd.f32 %v687, %v757
  %v761 = vxor.u32 %v760, 2147483648
  %v762 = vmul.f32 %v761, 1.442695
  %v763 = vpow.pop %v762
  %v764 = vadd.f32 %v763, 1.0
  %v765 = vrcp.pop %v764
  %v766 = vmul.f32 1.0, %v765
  %v767 = vadd.f32 %v757, %v120
  %769 = vrot.lane.b32.xlu0 %v767, 64
  %v770 = vpop.permute.xlu0 %769
  %v772 = vmul.f32 %v766, %v770
  %774 = vrot.lane.b32.xlu0 %v772, 64
  %v775 = vpop.permute.xlu0 %774
  %v777 = vadd.f32 %v687, %v775
  %v778 = vtanh.pop %v777
  %v779 = vsub.f32 1.0, %v766
  %781 = vrot.lane.b32.xlu0 %v778, 96
  %v782 = vpop.permute.xlu0 %781
  %v784 = vmul.f32 %v779, %v782
  %v785 = vmul.f32 %v766, %v679
  %v786 = vadd.f32 %v784, %v785
  %788 = vrot.lane.b32.xlu0 %v786, 96
  %v789 = vpop.permute.xlu0 %788
  %s791 = scalar_lea.vmem %s4, 12
  %792 = vst.msk [vmem:[%s791] sm:$0x3] %vm149, %v789
  %s793 = scalar_lea.vmem %s0, 14
  %v794 = vld [vmem:[%s793] sm:$0x3]
  %v795 = vsel %vm33, %v789, 0
  %797 = vmatprep.subr.mxu0 0.0
  %798 = vmatpush1.msra.mxu0 %v26
  %799 = vmatprep.subr.mxu0 0.0
  %800 = vmatpush1.msra.mxu0 %v27
  %801 = vmatprep.subr.mxu0 0.0
  %802 = vmatpush1.msra.mxu0 %v28
  %803 = vmatprep.subr.mxu0 0.0
  %804 = vmatpush1.msra.mxu0 %v29
  %805 = vmatprep.subr.mxu0 0.0
  %806 = vmatpush1.msra.mxu0 0.0
  %807 = vmatprep.subr.mxu0 0.0
  %808 = vmatpush1.msra.mxu0 0.0
  %809 = vmatprep.subr.mxu0 0.0
  %810 = vmatpush1.msra.mxu0 0.0
  %811 = vmatprep.subr.mxu0 0.0
  %812 = vmatpush1.msra.mxu0 0.0
  %813 = vmatprep.subr.mxu0 0.0
  %814 = vmatpush1.msra.mxu0 0.0
  %815 = vmatprep.subr.mxu0 0.0
  %816 = vmatpush1.msra.mxu0 0.0
  %817 = vmatprep.subr.mxu0 0.0
  %818 = vmatpush1.msra.mxu0 0.0
  %819 = vmatprep.subr.mxu0 0.0
  %820 = vmatpush1.msra.mxu0 0.0
  %821 = vmatprep.subr.mxu0 0.0
  %822 = vmatpush1.msra.mxu0 0.0
  %823 = vmatprep.subr.mxu0 0.0
  %824 = vmatpush1.msra.mxu0 0.0
  %825 = vmatprep.subr.mxu0 0.0
  %826 = vmatpush1.msra.mxu0 0.0
  %827 = vmatprep.subr.mxu0 0.0
  %828 = vmatpush1.msra.mxu0 0.0
  %829 = vmatprep.subr.mxu0 0.0
  %830 = vmatpush1.msra.mxu0 0.0
  %831 = vmatprep.subr.mxu0 0.0
  %832 = vmatpush1.msra.mxu0 0.0
  %833 = vmatprep.subr.mxu0 0.0
  %834 = vmatpush1.msra.mxu0 0.0
  %835 = vmatprep.subr.mxu0 0.0
  %836 = vmatpush1.msra.mxu0 0.0
  %837 = vmatprep.subr.mxu0 0.0
  %838 = vmatpush1.msra.mxu0 0.0
  %839 = vmatprep.subr.mxu0 0.0
  %840 = vmatpush1.msra.mxu0 0.0
  %841 = vmatprep.subr.mxu0 0.0
  %842 = vmatpush1.msra.mxu0 0.0
  %843 = vmatprep.subr.mxu0 0.0
  %844 = vmatpush1.msra.mxu0 0.0
  %845 = vmatprep.subr.mxu0 0.0
  %846 = vmatpush1.msra.mxu0 0.0
  %847 = vmatprep.subr.mxu0 0.0
  %848 = vmatpush1.msra.mxu0 0.0
  %849 = vmatprep.subr.mxu0 0.0
  %850 = vmatpush1.msra.mxu0 0.0
  %851 = vmatprep.subr.mxu0 0.0
  %852 = vmatpush1.msra.mxu0 0.0
  %853 = vmatprep.subr.mxu0 0.0
  %854 = vmatpush1.msra.mxu0 0.0
  %855 = vmatprep.subr.mxu0 0.0
  %856 = vmatpush1.msra.mxu0 0.0
  %857 = vmatprep.subr.mxu0 0.0
  %858 = vmatpush1.msra.mxu0 0.0
  %859 = vmatprep.subr.mxu0 0.0
  %860 = vmatpush1.msra.mxu0 0.0
  %861 = vmatprep.mubr.f32.mxu0 0.0
  %862 = vmatmul.mubr.f32.gmra.mrb[0].mxu0 %v795
  %v863 = vpop.f32.mrb[0].mxu0
  %v864 = vadd.f32 0.0, %v863
  %v865 = vpop.f32.mrb[0].mxu0
  %866 = vdwg.mxu0
  %v867 = vadd.f32 %v794, %v864
  %v868 = vxor.u32 %v867, 2147483648
  %v869 = vmul.f32 %v868, 1.442695
  %v870 = vpow.pop %v869
  %v871 = vadd.f32 %v870, 1.0
  %v872 = vrcp.pop %v871
  %v873 = vmul.f32 1.0, %v872
  %v874 = vadd.f32 %v864, %v120
  %876 = vrot.lane.b32.xlu0 %v874, 64
  %v877 = vpop.permute.xlu0 %876
  %v879 = vmul.f32 %v873, %v877
  %881 = vrot.lane.b32.xlu0 %v879, 64
  %v882 = vpop.permute.xlu0 %881
  %v884 = vadd.f32 %v794, %v882
  %v885 = vtanh.pop %v884
  %v886 = vsub.f32 1.0, %v873
  %888 = vrot.lane.b32.xlu0 %v885, 96
  %v889 = vpop.permute.xlu0 %888
  %v891 = vmul.f32 %v886, %v889
  %v892 = vmul.f32 %v873, %v786
  %v893 = vadd.f32 %v891, %v892
  %895 = vrot.lane.b32.xlu0 %v893, 96
  %v896 = vpop.permute.xlu0 %895
  %s898 = scalar_lea.vmem %s4, 14
  %899 = vst.msk [vmem:[%s898] sm:$0x3] %vm149, %v896
  %900 = vst.msk [vmem:[%s5] sm:$0x3] %vm149, %v896
  // Predicated region
  $region22: #{gru_seq2seq_forward.10} parent=0 // pred_check
    _
  $region23: #{gru_seq2seq_forward.10} parent=0 // pred_check_branch
    %902 = sbr.rel (0) target = $region25
  $region24: #{gru_seq2seq_forward.10} parent=0 // pred_region
    _
  $region25: #{gru_seq2seq_forward.10} parent=0 // pred_fallthru
    _
  // Predicated region
  $region26: #{gru_seq2seq_forward.10} parent=0 // pred_check
    _
  $region27: #{gru_seq2seq_forward.10} parent=0 // pred_check_branch
    %904 = sbr.rel (0) target = $region29
  $region28: #{gru_seq2seq_forward.10} parent=0 // pred_region
    _
  $region29: #{gru_seq2seq_forward.10} parent=0 // pred_fallthru
    _
  // Predicated region
  $region30: #{gru_seq2seq_forward.10} parent=0 // pred_check
    _
  $region31: #{gru_seq2seq_forward.10} parent=0 // pred_check_branch
    %906 = sbr.rel (0) target = $region33
  $region32: #{gru_seq2seq_forward.10} parent=0 // pred_region
    _
  $region33: #{gru_seq2seq_forward.10} parent=0 // pred_fallthru
    _
  // Predicated region
  $region34: #{gru_seq2seq_forward.10} parent=0 // pred_check
    _
  $region35: #{gru_seq2seq_forward.10} parent=0 // pred_check_branch
    %908 = sbr.rel (0) target = $region37
  $region36: #{gru_seq2seq_forward.10} parent=0 // pred_region
    _
  $region37: #{gru_seq2seq_forward.10} parent=0 // pred_fallthru
    _

// kernel: gru_seq2seq_forward.12
$region0: #{gru_seq2seq_forward.12}
  #allocation0 [shape = 'u32[]', space=smem, size = 0x4, offset = 0x4, fixed_abs, tag = 'smem constant byte address 0x4 - core index']
  #allocation1 [shape = 'u32[144,128]{1,0:T(1,128)}', space=vmem, size = 0x12000, scoped, tag = 'internal scratch']
  %s0 = inlined_call_operand.vmem [shape: f32[8,2,96], index: 0, kind: input, shape index: {}]
  %s1 = inlined_call_operand.vmem [shape: f32[2,32], index: 1, kind: input, shape index: {}]
  %s2 = inlined_call_operand.vmem [shape: f32[32,96], index: 2, kind: input, shape index: {}]
  %s3 = inlined_call_operand.vmem [shape: f32[1,32], index: 3, kind: input, shape index: {}]
  %s4 = inlined_call_operand.hbm [shape: f32[8,2,32], index: 4, kind: output, shape index: {0}]
  %s5 = inlined_call_operand.vmem [shape: f32[2,32], index: 5, kind: output, shape index: {1}]
  %6 = xla_tuple %s4, %s5
  %s7 = sld [smem:[#allocation0]]
  $region38: #{gru_seq2seq_forward.12} parent=0
    _
  %s9 = ssub.s32 1, %s7
  %s10 = scalar_select 0, %s9, %s7
  $region1: #{gru_seq2seq_forward.12} parent=0
    #allocation2 [shape = 'u8[8192]{0}', space=vmem, size = 0x2000, scoped, tag = 'output window, operand 0, single buffered']
    #allocation3 [shape = 's32[1]{0}', space=sflag, size = 0x4, scoped, tag = 'scoped memory for gru_seq2seq_forward.12']
    %11 = vsyncpa [#allocation3], 0
    // Predicated region
    $region2: #{gru_seq2seq_forward.12} parent=1 // pred_check
      _
    $region3: #{gru_seq2seq_forward.12} parent=1 // pred_check_branch
      %13 = sbr.rel (0) target = $region5
    $region4: #{gru_seq2seq_forward.12} parent=1 // pred_region
      _
    $region5: #{gru_seq2seq_forward.12} parent=1 // pred_fallthru
      _
    // Predicated region
    $region6: #{gru_seq2seq_forward.12} parent=1 // pred_check
      _
    $region7: #{gru_seq2seq_forward.12} parent=1 // pred_check_branch
      %15 = sbr.rel (0) target = $region9
    $region8: #{gru_seq2seq_forward.12} parent=1 // pred_region
      _
    $region9: #{gru_seq2seq_forward.12} parent=1 // pred_fallthru
      _
    // Predicated region
    $region10: #{gru_seq2seq_forward.12} parent=1 // pred_check
      _
    $region11: #{gru_seq2seq_forward.12} parent=1 // pred_check_branch
      %17 = sbr.rel (0) target = $region13
    $region12: #{gru_seq2seq_forward.12} parent=1 // pred_region
      _
    $region13: #{gru_seq2seq_forward.12} parent=1 // pred_fallthru
      _
    // Predicated region
    $region14: #{gru_seq2seq_forward.12} parent=1 // pred_check
      _
    $region15: #{gru_seq2seq_forward.12} parent=1 // pred_check_branch
      %19 = sbr.rel (0) target = $region17
    $region16: #{gru_seq2seq_forward.12} parent=1 // pred_region
      _
    $region17: #{gru_seq2seq_forward.12} parent=1 // pred_fallthru
      _
    %p20 = scmp.eq.s32.totalorder 0, 0
    // Predicated region
    $region18: #{gru_seq2seq_forward.12} parent=1 // pred_check
      %p21 = pneg %p20
    $region19: #{gru_seq2seq_forward.12} parent=1 // pred_check_branch
      %23 = sbr.rel (%p21) target = $region21
    $region20: #{gru_seq2seq_forward.12} parent=1 // pred_region
      %v24 = vld [vmem:[%s1] sm:$0x3]
      %vm25 = vcmask 254976
      %26 = vst.msk [vmem:[%s5] sm:$0x3] %vm25, %v24
    $region21: #{gru_seq2seq_forward.12} parent=1 // pred_fallthru
      _
    %v27 = vld [vmem:[%s2] sm:$0xff]
    %v28 = vld [vmem:[%s2 + $0x8] sm:$0xff]
    %v29 = vld [vmem:[%s2 + $0x10] sm:$0xff]
    %v30 = vld [vmem:[%s2 + $0x18] sm:$0xff]
    %v31 = vld [vmem:[%s3] sm:$0x1]
    %v32 = vld [vmem:[%s5] sm:$0x3]
    %v33 = vld [vmem:[%s0] sm:$0x3]
    %vm34 = vcmask 261120
    %v36 = vsel %vm34, %v32, 0
    %38 = vmatprep.subr.mxu0 0.0
    %39 = vmatpush1.msra.mxu0 %v27
    %40 = vmatprep.subr.mxu0 0.0
    %41 = vmatpush1.msra.mxu0 %v28
    %42 = vmatprep.subr.mxu0 0.0
    %43 = vmatpush1.msra.mxu0 %v29
    %44 = vmatprep.subr.mxu0 0.0
    %45 = vmatpush1.msra.mxu0 %v30
    %46 = vmatprep.subr.mxu0 0.0
    %47 = vmatpush1.msra.mxu0 0.0
    %48 = vmatprep.subr.mxu0 0.0
    %49 = vmatpush1.msra.mxu0 0.0
    %50 = vmatprep.subr.mxu0 0.0
    %51 = vmatpush1.msra.mxu0 0.0
    %52 = vmatprep.subr.mxu0 0.0
    %53 = vmatpush1.msra.mxu0 0.0
    %54 = vmatprep.subr.mxu0 0.0
    %55 = vmatpush1.msra.mxu0 0.0
    %56 = vmatprep.subr.mxu0 0.0
    %57 = vmatpush1.msra.mxu0 0.0
    %58 = vmatprep.subr.mxu0 0.0
    %59 = vmatpush1.msra.mxu0 0.0
    %60 = vmatprep.subr.mxu0 0.0
    %61 = vmatpush1.msra.mxu0 0.0
    %62 = vmatprep.subr.mxu0 0.0
    %63 = vmatpush1.msra.mxu0 0.0
    %64 = vmatprep.subr.mxu0 0.0
    %65 = vmatpush1.msra.mxu0 0.0
    %66 = vmatprep.subr.mxu0 0.0
    %67 = vmatpush1.msra.mxu0 0.0
    %68 = vmatprep.subr.mxu0 0.0
    %69 = vmatpush1.msra.mxu0 0.0
    %70 = vmatprep.subr.mxu0 0.0
    %71 = vmatpush1.msra.mxu0 0.0
    %72 = vmatprep.subr.mxu0 0.0
    %73 = vmatpush1.msra.mxu0 0.0
    %74 = vmatprep.subr.mxu0 0.0
    %75 = vmatpush1.msra.mxu0 0.0
    %76 = vmatprep.subr.mxu0 0.0
    %77 = vmatpush1.msra.mxu0 0.0
    %78 = vmatprep.subr.mxu0 0.0
    %79 = vmatpush1.msra.mxu0 0.0
    %80 = vmatprep.subr.mxu0 0.0
    %81 = vmatpush1.msra.mxu0 0.0
    %82 = vmatprep.subr.mxu0 0.0
    %83 = vmatpush1.msra.mxu0 0.0
    %84 = vmatprep.subr.mxu0 0.0
    %85 = vmatpush1.msra.mxu0 0.0
    %86 = vmatprep.subr.mxu0 0.0
    %87 = vmatpush1.msra.mxu0 0.0
    %88 = vmatprep.subr.mxu0 0.0
    %89 = vmatpush1.msra.mxu0 0.0
    %90 = vmatprep.subr.mxu0 0.0
    %91 = vmatpush1.msra.mxu0 0.0
    %92 = vmatprep.subr.mxu0 0.0
    %93 = vmatpush1.msra.mxu0 0.0
    %94 = vmatprep.subr.mxu0 0.0
    %95 = vmatpush1.msra.mxu0 0.0
    %96 = vmatprep.subr.mxu0 0.0
    %97 = vmatpush1.msra.mxu0 0.0
    %98 = vmatprep.subr.mxu0 0.0
    %99 = vmatpush1.msra.mxu0 0.0
    %100 = vmatprep.subr.mxu0 0.0
    %101 = vmatpush1.msra.mxu0 0.0
    %102 = vmatprep.mubr.f32.mxu0 0.0
    %103 = vmatmul.mubr.f32.gmra.mrb[0].mxu0 %v36
    %v104 = vpop.f32.mrb[0].mxu0
    %v105 = vadd.f32 0.0, %v104
    %v106 = vpop.f32.mrb[0].mxu0
    %107 = vdwg.mxu0
    %v108 = vadd.f32 %v33, %v105
    %v109 = vxor.u32 %v108, 2147483648
    %v110 = vmul.f32 %v109, 1.442695
    %v111 = vpow.pop %v110
    %v112 = vadd.f32 %v111, 1.0
    %v113 = vrcp.pop %v112
    %v114 = vmul.f32 1.0, %v113
    %v116 = vlaneseq
    %v117 = vshrl.u32 %v116, 7
    %v118 = vsub.s32 0, %v117
    %v119 = vrot.slane %v31, %v118
    %120 = vrot.lane.b32.xlu0 %v119, 64
    %v121 = vpop.permute.xlu0 %120
    %v123 = vadd.f32 %v105, %v121
    %125 = vrot.lane.b32.xlu0 %v123, 64
    %v126 = vpop.permute.xlu0 %125
    %v128 = vmul.f32 %v114, %v126
    %130 = vrot.lane.b32.xlu0 %v128, 64
    %v131 = vpop.permute.xlu0 %130
    %v133 = vadd.f32 %v33, %v131
    %v134 = vtanh.pop %v133
    %v135 = vsub.f32 1.0, %v114
    %137 = vrot.lane.b32.xlu0 %v134, 96
    %v138 = vpop.permute.xlu0 %137
    %v140 = vmul.f32 %v135, %v138
    %141 = vrot.lane.b32.xlu0 %v32, 32
    %v142 = vpop.permute.xlu0 %141
    %v144 = vmul.f32 %v114, %v142
    %v145 = vadd.f32 %v140, %v144
    %147 = vrot.lane.b32.xlu0 %v145, 96
    %v148 = vpop.permute.xlu0 %147
    %vm150 = vcmask 254976
    %151 = vst.msk [vmem:[#allocation2] sm:$0x3] %vm150, %v148
    %s152 = scalar_lea.vmem %s0, 2
    %v153 = vld [vmem:[%s152] sm:$0x3]
    %v154 = vsel %vm34, %v148, 0
    %156 = vmatprep.subr.mxu0 0.0
    %157 = vmatpush1.msra.mxu0 %v27
    %158 = vmatprep.subr.mxu0 0.0
    %159 = vmatpush1.msra.mxu0 %v28
    %160 = vmatprep.subr.mxu0 0.0
    %161 = vmatpush1.msra.mxu0 %v29
    %162 = vmatprep.subr.mxu0 0.0
    %163 = vmatpush1.msra.mxu0 %v30
    %164 = vmatprep.subr.mxu0 0.0
    %165 = vmatpush1.msra.mxu0 0.0
    %166 = vmatprep.subr.mxu0 0.0
    %167 = vmatpush1.msra.mxu0 0.0
    %168 = vmatprep.subr.mxu0 0.0
    %169 = vmatpush1.msra.mxu0 0.0
    %170 = vmatprep.subr.mxu0 0.0
    %171 = vmatpush1.msra.mxu0 0.0
    %172 = vmatprep.subr.mxu0 0.0
    %173 = vmatpush1.msra.mxu0 0.0
    %174 = vmatprep.subr.mxu0 0.0
    %175 = vmatpush1.msra.mxu0 0.0
    %176 = vmatprep.subr.mxu0 0.0
    %177 = vmatpush1.msra.mxu0 0.0
    %178 = vmatprep.subr.mxu0 0.0
    %179 = vmatpush1.msra.mxu0 0.0
    %180 = vmatprep.subr.mxu0 0.0
    %181 = vmatpush1.msra.mxu0 0.0
    %182 = vmatprep.subr.mxu0 0.0
    %183 = vmatpush1.msra.mxu0 0.0
    %184 = vmatprep.subr.mxu0 0.0
    %185 = vmatpush1.msra.mxu0 0.0
    %186 = vmatprep.subr.mxu0 0.0
    %187 = vmatpush1.msra.mxu0 0.0
    %188 = vmatprep.subr.mxu0 0.0
    %189 = vmatpush1.msra.mxu0 0.0
    %190 = vmatprep.subr.mxu0 0.0
    %191 = vmatpush1.msra.mxu0 0.0
    %192 = vmatprep.subr.mxu0 0.0
    %193 = vmatpush1.msra.mxu0 0.0
    %194 = vmatprep.subr.mxu0 0.0
    %195 = vmatpush1.msra.mxu0 0.0
    %196 = vmatprep.subr.mxu0 0.0
    %197 = vmatpush1.msra.mxu0 0.0
    %198 = vmatprep.subr.mxu0 0.0
    %199 = vmatpush1.msra.mxu0 0.0
    %200 = vmatprep.subr.mxu0 0.0
    %201 = vmatpush1.msra.mxu0 0.0
    %202 = vmatprep.subr.mxu0 0.0
    %203 = vmatpush1.msra.mxu0 0.0
    %204 = vmatprep.subr.mxu0 0.0
    %205 = vmatpush1.msra.mxu0 0.0
    %206 = vmatprep.subr.mxu0 0.0
    %207 = vmatpush1.msra.mxu0 0.0
    %208 = vmatprep.subr.mxu0 0.0
    %209 = vmatpush1.msra.mxu0 0.0
    %210 = vmatprep.subr.mxu0 0.0
    %211 = vmatpush1.msra.mxu0 0.0
    %212 = vmatprep.subr.mxu0 0.0
    %213 = vmatpush1.msra.mxu0 0.0
    %214 = vmatprep.subr.mxu0 0.0
    %215 = vmatpush1.msra.mxu0 0.0
    %216 = vmatprep.subr.mxu0 0.0
    %217 = vmatpush1.msra.mxu0 0.0
    %218 = vmatprep.subr.mxu0 0.0
    %219 = vmatpush1.msra.mxu0 0.0
    %220 = vmatprep.mubr.f32.mxu0 0.0
    %221 = vmatmul.mubr.f32.gmra.mrb[0].mxu0 %v154
    %v222 = vpop.f32.mrb[0].mxu0
    %v223 = vadd.f32 0.0, %v222
    %v224 = vpop.f32.mrb[0].mxu0
    %225 = vdwg.mxu0
    %v226 = vadd.f32 %v153, %v223
    %v227 = vxor.u32 %v226, 2147483648
    %v228 = vmul.f32 %v227, 1.442695
    %v229 = vpow.pop %v228
    %v230 = vadd.f32 %v229, 1.0
    %v231 = vrcp.pop %v230
    %v232 = vmul.f32 1.0, %v231
    %v233 = vadd.f32 %v223, %v121
    %235 = vrot.lane.b32.xlu0 %v233, 64
    %v236 = vpop.permute.xlu0 %235
    %v238 = vmul.f32 %v232, %v236
    %240 = vrot.lane.b32.xlu0 %v238, 64
    %v241 = vpop.permute.xlu0 %240
    %v243 = vadd.f32 %v153, %v241
    %v244 = vtanh.pop %v243
    %v245 = vsub.f32 1.0, %v232
    %247 = vrot.lane.b32.xlu0 %v244, 96
    %v248 = vpop.permute.xlu0 %247
    %v250 = vmul.f32 %v245, %v248
    %v251 = vmul.f32 %v232, %v145
    %v252 = vadd.f32 %v250, %v251
    %254 = vrot.lane.b32.xlu0 %v252, 96
    %v255 = vpop.permute.xlu0 %254
    %s257 = scalar_lea.vmem [#allocation2], 2
    %258 = vst.msk [vmem:[%s257] sm:$0x3] %vm150, %v255
    %s259 = scalar_lea.vmem %s0, 4
    %v260 = vld [vmem:[%s259] sm:$0x3]
    %v261 = vsel %vm34, %v255, 0
    %263 = vmatprep.subr.mxu0 0.0
    %264 = vmatpush1.msra.mxu0 %v27
    %265 = vmatprep.subr.mxu0 0.0
    %266 = vmatpush1.msra.mxu0 %v28
    %267 = vmatprep.subr.mxu0 0.0
    %268 = vmatpush1.msra.mxu0 %v29
    %269 = vmatprep.subr.mxu0 0.0
    %270 = vmatpush1.msra.mxu0 %v30
    %271 = vmatprep.subr.mxu0 0.0
    %272 = vmatpush1.msra.mxu0 0.0
    %273 = vmatprep.subr.mxu0 0.0
    %274 = vmatpush1.msra.mxu0 0.0
    %275 = vmatprep.subr.mxu0 0.0
    %276 = vmatpush1.msra.mxu0 0.0
    %277 = vmatprep.subr.mxu0 0.0
    %278 = vmatpush1.msra.mxu0 0.0
    %279 = vmatprep.subr.mxu0 0.0
    %280 = vmatpush1.msra.mxu0 0.0
    %281 = vmatprep.subr.mxu0 0.0
    %282 = vmatpush1.msra.mxu0 0.0
    %283 = vmatprep.subr.mxu0 0.0
    %284 = vmatpush1.msra.mxu0 0.0
    %285 = vmatprep.subr.mxu0 0.0
    %286 = vmatpush1.msra.mxu0 0.0
    %287 = vmatprep.subr.mxu0 0.0
    %288 = vmatpush1.msra.mxu0 0.0
    %289 = vmatprep.subr.mxu0 0.0
    %290 = vmatpush1.msra.mxu0 0.0
    %291 = vmatprep.subr.mxu0 0.0
    %292 = vmatpush1.msra.mxu0 0.0
    %293 = vmatprep.subr.mxu0 0.0
    %294 = vmatpush1.msra.mxu0 0.0
    %295 = vmatprep.subr.mxu0 0.0
    %296 = vmatpush1.msra.mxu0 0.0
    %297 = vmatprep.subr.mxu0 0.0
    %298 = vmatpush1.msra.mxu0 0.0
    %299 = vmatprep.subr.mxu0 0.0
    %300 = vmatpush1.msra.mxu0 0.0
    %301 = vmatprep.subr.mxu0 0.0
    %302 = vmatpush1.msra.mxu0 0.0
    %303 = vmatprep.subr.mxu0 0.0
    %304 = vmatpush1.msra.mxu0 0.0
    %305 = vmatprep.subr.mxu0 0.0
    %306 = vmatpush1.msra.mxu0 0.0
    %307 = vmatprep.subr.mxu0 0.0
    %308 = vmatpush1.msra.mxu0 0.0
    %309 = vmatprep.subr.mxu0 0.0
    %310 = vmatpush1.msra.mxu0 0.0
    %311 = vmatprep.subr.mxu0 0.0
    %312 = vmatpush1.msra.mxu0 0.0
    %313 = vmatprep.subr.mxu0 0.0
    %314 = vmatpush1.msra.mxu0 0.0
    %315 = vmatprep.subr.mxu0 0.0
    %316 = vmatpush1.msra.mxu0 0.0
    %317 = vmatprep.subr.mxu0 0.0
    %318 = vmatpush1.msra.mxu0 0.0
    %319 = vmatprep.subr.mxu0 0.0
    %320 = vmatpush1.msra.mxu0 0.0
    %321 = vmatprep.subr.mxu0 0.0
    %322 = vmatpush1.msra.mxu0 0.0
    %323 = vmatprep.subr.mxu0 0.0
    %324 = vmatpush1.msra.mxu0 0.0
    %325 = vmatprep.subr.mxu0 0.0
    %326 = vmatpush1.msra.mxu0 0.0
    %327 = vmatprep.mubr.f32.mxu0 0.0
    %328 = vmatmul.mubr.f32.gmra.mrb[0].mxu0 %v261
    %v329 = vpop.f32.mrb[0].mxu0
    %v330 = vadd.f32 0.0, %v329
    %v331 = vpop.f32.mrb[0].mxu0
    %332 = vdwg.mxu0
    %v333 = vadd.f32 %v260, %v330
    %v334 = vxor.u32 %v333, 2147483648
    %v335 = vmul.f32 %v334, 1.442695
    %v336 = vpow.pop %v335
    %v337 = vadd.f32 %v336, 1.0
    %v338 = vrcp.pop %v337
    %v339 = vmul.f32 1.0, %v338
    %v340 = vadd.f32 %v330, %v121
    %342 = vrot.lane.b32.xlu0 %v340, 64
    %v343 = vpop.permute.xlu0 %342
    %v345 = vmul.f32 %v339, %v343
    %347 = vrot.lane.b32.xlu0 %v345, 64
    %v348 = vpop.permute.xlu0 %347
    %v350 = vadd.f32 %v260, %v348
    %v351 = vtanh.pop %v350
    %v352 = vsub.f32 1.0, %v339
    %354 = vrot.lane.b32.xlu0 %v351, 96
    %v355 = vpop.permute.xlu0 %354
    %v357 = vmul.f32 %v352, %v355
    %v358 = vmul.f32 %v339, %v252
    %v359 = vadd.f32 %v357, %v358
    %361 = vrot.lane.b32.xlu0 %v359, 96
    %v362 = vpop.permute.xlu0 %361
    %s364 = scalar_lea.vmem [#allocation2], 4
    %365 = vst.msk [vmem:[%s364] sm:$0x3] %vm150, %v362
    %s366 = scalar_lea.vmem %s0, 6
    %v367 = vld [vmem:[%s366] sm:$0x3]
    %v368 = vsel %vm34, %v362, 0
    %370 = vmatprep.subr.mxu0 0.0
    %371 = vmatpush1.msra.mxu0 %v27
    %372 = vmatprep.subr.mxu0 0.0
    %373 = vmatpush1.msra.mxu0 %v28
    %374 = vmatprep.subr.mxu0 0.0
    %375 = vmatpush1.msra.mxu0 %v29
    %376 = vmatprep.subr.mxu0 0.0
    %377 = vmatpush1.msra.mxu0 %v30
    %378 = vmatprep.subr.mxu0 0.0
    %379 = vmatpush1.msra.mxu0 0.0
    %380 = vmatprep.subr.mxu0 0.0
    %381 = vmatpush1.msra.mxu0 0.0
    %382 = vmatprep.subr.mxu0 0.0
    %383 = vmatpush1.msra.mxu0 0.0
    %384 = vmatprep.subr.mxu0 0.0
    %385 = vmatpush1.msra.mxu0 0.0
    %386 = vmatprep.subr.mxu0 0.0
    %387 = vmatpush1.msra.mxu0 0.0
    %388 = vmatprep.subr.mxu0 0.0
    %389 = vmatpush1.msra.mxu0 0.0
    %390 = vmatprep.subr.mxu0 0.0
    %391 = vmatpush1.msra.mxu0 0.0
    %392 = vmatprep.subr.mxu0 0.0
    %393 = vmatpush1.msra.mxu0 0.0
    %394 = vmatprep.subr.mxu0 0.0
    %395 = vmatpush1.msra.mxu0 0.0
    %396 = vmatprep.subr.mxu0 0.0
    %397 = vmatpush1.msra.mxu0 0.0
    %398 = vmatprep.subr.mxu0 0.0
    %399 = vmatpush1.msra.mxu0 0.0
    %400 = vmatprep.subr.mxu0 0.0
    %401 = vmatpush1.msra.mxu0 0.0
    %402 = vmatprep.subr.mxu0 0.0
    %403 = vmatpush1.msra.mxu0 0.0
    %404 = vmatprep.subr.mxu0 0.0
    %405 = vmatpush1.msra.mxu0 0.0
    %406 = vmatprep.subr.mxu0 0.0
    %407 = vmatpush1.msra.mxu0 0.0
    %408 = vmatprep.subr.mxu0 0.0
    %409 = vmatpush1.msra.mxu0 0.0
    %410 = vmatprep.subr.mxu0 0.0
    %411 = vmatpush1.msra.mxu0 0.0
    %412 = vmatprep.subr.mxu0 0.0
    %413 = vmatpush1.msra.mxu0 0.0
    %414 = vmatprep.subr.mxu0 0.0
    %415 = vmatpush1.msra.mxu0 0.0
    %416 = vmatprep.subr.mxu0 0.0
    %417 = vmatpush1.msra.mxu0 0.0
    %418 = vmatprep.subr.mxu0 0.0
    %419 = vmatpush1.msra.mxu0 0.0
    %420 = vmatprep.subr.mxu0 0.0
    %421 = vmatpush1.msra.mxu0 0.0
    %422 = vmatprep.subr.mxu0 0.0
    %423 = vmatpush1.msra.mxu0 0.0
    %424 = vmatprep.subr.mxu0 0.0
    %425 = vmatpush1.msra.mxu0 0.0
    %426 = vmatprep.subr.mxu0 0.0
    %427 = vmatpush1.msra.mxu0 0.0
    %428 = vmatprep.subr.mxu0 0.0
    %429 = vmatpush1.msra.mxu0 0.0
    %430 = vmatprep.subr.mxu0 0.0
    %431 = vmatpush1.msra.mxu0 0.0
    %432 = vmatprep.subr.mxu0 0.0
    %433 = vmatpush1.msra.mxu0 0.0
    %434 = vmatprep.mubr.f32.mxu0 0.0
    %435 = vmatmul.mubr.f32.gmra.mrb[0].mxu0 %v368
    %v436 = vpop.f32.mrb[0].mxu0
    %v437 = vadd.f32 0.0, %v436
    %v438 = vpop.f32.mrb[0].mxu0
    %439 = vdwg.mxu0
    %v440 = vadd.f32 %v367, %v437
    %v441 = vxor.u32 %v440, 2147483648
    %v442 = vmul.f32 %v441, 1.442695
    %v443 = vpow.pop %v442
    %v444 = vadd.f32 %v443, 1.0
    %v445 = vrcp.pop %v444
    %v446 = vmul.f32 1.0, %v445
    %v447 = vadd.f32 %v437, %v121
    %449 = vrot.lane.b32.xlu0 %v447, 64
    %v450 = vpop.permute.xlu0 %449
    %v452 = vmul.f32 %v446, %v450
    %454 = vrot.lane.b32.xlu0 %v452, 64
    %v455 = vpop.permute.xlu0 %454
    %v457 = vadd.f32 %v367, %v455
    %v458 = vtanh.pop %v457
    %v459 = vsub.f32 1.0, %v446
    %461 = vrot.lane.b32.xlu0 %v458, 96
    %v462 = vpop.permute.xlu0 %461
    %v464 = vmul.f32 %v459, %v462
    %v465 = vmul.f32 %v446, %v359
    %v466 = vadd.f32 %v464, %v465
    %468 = vrot.lane.b32.xlu0 %v466, 96
    %v469 = vpop.permute.xlu0 %468
    %s471 = scalar_lea.vmem [#allocation2], 6
    %472 = vst.msk [vmem:[%s471] sm:$0x3] %vm150, %v469
    %s473 = scalar_lea.vmem %s0, 8
    %v474 = vld [vmem:[%s473] sm:$0x3]
    %v475 = vsel %vm34, %v469, 0
    %477 = vmatprep.subr.mxu0 0.0
    %478 = vmatpush1.msra.mxu0 %v27
    %479 = vmatprep.subr.mxu0 0.0
    %480 = vmatpush1.msra.mxu0 %v28
    %481 = vmatprep.subr.mxu0 0.0
    %482 = vmatpush1.msra.mxu0 %v29
    %483 = vmatprep.subr.mxu0 0.0
    %484 = vmatpush1.msra.mxu0 %v30
    %485 = vmatprep.subr.mxu0 0.0
    %486 = vmatpush1.msra.mxu0 0.0
    %487 = vmatprep.subr.mxu0 0.0
    %488 = vmatpush1.msra.mxu0 0.0
    %489 = vmatprep.subr.mxu0 0.0
    %490 = vmatpush1.msra.mxu0 0.0
    %491 = vmatprep.subr.mxu0 0.0
    %492 = vmatpush1.msra.mxu0 0.0
    %493 = vmatprep.subr.mxu0 0.0
    %494 = vmatpush1.msra.mxu0 0.0
    %495 = vmatprep.subr.mxu0 0.0
    %496 = vmatpush1.msra.mxu0 0.0
    %497 = vmatprep.subr.mxu0 0.0
    %498 = vmatpush1.msra.mxu0 0.0
    %499 = vmatprep.subr.mxu0 0.0
    %500 = vmatpush1.msra.mxu0 0.0
    %501 = vmatprep.subr.mxu0 0.0
    %502 = vmatpush1.msra.mxu0 0.0
    %503 = vmatprep.subr.mxu0 0.0
    %504 = vmatpush1.msra.mxu0 0.0
    %505 = vmatprep.subr.mxu0 0.0
    %506 = vmatpush1.msra.mxu0 0.0
    %507 = vmatprep.subr.mxu0 0.0
    %508 = vmatpush1.msra.mxu0 0.0
    %509 = vmatprep.subr.mxu0 0.0
    %510 = vmatpush1.msra.mxu0 0.0
    %511 = vmatprep.subr.mxu0 0.0
    %512 = vmatpush1.msra.mxu0 0.0
    %513 = vmatprep.subr.mxu0 0.0
    %514 = vmatpush1.msra.mxu0 0.0
    %515 = vmatprep.subr.mxu0 0.0
    %516 = vmatpush1.msra.mxu0 0.0
    %517 = vmatprep.subr.mxu0 0.0
    %518 = vmatpush1.msra.mxu0 0.0
    %519 = vmatprep.subr.mxu0 0.0
    %520 = vmatpush1.msra.mxu0 0.0
    %521 = vmatprep.subr.mxu0 0.0
    %522 = vmatpush1.msra.mxu0 0.0
    %523 = vmatprep.subr.mxu0 0.0
    %524 = vmatpush1.msra.mxu0 0.0
    %525 = vmatprep.subr.mxu0 0.0
    %526 = vmatpush1.msra.mxu0 0.0
    %527 = vmatprep.subr.mxu0 0.0
    %528 = vmatpush1.msra.mxu0 0.0
    %529 = vmatprep.subr.mxu0 0.0
    %530 = vmatpush1.msra.mxu0 0.0
    %531 = vmatprep.subr.mxu0 0.0
    %532 = vmatpush1.msra.mxu0 0.0
    %533 = vmatprep.subr.mxu0 0.0
    %534 = vmatpush1.msra.mxu0 0.0
    %535 = vmatprep.subr.mxu0 0.0
    %536 = vmatpush1.msra.mxu0 0.0
    %537 = vmatprep.subr.mxu0 0.0
    %538 = vmatpush1.msra.mxu0 0.0
    %539 = vmatprep.subr.mxu0 0.0
    %540 = vmatpush1.msra.mxu0 0.0
    %541 = vmatprep.mubr.f32.mxu0 0.0
    %542 = vmatmul.mubr.f32.gmra.mrb[0].mxu0 %v475
    %v543 = vpop.f32.mrb[0].mxu0
    %v544 = vadd.f32 0.0, %v543
    %v545 = vpop.f32.mrb[0].mxu0
    %546 = vdwg.mxu0
    %v547 = vadd.f32 %v474, %v544
    %v548 = vxor.u32 %v547, 2147483648
    %v549 = vmul.f32 %v548, 1.442695
    %v550 = vpow.pop %v549
    %v551 = vadd.f32 %v550, 1.0
    %v552 = vrcp.pop %v551
    %v553 = vmul.f32 1.0, %v552
    %v554 = vadd.f32 %v544, %v121
    %556 = vrot.lane.b32.xlu0 %v554, 64
    %v557 = vpop.permute.xlu0 %556
    %v559 = vmul.f32 %v553, %v557
    %561 = vrot.lane.b32.xlu0 %v559, 64
    %v562 = vpop.permute.xlu0 %561
    %v564 = vadd.f32 %v474, %v562
    %v565 = vtanh.pop %v564
    %v566 = vsub.f32 1.0, %v553
    %568 = vrot.lane.b32.xlu0 %v565, 96
    %v569 = vpop.permute.xlu0 %568
    %v571 = vmul.f32 %v566, %v569
    %v572 = vmul.f32 %v553, %v466
    %v573 = vadd.f32 %v571, %v572
    %575 = vrot.lane.b32.xlu0 %v573, 96
    %v576 = vpop.permute.xlu0 %575
    %s578 = scalar_lea.vmem [#allocation2], 8
    %579 = vst.msk [vmem:[%s578] sm:$0x3] %vm150, %v576
    %s580 = scalar_lea.vmem %s0, 10
    %v581 = vld [vmem:[%s580] sm:$0x3]
    %v582 = vsel %vm34, %v576, 0
    %584 = vmatprep.subr.mxu0 0.0
    %585 = vmatpush1.msra.mxu0 %v27
    %586 = vmatprep.subr.mxu0 0.0
    %587 = vmatpush1.msra.mxu0 %v28
    %588 = vmatprep.subr.mxu0 0.0
    %589 = vmatpush1.msra.mxu0 %v29
    %590 = vmatprep.subr.mxu0 0.0
    %591 = vmatpush1.msra.mxu0 %v30
    %592 = vmatprep.subr.mxu0 0.0
    %593 = vmatpush1.msra.mxu0 0.0
    %594 = vmatprep.subr.mxu0 0.0
    %595 = vmatpush1.msra.mxu0 0.0
    %596 = vmatprep.subr.mxu0 0.0
    %597 = vmatpush1.msra.mxu0 0.0
    %598 = vmatprep.subr.mxu0 0.0
    %599 = vmatpush1.msra.mxu0 0.0
    %600 = vmatprep.subr.mxu0 0.0
    %601 = vmatpush1.msra.mxu0 0.0
    %602 = vmatprep.subr.mxu0 0.0
    %603 = vmatpush1.msra.mxu0 0.0
    %604 = vmatprep.subr.mxu0 0.0
    %605 = vmatpush1.msra.mxu0 0.0
    %606 = vmatprep.subr.mxu0 0.0
    %607 = vmatpush1.msra.mxu0 0.0
    %608 = vmatprep.subr.mxu0 0.0
    %609 = vmatpush1.msra.mxu0 0.0
    %610 = vmatprep.subr.mxu0 0.0
    %611 = vmatpush1.msra.mxu0 0.0
    %612 = vmatprep.subr.mxu0 0.0
    %613 = vmatpush1.msra.mxu0 0.0
    %614 = vmatprep.subr.mxu0 0.0
    %615 = vmatpush1.msra.mxu0 0.0
    %616 = vmatprep.subr.mxu0 0.0
    %617 = vmatpush1.msra.mxu0 0.0
    %618 = vmatprep.subr.mxu0 0.0
    %619 = vmatpush1.msra.mxu0 0.0
    %620 = vmatprep.subr.mxu0 0.0
    %621 = vmatpush1.msra.mxu0 0.0
    %622 = vmatprep.subr.mxu0 0.0
    %623 = vmatpush1.msra.mxu0 0.0
    %624 = vmatprep.subr.mxu0 0.0
    %625 = vmatpush1.msra.mxu0 0.0
    %626 = vmatprep.subr.mxu0 0.0
    %627 = vmatpush1.msra.mxu0 0.0
    %628 = vmatprep.subr.mxu0 0.0
    %629 = vmatpush1.msra.mxu0 0.0
    %630 = vmatprep.subr.mxu0 0.0
    %631 = vmatpush1.msra.mxu0 0.0
    %632 = vmatprep.subr.mxu0 0.0
    %633 = vmatpush1.msra.mxu0 0.0
    %634 = vmatprep.subr.mxu0 0.0
    %635 = vmatpush1.msra.mxu0 0.0
    %636 = vmatprep.subr.mxu0 0.0
    %637 = vmatpush1.msra.mxu0 0.0
    %638 = vmatprep.subr.mxu0 0.0
    %639 = vmatpush1.msra.mxu0 0.0
    %640 = vmatprep.subr.mxu0 0.0
    %641 = vmatpush1.msra.mxu0 0.0
    %642 = vmatprep.subr.mxu0 0.0
    %643 = vmatpush1.msra.mxu0 0.0
    %644 = vmatprep.subr.mxu0 0.0
    %645 = vmatpush1.msra.mxu0 0.0
    %646 = vmatprep.subr.mxu0 0.0
    %647 = vmatpush1.msra.mxu0 0.0
    %648 = vmatprep.mubr.f32.mxu0 0.0
    %649 = vmatmul.mubr.f32.gmra.mrb[0].mxu0 %v582
    %v650 = vpop.f32.mrb[0].mxu0
    %v651 = vadd.f32 0.0, %v650
    %v652 = vpop.f32.mrb[0].mxu0
    %653 = vdwg.mxu0
    %v654 = vadd.f32 %v581, %v651
    %v655 = vxor.u32 %v654, 2147483648
    %v656 = vmul.f32 %v655, 1.442695
    %v657 = vpow.pop %v656
    %v658 = vadd.f32 %v657, 1.0
    %v659 = vrcp.pop %v658
    %v660 = vmul.f32 1.0, %v659
    %v661 = vadd.f32 %v651, %v121
    %663 = vrot.lane.b32.xlu0 %v661, 64
    %v664 = vpop.permute.xlu0 %663
    %v666 = vmul.f32 %v660, %v664
    %668 = vrot.lane.b32.xlu0 %v666, 64
    %v669 = vpop.permute.xlu0 %668
    %v671 = vadd.f32 %v581, %v669
    %v672 = vtanh.pop %v671
    %v673 = vsub.f32 1.0, %v660
    %675 = vrot.lane.b32.xlu0 %v672, 96
    %v676 = vpop.permute.xlu0 %675
    %v678 = vmul.f32 %v673, %v676
    %v679 = vmul.f32 %v660, %v573
    %v680 = vadd.f32 %v678, %v679
    %682 = vrot.lane.b32.xlu0 %v680, 96
    %v683 = vpop.permute.xlu0 %682
    %s685 = scalar_lea.vmem [#allocation2], 10
    %686 = vst.msk [vmem:[%s685] sm:$0x3] %vm150, %v683
    %s687 = scalar_lea.vmem %s0, 12
    %v688 = vld [vmem:[%s687] sm:$0x3]
    %v689 = vsel %vm34, %v683, 0
    %691 = vmatprep.subr.mxu0 0.0
    %692 = vmatpush1.msra.mxu0 %v27
    %693 = vmatprep.subr.mxu0 0.0
    %694 = vmatpush1.msra.mxu0 %v28
    %695 = vmatprep.subr.mxu0 0.0
    %696 = vmatpush1.msra.mxu0 %v29
    %697 = vmatprep.subr.mxu0 0.0
    %698 = vmatpush1.msra.mxu0 %v30
    %699 = vmatprep.subr.mxu0 0.0
    %700 = vmatpush1.msra.mxu0 0.0
    %701 = vmatprep.subr.mxu0 0.0
    %702 = vmatpush1.msra.mxu0 0.0
    %703 = vmatprep.subr.mxu0 0.0
    %704 = vmatpush1.msra.mxu0 0.0
    %705 = vmatprep.subr.mxu0 0.0
    %706 = vmatpush1.msra.mxu0 0.0
    %707 = vmatprep.subr.mxu0 0.0
    %708 = vmatpush1.msra.mxu0 0.0
    %709 = vmatprep.subr.mxu0 0.0
    %710 = vmatpush1.msra.mxu0 0.0
    %711 = vmatprep.subr.mxu0 0.0
    %712 = vmatpush1.msra.mxu0 0.0
    %713 = vmatprep.subr.mxu0 0.0
    %714 = vmatpush1.msra.mxu0 0.0
    %715 = vmatprep.subr.mxu0 0.0
    %716 = vmatpush1.msra.mxu0 0.0
    %717 = vmatprep.subr.mxu0 0.0
    %718 = vmatpush1.msra.mxu0 0.0
    %719 = vmatprep.subr.mxu0 0.0
    %720 = vmatpush1.msra.mxu0 0.0
    %721 = vmatprep.subr.mxu0 0.0
    %722 = vmatpush1.msra.mxu0 0.0
    %723 = vmatprep.subr.mxu0 0.0
    %724 = vmatpush1.msra.mxu0 0.0
    %725 = vmatprep.subr.mxu0 0.0
    %726 = vmatpush1.msra.mxu0 0.0
    %727 = vmatprep.subr.mxu0 0.0
    %728 = vmatpush1.msra.mxu0 0.0
    %729 = vmatprep.subr.mxu0 0.0
    %730 = vmatpush1.msra.mxu0 0.0
    %731 = vmatprep.subr.mxu0 0.0
    %732 = vmatpush1.msra.mxu0 0.0
    %733 = vmatprep.subr.mxu0 0.0
    %734 = vmatpush1.msra.mxu0 0.0
    %735 = vmatprep.subr.mxu0 0.0
    %736 = vmatpush1.msra.mxu0 0.0
    %737 = vmatprep.subr.mxu0 0.0
    %738 = vmatpush1.msra.mxu0 0.0
    %739 = vmatprep.subr.mxu0 0.0
    %740 = vmatpush1.msra.mxu0 0.0
    %741 = vmatprep.subr.mxu0 0.0
    %742 = vmatpush1.msra.mxu0 0.0
    %743 = vmatprep.subr.mxu0 0.0
    %744 = vmatpush1.msra.mxu0 0.0
    %745 = vmatprep.subr.mxu0 0.0
    %746 = vmatpush1.msra.mxu0 0.0
    %747 = vmatprep.subr.mxu0 0.0
    %748 = vmatpush1.msra.mxu0 0.0
    %749 = vmatprep.subr.mxu0 0.0
    %750 = vmatpush1.msra.mxu0 0.0
    %751 = vmatprep.subr.mxu0 0.0
    %752 = vmatpush1.msra.mxu0 0.0
    %753 = vmatprep.subr.mxu0 0.0
    %754 = vmatpush1.msra.mxu0 0.0
    %755 = vmatprep.mubr.f32.mxu0 0.0
    %756 = vmatmul.mubr.f32.gmra.mrb[0].mxu0 %v689
    %v757 = vpop.f32.mrb[0].mxu0
    %v758 = vadd.f32 0.0, %v757
    %v759 = vpop.f32.mrb[0].mxu0
    %760 = vdwg.mxu0
    %v761 = vadd.f32 %v688, %v758
    %v762 = vxor.u32 %v761, 2147483648
    %v763 = vmul.f32 %v762, 1.442695
    %v764 = vpow.pop %v763
    %v765 = vadd.f32 %v764, 1.0
    %v766 = vrcp.pop %v765
    %v767 = vmul.f32 1.0, %v766
    %v768 = vadd.f32 %v758, %v121
    %770 = vrot.lane.b32.xlu0 %v768, 64
    %v771 = vpop.permute.xlu0 %770
    %v773 = vmul.f32 %v767, %v771
    %775 = vrot.lane.b32.xlu0 %v773, 64
    %v776 = vpop.permute.xlu0 %775
    %v778 = vadd.f32 %v688, %v776
    %v779 = vtanh.pop %v778
    %v780 = vsub.f32 1.0, %v767
    %782 = vrot.lane.b32.xlu0 %v779, 96
    %v783 = vpop.permute.xlu0 %782
    %v785 = vmul.f32 %v780, %v783
    %v786 = vmul.f32 %v767, %v680
    %v787 = vadd.f32 %v785, %v786
    %789 = vrot.lane.b32.xlu0 %v787, 96
    %v790 = vpop.permute.xlu0 %789
    %s792 = scalar_lea.vmem [#allocation2], 12
    %793 = vst.msk [vmem:[%s792] sm:$0x3] %vm150, %v790
    %s794 = scalar_lea.vmem %s0, 14
    %v795 = vld [vmem:[%s794] sm:$0x3]
    %v796 = vsel %vm34, %v790, 0
    %798 = vmatprep.subr.mxu0 0.0
    %799 = vmatpush1.msra.mxu0 %v27
    %800 = vmatprep.subr.mxu0 0.0
    %801 = vmatpush1.msra.mxu0 %v28
    %802 = vmatprep.subr.mxu0 0.0
    %803 = vmatpush1.msra.mxu0 %v29
    %804 = vmatprep.subr.mxu0 0.0
    %805 = vmatpush1.msra.mxu0 %v30
    %806 = vmatprep.subr.mxu0 0.0
    %807 = vmatpush1.msra.mxu0 0.0
    %808 = vmatprep.subr.mxu0 0.0
    %809 = vmatpush1.msra.mxu0 0.0
    %810 = vmatprep.subr.mxu0 0.0
    %811 = vmatpush1.msra.mxu0 0.0
    %812 = vmatprep.subr.mxu0 0.0
    %813 = vmatpush1.msra.mxu0 0.0
    %814 = vmatprep.subr.mxu0 0.0
    %815 = vmatpush1.msra.mxu0 0.0
    %816 = vmatprep.subr.mxu0 0.0
    %817 = vmatpush1.msra.mxu0 0.0
    %818 = vmatprep.subr.mxu0 0.0
    %819 = vmatpush1.msra.mxu0 0.0
    %820 = vmatprep.subr.mxu0 0.0
    %821 = vmatpush1.msra.mxu0 0.0
    %822 = vmatprep.subr.mxu0 0.0
    %823 = vmatpush1.msra.mxu0 0.0
    %824 = vmatprep.subr.mxu0 0.0
    %825 = vmatpush1.msra.mxu0 0.0
    %826 = vmatprep.subr.mxu0 0.0
    %827 = vmatpush1.msra.mxu0 0.0
    %828 = vmatprep.subr.mxu0 0.0
    %829 = vmatpush1.msra.mxu0 0.0
    %830 = vmatprep.subr.mxu0 0.0
    %831 = vmatpush1.msra.mxu0 0.0
    %832 = vmatprep.subr.mxu0 0.0
    %833 = vmatpush1.msra.mxu0 0.0
    %834 = vmatprep.subr.mxu0 0.0
    %835 = vmatpush1.msra.mxu0 0.0
    %836 = vmatprep.subr.mxu0 0.0
    %837 = vmatpush1.msra.mxu0 0.0
    %838 = vmatprep.subr.mxu0 0.0
    %839 = vmatpush1.msra.mxu0 0.0
    %840 = vmatprep.subr.mxu0 0.0
    %841 = vmatpush1.msra.mxu0 0.0
    %842 = vmatprep.subr.mxu0 0.0
    %843 = vmatpush1.msra.mxu0 0.0
    %844 = vmatprep.subr.mxu0 0.0
    %845 = vmatpush1.msra.mxu0 0.0
    %846 = vmatprep.subr.mxu0 0.0
    %847 = vmatpush1.msra.mxu0 0.0
    %848 = vmatprep.subr.mxu0 0.0
    %849 = vmatpush1.msra.mxu0 0.0
    %850 = vmatprep.subr.mxu0 0.0
    %851 = vmatpush1.msra.mxu0 0.0
    %852 = vmatprep.subr.mxu0 0.0
    %853 = vmatpush1.msra.mxu0 0.0
    %854 = vmatprep.subr.mxu0 0.0
    %855 = vmatpush1.msra.mxu0 0.0
    %856 = vmatprep.subr.mxu0 0.0
    %857 = vmatpush1.msra.mxu0 0.0
    %858 = vmatprep.subr.mxu0 0.0
    %859 = vmatpush1.msra.mxu0 0.0
    %860 = vmatprep.subr.mxu0 0.0
    %861 = vmatpush1.msra.mxu0 0.0
    %862 = vmatprep.mubr.f32.mxu0 0.0
    %863 = vmatmul.mubr.f32.gmra.mrb[0].mxu0 %v796
    %v864 = vpop.f32.mrb[0].mxu0
    %v865 = vadd.f32 0.0, %v864
    %v866 = vpop.f32.mrb[0].mxu0
    %867 = vdwg.mxu0
    %v868 = vadd.f32 %v795, %v865
    %v869 = vxor.u32 %v868, 2147483648
    %v870 = vmul.f32 %v869, 1.442695
    %v871 = vpow.pop %v870
    %v872 = vadd.f32 %v871, 1.0
    %v873 = vrcp.pop %v872
    %v874 = vmul.f32 1.0, %v873
    %v875 = vadd.f32 %v865, %v121
    %877 = vrot.lane.b32.xlu0 %v875, 64
    %v878 = vpop.permute.xlu0 %877
    %v880 = vmul.f32 %v874, %v878
    %882 = vrot.lane.b32.xlu0 %v880, 64
    %v883 = vpop.permute.xlu0 %882
    %v885 = vadd.f32 %v795, %v883
    %v886 = vtanh.pop %v885
    %v887 = vsub.f32 1.0, %v874
    %889 = vrot.lane.b32.xlu0 %v886, 96
    %v890 = vpop.permute.xlu0 %889
    %v892 = vmul.f32 %v887, %v890
    %v893 = vmul.f32 %v874, %v787
    %v894 = vadd.f32 %v892, %v893
    %896 = vrot.lane.b32.xlu0 %v894, 96
    %v897 = vpop.permute.xlu0 %896
    %s899 = scalar_lea.vmem [#allocation2], 14
    %900 = vst.msk [vmem:[%s899] sm:$0x3] %vm150, %v897
    %901 = vst.msk [vmem:[%s5] sm:$0x3] %vm150, %v897
    // Predicated region
    $region22: #{gru_seq2seq_forward.12} parent=1 // pred_check
      _
    $region23: #{gru_seq2seq_forward.12} parent=1 // pred_check_branch
      %903 = sbr.rel (0) target = $region25
    $region24: #{gru_seq2seq_forward.12} parent=1 // pred_region
      %s905 = ssub.s32 256, 256
      %906 = vsyncadd [#allocation3], %s905
      %s907 = sshll.u32 [#allocation2], 4
      %s908 = int_to_ptr.vmem [resolvable:$true] %s907
      %913 = dma.vmem_to_hbm [thread:$0]  %s908, 256, %s4, [#allocation3], 32, 32, 2
    $region25: #{gru_seq2seq_forward.12} parent=1 // pred_fallthru
      _
    // Predicated region
    $region26: #{gru_seq2seq_forward.12} parent=1 // pred_check
      _
    $region27: #{gru_seq2seq_forward.12} parent=1 // pred_check_branch
      %915 = sbr.rel (0) target = $region29
    $region28: #{gru_seq2seq_forward.12} parent=1 // pred_region
      _
    $region29: #{gru_seq2seq_forward.12} parent=1 // pred_fallthru
      _
    // Predicated region
    $region30: #{gru_seq2seq_forward.12} parent=1 // pred_check
      _
    $region31: #{gru_seq2seq_forward.12} parent=1 // pred_check_branch
      %917 = sbr.rel (0) target = $region33
    $region32: #{gru_seq2seq_forward.12} parent=1 // pred_region
      %918 = dma.done [#allocation3], 256
    $region33: #{gru_seq2seq_forward.12} parent=1 // pred_fallthru
      _
    // Predicated region
    $region34: #{gru_seq2seq_forward.12} parent=1 // pred_check
      _
    $region35: #{gru_seq2seq_forward.12} parent=1 // pred_check_branch
      %920 = sbr.rel (0) target = $region37
    $region36: #{gru_seq2seq_forward.12} parent=1 // pred_region
      _
    $region37: #{gru_seq2seq_forward.12} parent=1 // pred_fallthru
      _
    %921 = vsyncpa [#allocation3], 1

// kernel: gru_seq2seq_forward.14
$region0: #{gru_seq2seq_forward.14}
  #allocation0 [shape = 'u32[]', space=smem, size = 0x4, offset = 0x4, fixed_abs, tag = 'smem constant byte address 0x4 - core index']
  #allocation1 [shape = 'u32[144,128]{1,0:T(1,128)}', space=vmem, size = 0x12000, scoped, tag = 'internal scratch']
  %s0 = inlined_call_operand.vmem [shape: f32[8,2,96], index: 0, kind: input, shape index: {}]
  %s1 = inlined_call_operand.vmem [shape: f32[2,32], index: 1, kind: input, shape index: {}]
  %s2 = inlined_call_operand.vmem [shape: f32[32,96], index: 2, kind: input, shape index: {}]
  %s3 = inlined_call_operand.vmem [shape: f32[1,32], index: 3, kind: input, shape index: {}]
  %s4 = inlined_call_operand.vmem [shape: f32[8,2,32], index: 4, kind: output, shape index: {0}]
  %s5 = inlined_call_operand.hbm [shape: f32[2,32], index: 5, kind: output, shape index: {1}]
  %6 = xla_tuple %s4, %s5
  %s7 = sld [smem:[#allocation0]]
  $region38: #{gru_seq2seq_forward.14} parent=0
    _
  %s9 = ssub.s32 1, %s7
  %s10 = scalar_select 0, %s9, %s7
  $region1: #{gru_seq2seq_forward.14} parent=0
    #allocation2 [shape = 'u8[1024]{0}', space=vmem, size = 0x400, scoped, tag = 'output window, operand 1, single buffered']
    #allocation3 [shape = 's32[1]{0}', space=sflag, size = 0x4, scoped, tag = 'scoped memory for gru_seq2seq_forward.14']
    %11 = vsyncpa [#allocation3], 0
    // Predicated region
    $region2: #{gru_seq2seq_forward.14} parent=1 // pred_check
      _
    $region3: #{gru_seq2seq_forward.14} parent=1 // pred_check_branch
      %13 = sbr.rel (0) target = $region5
    $region4: #{gru_seq2seq_forward.14} parent=1 // pred_region
      _
    $region5: #{gru_seq2seq_forward.14} parent=1 // pred_fallthru
      _
    // Predicated region
    $region6: #{gru_seq2seq_forward.14} parent=1 // pred_check
      _
    $region7: #{gru_seq2seq_forward.14} parent=1 // pred_check_branch
      %15 = sbr.rel (0) target = $region9
    $region8: #{gru_seq2seq_forward.14} parent=1 // pred_region
      _
    $region9: #{gru_seq2seq_forward.14} parent=1 // pred_fallthru
      _
    // Predicated region
    $region10: #{gru_seq2seq_forward.14} parent=1 // pred_check
      _
    $region11: #{gru_seq2seq_forward.14} parent=1 // pred_check_branch
      %17 = sbr.rel (0) target = $region13
    $region12: #{gru_seq2seq_forward.14} parent=1 // pred_region
      _
    $region13: #{gru_seq2seq_forward.14} parent=1 // pred_fallthru
      _
    // Predicated region
    $region14: #{gru_seq2seq_forward.14} parent=1 // pred_check
      _
    $region15: #{gru_seq2seq_forward.14} parent=1 // pred_check_branch
      %19 = sbr.rel (0) target = $region17
    $region16: #{gru_seq2seq_forward.14} parent=1 // pred_region
      _
    $region17: #{gru_seq2seq_forward.14} parent=1 // pred_fallthru
      _
    %p20 = scmp.eq.s32.totalorder 0, 0
    // Predicated region
    $region18: #{gru_seq2seq_forward.14} parent=1 // pred_check
      %p21 = pneg %p20
    $region19: #{gru_seq2seq_forward.14} parent=1 // pred_check_branch
      %23 = sbr.rel (%p21) target = $region21
    $region20: #{gru_seq2seq_forward.14} parent=1 // pred_region
      %v24 = vld [vmem:[%s1] sm:$0x3]
      %vm25 = vcmask 254976
      %26 = vst.msk [vmem:[#allocation2] sm:$0x3] %vm25, %v24
    $region21: #{gru_seq2seq_forward.14} parent=1 // pred_fallthru
      _
    %v27 = vld [vmem:[%s2] sm:$0xff]
    %v28 = vld [vmem:[%s2 + $0x8] sm:$0xff]
    %v29 = vld [vmem:[%s2 + $0x10] sm:$0xff]
    %v30 = vld [vmem:[%s2 + $0x18] sm:$0xff]
    %v31 = vld [vmem:[%s3] sm:$0x1]
    %v32 = vld [vmem:[#allocation2] sm:$0x3]
    %v33 = vld [vmem:[%s0] sm:$0x3]
    %vm34 = vcmask 261120
    %v36 = vsel %vm34, %v32, 0
    %38 = vmatprep.subr.mxu0 0.0
    %39 = vmatpush1.msra.mxu0 %v27
    %40 = vmatprep.subr.mxu0 0.0
    %41 = vmatpush1.msra.mxu0 %v28
    %42 = vmatprep.subr.mxu0 0.0
    %43 = vmatpush1.msra.mxu0 %v29
    %44 = vmatprep.subr.mxu0 0.0
    %45 = vmatpush1.msra.mxu0 %v30
    %46 = vmatprep.subr.mxu0 0.0
    %47 = vmatpush1.msra.mxu0 0.0
    %48 = vmatprep.subr.mxu0 0.0
    %49 = vmatpush1.msra.mxu0 0.0
    %50 = vmatprep.subr.mxu0 0.0
    %51 = vmatpush1.msra.mxu0 0.0
    %52 = vmatprep.subr.mxu0 0.0
    %53 = vmatpush1.msra.mxu0 0.0
    %54 = vmatprep.subr.mxu0 0.0
    %55 = vmatpush1.msra.mxu0 0.0
    %56 = vmatprep.subr.mxu0 0.0
    %57 = vmatpush1.msra.mxu0 0.0
    %58 = vmatprep.subr.mxu0 0.0
    %59 = vmatpush1.msra.mxu0 0.0
    %60 = vmatprep.subr.mxu0 0.0
    %61 = vmatpush1.msra.mxu0 0.0
    %62 = vmatprep.subr.mxu0 0.0
    %63 = vmatpush1.msra.mxu0 0.0
    %64 = vmatprep.subr.mxu0 0.0
    %65 = vmatpush1.msra.mxu0 0.0
    %66 = vmatprep.subr.mxu0 0.0
    %67 = vmatpush1.msra.mxu0 0.0
    %68 = vmatprep.subr.mxu0 0.0
    %69 = vmatpush1.msra.mxu0 0.0
    %70 = vmatprep.subr.mxu0 0.0
    %71 = vmatpush1.msra.mxu0 0.0
    %72 = vmatprep.subr.mxu0 0.0
    %73 = vmatpush1.msra.mxu0 0.0
    %74 = vmatprep.subr.mxu0 0.0
    %75 = vmatpush1.msra.mxu0 0.0
    %76 = vmatprep.subr.mxu0 0.0
    %77 = vmatpush1.msra.mxu0 0.0
    %78 = vmatprep.subr.mxu0 0.0
    %79 = vmatpush1.msra.mxu0 0.0
    %80 = vmatprep.subr.mxu0 0.0
    %81 = vmatpush1.msra.mxu0 0.0
    %82 = vmatprep.subr.mxu0 0.0
    %83 = vmatpush1.msra.mxu0 0.0
    %84 = vmatprep.subr.mxu0 0.0
    %85 = vmatpush1.msra.mxu0 0.0
    %86 = vmatprep.subr.mxu0 0.0
    %87 = vmatpush1.msra.mxu0 0.0
    %88 = vmatprep.subr.mxu0 0.0
    %89 = vmatpush1.msra.mxu0 0.0
    %90 = vmatprep.subr.mxu0 0.0
    %91 = vmatpush1.msra.mxu0 0.0
    %92 = vmatprep.subr.mxu0 0.0
    %93 = vmatpush1.msra.mxu0 0.0
    %94 = vmatprep.subr.mxu0 0.0
    %95 = vmatpush1.msra.mxu0 0.0
    %96 = vmatprep.subr.mxu0 0.0
    %97 = vmatpush1.msra.mxu0 0.0
    %98 = vmatprep.subr.mxu0 0.0
    %99 = vmatpush1.msra.mxu0 0.0
    %100 = vmatprep.subr.mxu0 0.0
    %101 = vmatpush1.msra.mxu0 0.0
    %102 = vmatprep.mubr.f32.mxu0 0.0
    %103 = vmatmul.mubr.f32.gmra.mrb[0].mxu0 %v36
    %v104 = vpop.f32.mrb[0].mxu0
    %v105 = vadd.f32 0.0, %v104
    %v106 = vpop.f32.mrb[0].mxu0
    %107 = vdwg.mxu0
    %v108 = vadd.f32 %v33, %v105
    %v109 = vxor.u32 %v108, 2147483648
    %v110 = vmul.f32 %v109, 1.442695
    %v111 = vpow.pop %v110
    %v112 = vadd.f32 %v111, 1.0
    %v113 = vrcp.pop %v112
    %v114 = vmul.f32 1.0, %v113
    %v116 = vlaneseq
    %v117 = vshrl.u32 %v116, 7
    %v118 = vsub.s32 0, %v117
    %v119 = vrot.slane %v31, %v118
    %120 = vrot.lane.b32.xlu0 %v119, 64
    %v121 = vpop.permute.xlu0 %120
    %v123 = vadd.f32 %v105, %v121
    %125 = vrot.lane.b32.xlu0 %v123, 64
    %v126 = vpop.permute.xlu0 %125
    %v128 = vmul.f32 %v114, %v126
    %130 = vrot.lane.b32.xlu0 %v128, 64
    %v131 = vpop.permute.xlu0 %130
    %v133 = vadd.f32 %v33, %v131
    %v134 = vtanh.pop %v133
    %v135 = vsub.f32 1.0, %v114
    %137 = vrot.lane.b32.xlu0 %v134, 96
    %v138 = vpop.permute.xlu0 %137
    %v140 = vmul.f32 %v135, %v138
    %141 = vrot.lane.b32.xlu0 %v32, 32
    %v142 = vpop.permute.xlu0 %141
    %v144 = vmul.f32 %v114, %v142
    %v145 = vadd.f32 %v140, %v144
    %147 = vrot.lane.b32.xlu0 %v145, 96
    %v148 = vpop.permute.xlu0 %147
    %vm150 = vcmask 254976
    %151 = vst.msk [vmem:[%s4] sm:$0x3] %vm150, %v148
    %s152 = scalar_lea.vmem %s0, 2
    %v153 = vld [vmem:[%s152] sm:$0x3]
    %v154 = vsel %vm34, %v148, 0
    %156 = vmatprep.subr.mxu0 0.0
    %157 = vmatpush1.msra.mxu0 %v27
    %158 = vmatprep.subr.mxu0 0.0
    %159 = vmatpush1.msra.mxu0 %v28
    %160 = vmatprep.subr.mxu0 0.0
    %161 = vmatpush1.msra.mxu0 %v29
    %162 = vmatprep.subr.mxu0 0.0
    %163 = vmatpush1.msra.mxu0 %v30
    %164 = vmatprep.subr.mxu0 0.0
    %165 = vmatpush1.msra.mxu0 0.0
    %166 = vmatprep.subr.mxu0 0.0
    %167 = vmatpush1.msra.mxu0 0.0
    %168 = vmatprep.subr.mxu0 0.0
    %169 = vmatpush1.msra.mxu0 0.0
    %170 = vmatprep.subr.mxu0 0.0
    %171 = vmatpush1.msra.mxu0 0.0
    %172 = vmatprep.subr.mxu0 0.0
    %173 = vmatpush1.msra.mxu0 0.0
    %174 = vmatprep.subr.mxu0 0.0
    %175 = vmatpush1.msra.mxu0 0.0
    %176 = vmatprep.subr.mxu0 0.0
    %177 = vmatpush1.msra.mxu0 0.0
    %178 = vmatprep.subr.mxu0 0.0
    %179 = vmatpush1.msra.mxu0 0.0
    %180 = vmatprep.subr.mxu0 0.0
    %181 = vmatpush1.msra.mxu0 0.0
    %182 = vmatprep.subr.mxu0 0.0
    %183 = vmatpush1.msra.mxu0 0.0
    %184 = vmatprep.subr.mxu0 0.0
    %185 = vmatpush1.msra.mxu0 0.0
    %186 = vmatprep.subr.mxu0 0.0
    %187 = vmatpush1.msra.mxu0 0.0
    %188 = vmatprep.subr.mxu0 0.0
    %189 = vmatpush1.msra.mxu0 0.0
    %190 = vmatprep.subr.mxu0 0.0
    %191 = vmatpush1.msra.mxu0 0.0
    %192 = vmatprep.subr.mxu0 0.0
    %193 = vmatpush1.msra.mxu0 0.0
    %194 = vmatprep.subr.mxu0 0.0
    %195 = vmatpush1.msra.mxu0 0.0
    %196 = vmatprep.subr.mxu0 0.0
    %197 = vmatpush1.msra.mxu0 0.0
    %198 = vmatprep.subr.mxu0 0.0
    %199 = vmatpush1.msra.mxu0 0.0
    %200 = vmatprep.subr.mxu0 0.0
    %201 = vmatpush1.msra.mxu0 0.0
    %202 = vmatprep.subr.mxu0 0.0
    %203 = vmatpush1.msra.mxu0 0.0
    %204 = vmatprep.subr.mxu0 0.0
    %205 = vmatpush1.msra.mxu0 0.0
    %206 = vmatprep.subr.mxu0 0.0
    %207 = vmatpush1.msra.mxu0 0.0
    %208 = vmatprep.subr.mxu0 0.0
    %209 = vmatpush1.msra.mxu0 0.0
    %210 = vmatprep.subr.mxu0 0.0
    %211 = vmatpush1.msra.mxu0 0.0
    %212 = vmatprep.subr.mxu0 0.0
    %213 = vmatpush1.msra.mxu0 0.0
    %214 = vmatprep.subr.mxu0 0.0
    %215 = vmatpush1.msra.mxu0 0.0
    %216 = vmatprep.subr.mxu0 0.0
    %217 = vmatpush1.msra.mxu0 0.0
    %218 = vmatprep.subr.mxu0 0.0
    %219 = vmatpush1.msra.mxu0 0.0
    %220 = vmatprep.mubr.f32.mxu0 0.0
    %221 = vmatmul.mubr.f32.gmra.mrb[0].mxu0 %v154
    %v222 = vpop.f32.mrb[0].mxu0
    %v223 = vadd.f32 0.0, %v222
    %v224 = vpop.f32.mrb[0].mxu0
    %225 = vdwg.mxu0
    %v226 = vadd.f32 %v153, %v223
    %v227 = vxor.u32 %v226, 2147483648
    %v228 = vmul.f32 %v227, 1.442695
    %v229 = vpow.pop %v228
    %v230 = vadd.f32 %v229, 1.0
    %v231 = vrcp.pop %v230
    %v232 = vmul.f32 1.0, %v231
    %v233 = vadd.f32 %v223, %v121
    %235 = vrot.lane.b32.xlu0 %v233, 64
    %v236 = vpop.permute.xlu0 %235
    %v238 = vmul.f32 %v232, %v236
    %240 = vrot.lane.b32.xlu0 %v238, 64
    %v241 = vpop.permute.xlu0 %240
    %v243 = vadd.f32 %v153, %v241
    %v244 = vtanh.pop %v243
    %v245 = vsub.f32 1.0, %v232
    %247 = vrot.lane.b32.xlu0 %v244, 96
    %v248 = vpop.permute.xlu0 %247
    %v250 = vmul.f32 %v245, %v248
    %v251 = vmul.f32 %v232, %v145
    %v252 = vadd.f32 %v250, %v251
    %254 = vrot.lane.b32.xlu0 %v252, 96
    %v255 = vpop.permute.xlu0 %254
    %s257 = scalar_lea.vmem %s4, 2
    %258 = vst.msk [vmem:[%s257] sm:$0x3] %vm150, %v255
    %s259 = scalar_lea.vmem %s0, 4
    %v260 = vld [vmem:[%s259] sm:$0x3]
    %v261 = vsel %vm34, %v255, 0
    %263 = vmatprep.subr.mxu0 0.0
    %264 = vmatpush1.msra.mxu0 %v27
    %265 = vmatprep.subr.mxu0 0.0
    %266 = vmatpush1.msra.mxu0 %v28
    %267 = vmatprep.subr.mxu0 0.0
    %268 = vmatpush1.msra.mxu0 %v29
    %269 = vmatprep.subr.mxu0 0.0
    %270 = vmatpush1.msra.mxu0 %v30
    %271 = vmatprep.subr.mxu0 0.0
    %272 = vmatpush1.msra.mxu0 0.0
    %273 = vmatprep.subr.mxu0 0.0
    %274 = vmatpush1.msra.mxu0 0.0
    %275 = vmatprep.subr.mxu0 0.0
    %276 = vmatpush1.msra.mxu0 0.0
    %277 = vmatprep.subr.mxu0 0.0
    %278 = vmatpush1.msra.mxu0 0.0
    %279 = vmatprep.subr.mxu0 0.0
    %280 = vmatpush1.msra.mxu0 0.0
    %281 = vmatprep.subr.mxu0 0.0
    %282 = vmatpush1.msra.mxu0 0.0
    %283 = vmatprep.subr.mxu0 0.0
    %284 = vmatpush1.msra.mxu0 0.0
    %285 = vmatprep.subr.mxu0 0.0
    %286 = vmatpush1.msra.mxu0 0.0
    %287 = vmatprep.subr.mxu0 0.0
    %288 = vmatpush1.msra.mxu0 0.0
    %289 = vmatprep.subr.mxu0 0.0
    %290 = vmatpush1.msra.mxu0 0.0
    %291 = vmatprep.subr.mxu0 0.0
    %292 = vmatpush1.msra.mxu0 0.0
    %293 = vmatprep.subr.mxu0 0.0
    %294 = vmatpush1.msra.mxu0 0.0
    %295 = vmatprep.subr.mxu0 0.0
    %296 = vmatpush1.msra.mxu0 0.0
    %297 = vmatprep.subr.mxu0 0.0
    %298 = vmatpush1.msra.mxu0 0.0
    %299 = vmatprep.subr.mxu0 0.0
    %300 = vmatpush1.msra.mxu0 0.0
    %301 = vmatprep.subr.mxu0 0.0
    %302 = vmatpush1.msra.mxu0 0.0
    %303 = vmatprep.subr.mxu0 0.0
    %304 = vmatpush1.msra.mxu0 0.0
    %305 = vmatprep.subr.mxu0 0.0
    %306 = vmatpush1.msra.mxu0 0.0
    %307 = vmatprep.subr.mxu0 0.0
    %308 = vmatpush1.msra.mxu0 0.0
    %309 = vmatprep.subr.mxu0 0.0
    %310 = vmatpush1.msra.mxu0 0.0
    %311 = vmatprep.subr.mxu0 0.0
    %312 = vmatpush1.msra.mxu0 0.0
    %313 = vmatprep.subr.mxu0 0.0
    %314 = vmatpush1.msra.mxu0 0.0
    %315 = vmatprep.subr.mxu0 0.0
    %316 = vmatpush1.msra.mxu0 0.0
    %317 = vmatprep.subr.mxu0 0.0
    %318 = vmatpush1.msra.mxu0 0.0
    %319 = vmatprep.subr.mxu0 0.0
    %320 = vmatpush1.msra.mxu0 0.0
    %321 = vmatprep.subr.mxu0 0.0
    %322 = vmatpush1.msra.mxu0 0.0
    %323 = vmatprep.subr.mxu0 0.0
    %324 = vmatpush1.msra.mxu0 0.0
    %325 = vmatprep.subr.mxu0 0.0
    %326 = vmatpush1.msra.mxu0 0.0
    %327 = vmatprep.mubr.f32.mxu0 0.0
    %328 = vmatmul.mubr.f32.gmra.mrb[0].mxu0 %v261
    %v329 = vpop.f32.mrb[0].mxu0
    %v330 = vadd.f32 0.0, %v329
    %v331 = vpop.f32.mrb[0].mxu0
    %332 = vdwg.mxu0
    %v333 = vadd.f32 %v260, %v330
    %v334 = vxor.u32 %v333, 2147483648
    %v335 = vmul.f32 %v334, 1.442695
    %v336 = vpow.pop %v335
    %v337 = vadd.f32 %v336, 1.0
    %v338 = vrcp.pop %v337
    %v339 = vmul.f32 1.0, %v338
    %v340 = vadd.f32 %v330, %v121
    %342 = vrot.lane.b32.xlu0 %v340, 64
    %v343 = vpop.permute.xlu0 %342
    %v345 = vmul.f32 %v339, %v343
    %347 = vrot.lane.b32.xlu0 %v345, 64
    %v348 = vpop.permute.xlu0 %347
    %v350 = vadd.f32 %v260, %v348
    %v351 = vtanh.pop %v350
    %v352 = vsub.f32 1.0, %v339
    %354 = vrot.lane.b32.xlu0 %v351, 96
    %v355 = vpop.permute.xlu0 %354
    %v357 = vmul.f32 %v352, %v355
    %v358 = vmul.f32 %v339, %v252
    %v359 = vadd.f32 %v357, %v358
    %361 = vrot.lane.b32.xlu0 %v359, 96
    %v362 = vpop.permute.xlu0 %361
    %s364 = scalar_lea.vmem %s4, 4
    %365 = vst.msk [vmem:[%s364] sm:$0x3] %vm150, %v362
    %s366 = scalar_lea.vmem %s0, 6
    %v367 = vld [vmem:[%s366] sm:$0x3]
    %v368 = vsel %vm34, %v362, 0
    %370 = vmatprep.subr.mxu0 0.0
    %371 = vmatpush1.msra.mxu0 %v27
    %372 = vmatprep.subr.mxu0 0.0
    %373 = vmatpush1.msra.mxu0 %v28
    %374 = vmatprep.subr.mxu0 0.0
    %375 = vmatpush1.msra.mxu0 %v29
    %376 = vmatprep.subr.mxu0 0.0
    %377 = vmatpush1.msra.mxu0 %v30
    %378 = vmatprep.subr.mxu0 0.0
    %379 = vmatpush1.msra.mxu0 0.0
    %380 = vmatprep.subr.mxu0 0.0
    %381 = vmatpush1.msra.mxu0 0.0
    %382 = vmatprep.subr.mxu0 0.0
    %383 = vmatpush1.msra.mxu0 0.0
    %384 = vmatprep.subr.mxu0 0.0
    %385 = vmatpush1.msra.mxu0 0.0
    %386 = vmatprep.subr.mxu0 0.0
    %387 = vmatpush1.msra.mxu0 0.0
    %388 = vmatprep.subr.mxu0 0.0
    %389 = vmatpush1.msra.mxu0 0.0
    %390 = vmatprep.subr.mxu0 0.0
    %391 = vmatpush1.msra.mxu0 0.0
    %392 = vmatprep.subr.mxu0 0.0
    %393 = vmatpush1.msra.mxu0 0.0
    %394 = vmatprep.subr.mxu0 0.0
    %395 = vmatpush1.msra.mxu0 0.0
    %396 = vmatprep.subr.mxu0 0.0
    %397 = vmatpush1.msra.mxu0 0.0
    %398 = vmatprep.subr.mxu0 0.0
    %399 = vmatpush1.msra.mxu0 0.0
    %400 = vmatprep.subr.mxu0 0.0
    %401 = vmatpush1.msra.mxu0 0.0
    %402 = vmatprep.subr.mxu0 0.0
    %403 = vmatpush1.msra.mxu0 0.0
    %404 = vmatprep.subr.mxu0 0.0
    %405 = vmatpush1.msra.mxu0 0.0
    %406 = vmatprep.subr.mxu0 0.0
    %407 = vmatpush1.msra.mxu0 0.0
    %408 = vmatprep.subr.mxu0 0.0
    %409 = vmatpush1.msra.mxu0 0.0
    %410 = vmatprep.subr.mxu0 0.0
    %411 = vmatpush1.msra.mxu0 0.0
    %412 = vmatprep.subr.mxu0 0.0
    %413 = vmatpush1.msra.mxu0 0.0
    %414 = vmatprep.subr.mxu0 0.0
    %415 = vmatpush1.msra.mxu0 0.0
    %416 = vmatprep.subr.mxu0 0.0
    %417 = vmatpush1.msra.mxu0 0.0
    %418 = vmatprep.subr.mxu0 0.0
    %419 = vmatpush1.msra.mxu0 0.0
    %420 = vmatprep.subr.mxu0 0.0
    %421 = vmatpush1.msra.mxu0 0.0
    %422 = vmatprep.subr.mxu0 0.0
    %423 = vmatpush1.msra.mxu0 0.0
    %424 = vmatprep.subr.mxu0 0.0
    %425 = vmatpush1.msra.mxu0 0.0
    %426 = vmatprep.subr.mxu0 0.0
    %427 = vmatpush1.msra.mxu0 0.0
    %428 = vmatprep.subr.mxu0 0.0
    %429 = vmatpush1.msra.mxu0 0.0
    %430 = vmatprep.subr.mxu0 0.0
    %431 = vmatpush1.msra.mxu0 0.0
    %432 = vmatprep.subr.mxu0 0.0
    %433 = vmatpush1.msra.mxu0 0.0
    %434 = vmatprep.mubr.f32.mxu0 0.0
    %435 = vmatmul.mubr.f32.gmra.mrb[0].mxu0 %v368
    %v436 = vpop.f32.mrb[0].mxu0
    %v437 = vadd.f32 0.0, %v436
    %v438 = vpop.f32.mrb[0].mxu0
    %439 = vdwg.mxu0
    %v440 = vadd.f32 %v367, %v437
    %v441 = vxor.u32 %v440, 2147483648
    %v442 = vmul.f32 %v441, 1.442695
    %v443 = vpow.pop %v442
    %v444 = vadd.f32 %v443, 1.0
    %v445 = vrcp.pop %v444
    %v446 = vmul.f32 1.0, %v445
    %v447 = vadd.f32 %v437, %v121
    %449 = vrot.lane.b32.xlu0 %v447, 64
    %v450 = vpop.permute.xlu0 %449
    %v452 = vmul.f32 %v446, %v450
    %454 = vrot.lane.b32.xlu0 %v452, 64
    %v455 = vpop.permute.xlu0 %454
    %v457 = vadd.f32 %v367, %v455
    %v458 = vtanh.pop %v457
    %v459 = vsub.f32 1.0, %v446
    %461 = vrot.lane.b32.xlu0 %v458, 96
    %v462 = vpop.permute.xlu0 %461
    %v464 = vmul.f32 %v459, %v462
    %v465 = vmul.f32 %v446, %v359
    %v466 = vadd.f32 %v464, %v465
    %468 = vrot.lane.b32.xlu0 %v466, 96
    %v469 = vpop.permute.xlu0 %468
    %s471 = scalar_lea.vmem %s4, 6
    %472 = vst.msk [vmem:[%s471] sm:$0x3] %vm150, %v469
    %s473 = scalar_lea.vmem %s0, 8
    %v474 = vld [vmem:[%s473] sm:$0x3]
    %v475 = vsel %vm34, %v469, 0
    %477 = vmatprep.subr.mxu0 0.0
    %478 = vmatpush1.msra.mxu0 %v27
    %479 = vmatprep.subr.mxu0 0.0
    %480 = vmatpush1.msra.mxu0 %v28
    %481 = vmatprep.subr.mxu0 0.0
    %482 = vmatpush1.msra.mxu0 %v29
    %483 = vmatprep.subr.mxu0 0.0
    %484 = vmatpush1.msra.mxu0 %v30
    %485 = vmatprep.subr.mxu0 0.0
    %486 = vmatpush1.msra.mxu0 0.0
    %487 = vmatprep.subr.mxu0 0.0
    %488 = vmatpush1.msra.mxu0 0.0
    %489 = vmatprep.subr.mxu0 0.0
    %490 = vmatpush1.msra.mxu0 0.0
    %491 = vmatprep.subr.mxu0 0.0
    %492 = vmatpush1.msra.mxu0 0.0
    %493 = vmatprep.subr.mxu0 0.0
    %494 = vmatpush1.msra.mxu0 0.0
    %495 = vmatprep.subr.mxu0 0.0
    %496 = vmatpush1.msra.mxu0 0.0
    %497 = vmatprep.subr.mxu0 0.0
    %498 = vmatpush1.msra.mxu0 0.0
    %499 = vmatprep.subr.mxu0 0.0
    %500 = vmatpush1.msra.mxu0 0.0
    %501 = vmatprep.subr.mxu0 0.0
    %502 = vmatpush1.msra.mxu0 0.0
    %503 = vmatprep.subr.mxu0 0.0
    %504 = vmatpush1.msra.mxu0 0.0
    %505 = vmatprep.subr.mxu0 0.0
    %506 = vmatpush1.msra.mxu0 0.0
    %507 = vmatprep.subr.mxu0 0.0
    %508 = vmatpush1.msra.mxu0 0.0
    %509 = vmatprep.subr.mxu0 0.0
    %510 = vmatpush1.msra.mxu0 0.0
    %511 = vmatprep.subr.mxu0 0.0
    %512 = vmatpush1.msra.mxu0 0.0
    %513 = vmatprep.subr.mxu0 0.0
    %514 = vmatpush1.msra.mxu0 0.0
    %515 = vmatprep.subr.mxu0 0.0
    %516 = vmatpush1.msra.mxu0 0.0
    %517 = vmatprep.subr.mxu0 0.0
    %518 = vmatpush1.msra.mxu0 0.0
    %519 = vmatprep.subr.mxu0 0.0
    %520 = vmatpush1.msra.mxu0 0.0
    %521 = vmatprep.subr.mxu0 0.0
    %522 = vmatpush1.msra.mxu0 0.0
    %523 = vmatprep.subr.mxu0 0.0
    %524 = vmatpush1.msra.mxu0 0.0
    %525 = vmatprep.subr.mxu0 0.0
    %526 = vmatpush1.msra.mxu0 0.0
    %527 = vmatprep.subr.mxu0 0.0
    %528 = vmatpush1.msra.mxu0 0.0
    %529 = vmatprep.subr.mxu0 0.0
    %530 = vmatpush1.msra.mxu0 0.0
    %531 = vmatprep.subr.mxu0 0.0
    %532 = vmatpush1.msra.mxu0 0.0
    %533 = vmatprep.subr.mxu0 0.0
    %534 = vmatpush1.msra.mxu0 0.0
    %535 = vmatprep.subr.mxu0 0.0
    %536 = vmatpush1.msra.mxu0 0.0
    %537 = vmatprep.subr.mxu0 0.0
    %538 = vmatpush1.msra.mxu0 0.0
    %539 = vmatprep.subr.mxu0 0.0
    %540 = vmatpush1.msra.mxu0 0.0
    %541 = vmatprep.mubr.f32.mxu0 0.0
    %542 = vmatmul.mubr.f32.gmra.mrb[0].mxu0 %v475
    %v543 = vpop.f32.mrb[0].mxu0
    %v544 = vadd.f32 0.0, %v543
    %v545 = vpop.f32.mrb[0].mxu0
    %546 = vdwg.mxu0
    %v547 = vadd.f32 %v474, %v544
    %v548 = vxor.u32 %v547, 2147483648
    %v549 = vmul.f32 %v548, 1.442695
    %v550 = vpow.pop %v549
    %v551 = vadd.f32 %v550, 1.0
    %v552 = vrcp.pop %v551
    %v553 = vmul.f32 1.0, %v552
    %v554 = vadd.f32 %v544, %v121
    %556 = vrot.lane.b32.xlu0 %v554, 64
    %v557 = vpop.permute.xlu0 %556
    %v559 = vmul.f32 %v553, %v557
    %561 = vrot.lane.b32.xlu0 %v559, 64
    %v562 = vpop.permute.xlu0 %561
    %v564 = vadd.f32 %v474, %v562
    %v565 = vtanh.pop %v564
    %v566 = vsub.f32 1.0, %v553
    %568 = vrot.lane.b32.xlu0 %v565, 96
    %v569 = vpop.permute.xlu0 %568
    %v571 = vmul.f32 %v566, %v569
    %v572 = vmul.f32 %v553, %v466
    %v573 = vadd.f32 %v571, %v572
    %575 = vrot.lane.b32.xlu0 %v573, 96
    %v576 = vpop.permute.xlu0 %575
    %s578 = scalar_lea.vmem %s4, 8
    %579 = vst.msk [vmem:[%s578] sm:$0x3] %vm150, %v576
    %s580 = scalar_lea.vmem %s0, 10
    %v581 = vld [vmem:[%s580] sm:$0x3]
    %v582 = vsel %vm34, %v576, 0
    %584 = vmatprep.subr.mxu0 0.0
    %585 = vmatpush1.msra.mxu0 %v27
    %586 = vmatprep.subr.mxu0 0.0
    %587 = vmatpush1.msra.mxu0 %v28
    %588 = vmatprep.subr.mxu0 0.0
    %589 = vmatpush1.msra.mxu0 %v29
    %590 = vmatprep.subr.mxu0 0.0
    %591 = vmatpush1.msra.mxu0 %v30
    %592 = vmatprep.subr.mxu0 0.0
    %593 = vmatpush1.msra.mxu0 0.0
    %594 = vmatprep.subr.mxu0 0.0
    %595 = vmatpush1.msra.mxu0 0.0
    %596 = vmatprep.subr.mxu0 0.0
    %597 = vmatpush1.msra.mxu0 0.0
    %598 = vmatprep.subr.mxu0 0.0
    %599 = vmatpush1.msra.mxu0 0.0
    %600 = vmatprep.subr.mxu0 0.0
    %601 = vmatpush1.msra.mxu0 0.0
    %602 = vmatprep.subr.mxu0 0.0
    %603 = vmatpush1.msra.mxu0 0.0
    %604 = vmatprep.subr.mxu0 0.0
    %605 = vmatpush1.msra.mxu0 0.0
    %606 = vmatprep.subr.mxu0 0.0
    %607 = vmatpush1.msra.mxu0 0.0
    %608 = vmatprep.subr.mxu0 0.0
    %609 = vmatpush1.msra.mxu0 0.0
    %610 = vmatprep.subr.mxu0 0.0
    %611 = vmatpush1.msra.mxu0 0.0
    %612 = vmatprep.subr.mxu0 0.0
    %613 = vmatpush1.msra.mxu0 0.0
    %614 = vmatprep.subr.mxu0 0.0
    %615 = vmatpush1.msra.mxu0 0.0
    %616 = vmatprep.subr.mxu0 0.0
    %617 = vmatpush1.msra.mxu0 0.0
    %618 = vmatprep.subr.mxu0 0.0
    %619 = vmatpush1.msra.mxu0 0.0
    %620 = vmatprep.subr.mxu0 0.0
    %621 = vmatpush1.msra.mxu0 0.0
    %622 = vmatprep.subr.mxu0 0.0
    %623 = vmatpush1.msra.mxu0 0.0
    %624 = vmatprep.subr.mxu0 0.0
    %625 = vmatpush1.msra.mxu0 0.0
    %626 = vmatprep.subr.mxu0 0.0
    %627 = vmatpush1.msra.mxu0 0.0
    %628 = vmatprep.subr.mxu0 0.0
    %629 = vmatpush1.msra.mxu0 0.0
    %630 = vmatprep.subr.mxu0 0.0
    %631 = vmatpush1.msra.mxu0 0.0
    %632 = vmatprep.subr.mxu0 0.0
    %633 = vmatpush1.msra.mxu0 0.0
    %634 = vmatprep.subr.mxu0 0.0
    %635 = vmatpush1.msra.mxu0 0.0
    %636 = vmatprep.subr.mxu0 0.0
    %637 = vmatpush1.msra.mxu0 0.0
    %638 = vmatprep.subr.mxu0 0.0
    %639 = vmatpush1.msra.mxu0 0.0
    %640 = vmatprep.subr.mxu0 0.0
    %641 = vmatpush1.msra.mxu0 0.0
    %642 = vmatprep.subr.mxu0 0.0
    %643 = vmatpush1.msra.mxu0 0.0
    %644 = vmatprep.subr.mxu0 0.0
    %645 = vmatpush1.msra.mxu0 0.0
    %646 = vmatprep.subr.mxu0 0.0
    %647 = vmatpush1.msra.mxu0 0.0
    %648 = vmatprep.mubr.f32.mxu0 0.0
    %649 = vmatmul.mubr.f32.gmra.mrb[0].mxu0 %v582
    %v650 = vpop.f32.mrb[0].mxu0
    %v651 = vadd.f32 0.0, %v650
    %v652 = vpop.f32.mrb[0].mxu0
    %653 = vdwg.mxu0
    %v654 = vadd.f32 %v581, %v651
    %v655 = vxor.u32 %v654, 2147483648
    %v656 = vmul.f32 %v655, 1.442695
    %v657 = vpow.pop %v656
    %v658 = vadd.f32 %v657, 1.0
    %v659 = vrcp.pop %v658
    %v660 = vmul.f32 1.0, %v659
    %v661 = vadd.f32 %v651, %v121
    %663 = vrot.lane.b32.xlu0 %v661, 64
    %v664 = vpop.permute.xlu0 %663
    %v666 = vmul.f32 %v660, %v664
    %668 = vrot.lane.b32.xlu0 %v666, 64
    %v669 = vpop.permute.xlu0 %668
    %v671 = vadd.f32 %v581, %v669
    %v672 = vtanh.pop %v671
    %v673 = vsub.f32 1.0, %v660
    %675 = vrot.lane.b32.xlu0 %v672, 96
    %v676 = vpop.permute.xlu0 %675
    %v678 = vmul.f32 %v673, %v676
    %v679 = vmul.f32 %v660, %v573
    %v680 = vadd.f32 %v678, %v679
    %682 = vrot.lane.b32.xlu0 %v680, 96
    %v683 = vpop.permute.xlu0 %682
    %s685 = scalar_lea.vmem %s4, 10
    %686 = vst.msk [vmem:[%s685] sm:$0x3] %vm150, %v683
    %s687 = scalar_lea.vmem %s0, 12
    %v688 = vld [vmem:[%s687] sm:$0x3]
    %v689 = vsel %vm34, %v683, 0
    %691 = vmatprep.subr.mxu0 0.0
    %692 = vmatpush1.msra.mxu0 %v27
    %693 = vmatprep.subr.mxu0 0.0
    %694 = vmatpush1.msra.mxu0 %v28
    %695 = vmatprep.subr.mxu0 0.0
    %696 = vmatpush1.msra.mxu0 %v29
    %697 = vmatprep.subr.mxu0 0.0
    %698 = vmatpush1.msra.mxu0 %v30
    %699 = vmatprep.subr.mxu0 0.0
    %700 = vmatpush1.msra.mxu0 0.0
    %701 = vmatprep.subr.mxu0 0.0
    %702 = vmatpush1.msra.mxu0 0.0
    %703 = vmatprep.subr.mxu0 0.0
    %704 = vmatpush1.msra.mxu0 0.0
    %705 = vmatprep.subr.mxu0 0.0
    %706 = vmatpush1.msra.mxu0 0.0
    %707 = vmatprep.subr.mxu0 0.0
    %708 = vmatpush1.msra.mxu0 0.0
    %709 = vmatprep.subr.mxu0 0.0
    %710 = vmatpush1.msra.mxu0 0.0
    %711 = vmatprep.subr.mxu0 0.0
    %712 = vmatpush1.msra.mxu0 0.0
    %713 = vmatprep.subr.mxu0 0.0
    %714 = vmatpush1.msra.mxu0 0.0
    %715 = vmatprep.subr.mxu0 0.0
    %716 = vmatpush1.msra.mxu0 0.0
    %717 = vmatprep.subr.mxu0 0.0
    %718 = vmatpush1.msra.mxu0 0.0
    %719 = vmatprep.subr.mxu0 0.0
    %720 = vmatpush1.msra.mxu0 0.0
    %721 = vmatprep.subr.mxu0 0.0
    %722 = vmatpush1.msra.mxu0 0.0
    %723 = vmatprep.subr.mxu0 0.0
    %724 = vmatpush1.msra.mxu0 0.0
    %725 = vmatprep.subr.mxu0 0.0
    %726 = vmatpush1.msra.mxu0 0.0
    %727 = vmatprep.subr.mxu0 0.0
    %728 = vmatpush1.msra.mxu0 0.0
    %729 = vmatprep.subr.mxu0 0.0
    %730 = vmatpush1.msra.mxu0 0.0
    %731 = vmatprep.subr.mxu0 0.0
    %732 = vmatpush1.msra.mxu0 0.0
    %733 = vmatprep.subr.mxu0 0.0
    %734 = vmatpush1.msra.mxu0 0.0
    %735 = vmatprep.subr.mxu0 0.0
    %736 = vmatpush1.msra.mxu0 0.0
    %737 = vmatprep.subr.mxu0 0.0
    %738 = vmatpush1.msra.mxu0 0.0
    %739 = vmatprep.subr.mxu0 0.0
    %740 = vmatpush1.msra.mxu0 0.0
    %741 = vmatprep.subr.mxu0 0.0
    %742 = vmatpush1.msra.mxu0 0.0
    %743 = vmatprep.subr.mxu0 0.0
    %744 = vmatpush1.msra.mxu0 0.0
    %745 = vmatprep.subr.mxu0 0.0
    %746 = vmatpush1.msra.mxu0 0.0
    %747 = vmatprep.subr.mxu0 0.0
    %748 = vmatpush1.msra.mxu0 0.0
    %749 = vmatprep.subr.mxu0 0.0
    %750 = vmatpush1.msra.mxu0 0.0
    %751 = vmatprep.subr.mxu0 0.0
    %752 = vmatpush1.msra.mxu0 0.0
    %753 = vmatprep.subr.mxu0 0.0
    %754 = vmatpush1.msra.mxu0 0.0
    %755 = vmatprep.mubr.f32.mxu0 0.0
    %756 = vmatmul.mubr.f32.gmra.mrb[0].mxu0 %v689
    %v757 = vpop.f32.mrb[0].mxu0
    %v758 = vadd.f32 0.0, %v757
    %v759 = vpop.f32.mrb[0].mxu0
    %760 = vdwg.mxu0
    %v761 = vadd.f32 %v688, %v758
    %v762 = vxor.u32 %v761, 2147483648
    %v763 = vmul.f32 %v762, 1.442695
    %v764 = vpow.pop %v763
    %v765 = vadd.f32 %v764, 1.0
    %v766 = vrcp.pop %v765
    %v767 = vmul.f32 1.0, %v766
    %v768 = vadd.f32 %v758, %v121
    %770 = vrot.lane.b32.xlu0 %v768, 64
    %v771 = vpop.permute.xlu0 %770
    %v773 = vmul.f32 %v767, %v771
    %775 = vrot.lane.b32.xlu0 %v773, 64
    %v776 = vpop.permute.xlu0 %775
    %v778 = vadd.f32 %v688, %v776
    %v779 = vtanh.pop %v778
    %v780 = vsub.f32 1.0, %v767
    %782 = vrot.lane.b32.xlu0 %v779, 96
    %v783 = vpop.permute.xlu0 %782
    %v785 = vmul.f32 %v780, %v783
    %v786 = vmul.f32 %v767, %v680
    %v787 = vadd.f32 %v785, %v786
    %789 = vrot.lane.b32.xlu0 %v787, 96
    %v790 = vpop.permute.xlu0 %789
    %s792 = scalar_lea.vmem %s4, 12
    %793 = vst.msk [vmem:[%s792] sm:$0x3] %vm150, %v790
    %s794 = scalar_lea.vmem %s0, 14
    %v795 = vld [vmem:[%s794] sm:$0x3]
    %v796 = vsel %vm34, %v790, 0
    %798 = vmatprep.subr.mxu0 0.0
    %799 = vmatpush1.msra.mxu0 %v27
    %800 = vmatprep.subr.mxu0 0.0
    %801 = vmatpush1.msra.mxu0 %v28
    %802 = vmatprep.subr.mxu0 0.0
    %803 = vmatpush1.msra.mxu0 %v29
    %804 = vmatprep.subr.mxu0 0.0
    %805 = vmatpush1.msra.mxu0 %v30
    %806 = vmatprep.subr.mxu0 0.0
    %807 = vmatpush1.msra.mxu0 0.0
    %808 = vmatprep.subr.mxu0 0.0
    %809 = vmatpush1.msra.mxu0 0.0
    %810 = vmatprep.subr.mxu0 0.0
    %811 = vmatpush1.msra.mxu0 0.0
    %812 = vmatprep.subr.mxu0 0.0
    %813 = vmatpush1.msra.mxu0 0.0
    %814 = vmatprep.subr.mxu0 0.0
    %815 = vmatpush1.msra.mxu0 0.0
    %816 = vmatprep.subr.mxu0 0.0
    %817 = vmatpush1.msra.mxu0 0.0
    %818 = vmatprep.subr.mxu0 0.0
    %819 = vmatpush1.msra.mxu0 0.0
    %820 = vmatprep.subr.mxu0 0.0
    %821 = vmatpush1.msra.mxu0 0.0
    %822 = vmatprep.subr.mxu0 0.0
    %823 = vmatpush1.msra.mxu0 0.0
    %824 = vmatprep.subr.mxu0 0.0
    %825 = vmatpush1.msra.mxu0 0.0
    %826 = vmatprep.subr.mxu0 0.0
    %827 = vmatpush1.msra.mxu0 0.0
    %828 = vmatprep.subr.mxu0 0.0
    %829 = vmatpush1.msra.mxu0 0.0
    %830 = vmatprep.subr.mxu0 0.0
    %831 = vmatpush1.msra.mxu0 0.0
    %832 = vmatprep.subr.mxu0 0.0
    %833 = vmatpush1.msra.mxu0 0.0
    %834 = vmatprep.subr.mxu0 0.0
    %835 = vmatpush1.msra.mxu0 0.0
    %836 = vmatprep.subr.mxu0 0.0
    %837 = vmatpush1.msra.mxu0 0.0
    %838 = vmatprep.subr.mxu0 0.0
    %839 = vmatpush1.msra.mxu0 0.0
    %840 = vmatprep.subr.mxu0 0.0
    %841 = vmatpush1.msra.mxu0 0.0
    %842 = vmatprep.subr.mxu0 0.0
    %843 = vmatpush1.msra.mxu0 0.0
    %844 = vmatprep.subr.mxu0 0.0
    %845 = vmatpush1.msra.mxu0 0.0
    %846 = vmatprep.subr.mxu0 0.0
    %847 = vmatpush1.msra.mxu0 0.0
    %848 = vmatprep.subr.mxu0 0.0
    %849 = vmatpush1.msra.mxu0 0.0
    %850 = vmatprep.subr.mxu0 0.0
    %851 = vmatpush1.msra.mxu0 0.0
    %852 = vmatprep.subr.mxu0 0.0
    %853 = vmatpush1.msra.mxu0 0.0
    %854 = vmatprep.subr.mxu0 0.0
    %855 = vmatpush1.msra.mxu0 0.0
    %856 = vmatprep.subr.mxu0 0.0
    %857 = vmatpush1.msra.mxu0 0.0
    %858 = vmatprep.subr.mxu0 0.0
    %859 = vmatpush1.msra.mxu0 0.0
    %860 = vmatprep.subr.mxu0 0.0
    %861 = vmatpush1.msra.mxu0 0.0
    %862 = vmatprep.mubr.f32.mxu0 0.0
    %863 = vmatmul.mubr.f32.gmra.mrb[0].mxu0 %v796
    %v864 = vpop.f32.mrb[0].mxu0
    %v865 = vadd.f32 0.0, %v864
    %v866 = vpop.f32.mrb[0].mxu0
    %867 = vdwg.mxu0
    %v868 = vadd.f32 %v795, %v865
    %v869 = vxor.u32 %v868, 2147483648
    %v870 = vmul.f32 %v869, 1.442695
    %v871 = vpow.pop %v870
    %v872 = vadd.f32 %v871, 1.0
    %v873 = vrcp.pop %v872
    %v874 = vmul.f32 1.0, %v873
    %v875 = vadd.f32 %v865, %v121
    %877 = vrot.lane.b32.xlu0 %v875, 64
    %v878 = vpop.permute.xlu0 %877
    %v880 = vmul.f32 %v874, %v878
    %882 = vrot.lane.b32.xlu0 %v880, 64
    %v883 = vpop.permute.xlu0 %882
    %v885 = vadd.f32 %v795, %v883
    %v886 = vtanh.pop %v885
    %v887 = vsub.f32 1.0, %v874
    %889 = vrot.lane.b32.xlu0 %v886, 96
    %v890 = vpop.permute.xlu0 %889
    %v892 = vmul.f32 %v887, %v890
    %v893 = vmul.f32 %v874, %v787
    %v894 = vadd.f32 %v892, %v893
    %896 = vrot.lane.b32.xlu0 %v894, 96
    %v897 = vpop.permute.xlu0 %896
    %s899 = scalar_lea.vmem %s4, 14
    %900 = vst.msk [vmem:[%s899] sm:$0x3] %vm150, %v897
    %901 = vst.msk [vmem:[#allocation2] sm:$0x3] %vm150, %v897
    // Predicated region
    $region22: #{gru_seq2seq_forward.14} parent=1 // pred_check
      _
    $region23: #{gru_seq2seq_forward.14} parent=1 // pred_check_branch
      %903 = sbr.rel (0) target = $region25
    $region24: #{gru_seq2seq_forward.14} parent=1 // pred_region
      _
    $region25: #{gru_seq2seq_forward.14} parent=1 // pred_fallthru
      _
    // Predicated region
    $region26: #{gru_seq2seq_forward.14} parent=1 // pred_check
      _
    $region27: #{gru_seq2seq_forward.14} parent=1 // pred_check_branch
      %905 = sbr.rel (0) target = $region29
    $region28: #{gru_seq2seq_forward.14} parent=1 // pred_region
      %s907 = ssub.s32 32, 32
      %908 = vsyncadd [#allocation3], %s907
      %s910 = sshll.u32 [#allocation2], 4
      %s911 = int_to_ptr.vmem [resolvable:$true] %s910
      %913 = dma.vmem_to_hbm [thread:$0]  %s911, 32, %s5, [#allocation3]
    $region29: #{gru_seq2seq_forward.14} parent=1 // pred_fallthru
      _
    // Predicated region
    $region30: #{gru_seq2seq_forward.14} parent=1 // pred_check
      _
    $region31: #{gru_seq2seq_forward.14} parent=1 // pred_check_branch
      %915 = sbr.rel (0) target = $region33
    $region32: #{gru_seq2seq_forward.14} parent=1 // pred_region
      _
    $region33: #{gru_seq2seq_forward.14} parent=1 // pred_fallthru
      _
    // Predicated region
    $region34: #{gru_seq2seq_forward.14} parent=1 // pred_check
      _
    $region35: #{gru_seq2seq_forward.14} parent=1 // pred_check_branch
      %917 = sbr.rel (0) target = $region37
    $region36: #{gru_seq2seq_forward.14} parent=1 // pred_region
      %918 = dma.done [#allocation3], 32
    $region37: #{gru_seq2seq_forward.14} parent=1 // pred_fallthru
      _
    %919 = vsyncpa [#allocation3], 1

// kernel: gru_seq2seq_forward.17
$region0: #{gru_seq2seq_forward.17}
  #allocation0 [shape = 'u32[]', space=smem, size = 0x4, offset = 0x4, fixed_abs, tag = 'smem constant byte address 0x4 - core index']
  #allocation1 [shape = 'u32[144,128]{1,0:T(1,128)}', space=vmem, size = 0x12000, scoped, tag = 'internal scratch']
  %s0 = inlined_call_operand.vmem [shape: f32[16,32], index: 0, kind: input, shape index: {}]
  %s1 = inlined_call_operand.vmem [shape: f32[32,60], index: 1, kind: input, shape index: {}]
  %s2 = inlined_call_operand.vmem [shape: f32[1,60], index: 2, kind: input, shape index: {}]
  %s3 = inlined_call_operand.vmem [shape: f32[16,60], index: 3, kind: output, shape index: {}]
  %s4 = sld [smem:[#allocation0]]
  $region22: #{gru_seq2seq_forward.17} parent=0
    _
  %s6 = ssub.s32 1, %s4
  %s7 = scalar_select 0, %s6, %s4
  // Predicated region
  $region2: #{gru_seq2seq_forward.17} parent=0 // pred_check
    _
  $region3: #{gru_seq2seq_forward.17} parent=0 // pred_check_branch
    %9 = sbr.rel (0) target = $region5
  $region4: #{gru_seq2seq_forward.17} parent=0 // pred_region
    _
  $region5: #{gru_seq2seq_forward.17} parent=0 // pred_fallthru
    _
  // Predicated region
  $region6: #{gru_seq2seq_forward.17} parent=0 // pred_check
    _
  $region7: #{gru_seq2seq_forward.17} parent=0 // pred_check_branch
    %11 = sbr.rel (0) target = $region9
  $region8: #{gru_seq2seq_forward.17} parent=0 // pred_region
    _
  $region9: #{gru_seq2seq_forward.17} parent=0 // pred_fallthru
    _
  // Predicated region
  $region10: #{gru_seq2seq_forward.17} parent=0 // pred_check
    _
  $region11: #{gru_seq2seq_forward.17} parent=0 // pred_check_branch
    %13 = sbr.rel (0) target = $region13
  $region12: #{gru_seq2seq_forward.17} parent=0 // pred_region
    _
  $region13: #{gru_seq2seq_forward.17} parent=0 // pred_fallthru
    _
  %v14 = vld [vmem:[%s0] sm:$0xff]
  %v15 = vld [vmem:[%s0 + $0x8] sm:$0xff]
  %v16 = vld [vmem:[%s1] sm:$0xff]
  %v17 = vld [vmem:[%s1 + $0x8] sm:$0xff]
  %v18 = vld [vmem:[%s1 + $0x10] sm:$0xff]
  %v19 = vld [vmem:[%s1 + $0x18] sm:$0xff]
  %v20 = vld [vmem:[%s2] sm:$0x1]
  %v22 = vlaneseq
  %v23 = vshrl.u32 %v22, 7
  %v24 = vsub.s32 0, %v23
  %v25 = vrot.slane %v20, %v24
  %vm27 = vcmask 261120
  %v29 = vsel %vm27, %v14, 0
  %v32 = vsel %vm27, %v15, 0
  %34 = vmatprep.subr.mxu0 0.0
  %35 = vmatpush1.msra.mxu0 %v16
  %36 = vmatprep.subr.mxu0 0.0
  %37 = vmatpush1.msra.mxu0 %v17
  %38 = vmatprep.subr.mxu0 0.0
  %39 = vmatpush1.msra.mxu0 %v18
  %40 = vmatprep.subr.mxu0 0.0
  %41 = vmatpush1.msra.mxu0 %v19
  %42 = vmatprep.subr.mxu0 0.0
  %43 = vmatpush1.msra.mxu0 0.0
  %44 = vmatprep.subr.mxu0 0.0
  %45 = vmatpush1.msra.mxu0 0.0
  %46 = vmatprep.subr.mxu0 0.0
  %47 = vmatpush1.msra.mxu0 0.0
  %48 = vmatprep.subr.mxu0 0.0
  %49 = vmatpush1.msra.mxu0 0.0
  %50 = vmatprep.subr.mxu0 0.0
  %51 = vmatpush1.msra.mxu0 0.0
  %52 = vmatprep.subr.mxu0 0.0
  %53 = vmatpush1.msra.mxu0 0.0
  %54 = vmatprep.subr.mxu0 0.0
  %55 = vmatpush1.msra.mxu0 0.0
  %56 = vmatprep.subr.mxu0 0.0
  %57 = vmatpush1.msra.mxu0 0.0
  %58 = vmatprep.subr.mxu0 0.0
  %59 = vmatpush1.msra.mxu0 0.0
  %60 = vmatprep.subr.mxu0 0.0
  %61 = vmatpush1.msra.mxu0 0.0
  %62 = vmatprep.subr.mxu0 0.0
  %63 = vmatpush1.msra.mxu0 0.0
  %64 = vmatprep.subr.mxu0 0.0
  %65 = vmatpush1.msra.mxu0 0.0
  %66 = vmatprep.subr.mxu0 0.0
  %67 = vmatpush1.msra.mxu0 0.0
  %68 = vmatprep.subr.mxu0 0.0
  %69 = vmatpush1.msra.mxu0 0.0
  %70 = vmatprep.subr.mxu0 0.0
  %71 = vmatpush1.msra.mxu0 0.0
  %72 = vmatprep.subr.mxu0 0.0
  %73 = vmatpush1.msra.mxu0 0.0
  %74 = vmatprep.subr.mxu0 0.0
  %75 = vmatpush1.msra.mxu0 0.0
  %76 = vmatprep.subr.mxu0 0.0
  %77 = vmatpush1.msra.mxu0 0.0
  %78 = vmatprep.subr.mxu0 0.0
  %79 = vmatpush1.msra.mxu0 0.0
  %80 = vmatprep.subr.mxu0 0.0
  %81 = vmatpush1.msra.mxu0 0.0
  %82 = vmatprep.subr.mxu0 0.0
  %83 = vmatpush1.msra.mxu0 0.0
  %84 = vmatprep.subr.mxu0 0.0
  %85 = vmatpush1.msra.mxu0 0.0
  %86 = vmatprep.subr.mxu0 0.0
  %87 = vmatpush1.msra.mxu0 0.0
  %88 = vmatprep.subr.mxu0 0.0
  %89 = vmatpush1.msra.mxu0 0.0
  %90 = vmatprep.subr.mxu0 0.0
  %91 = vmatpush1.msra.mxu0 0.0
  %92 = vmatprep.subr.mxu0 0.0
  %93 = vmatpush1.msra.mxu0 0.0
  %94 = vmatprep.subr.mxu0 0.0
  %95 = vmatpush1.msra.mxu0 0.0
  %96 = vmatprep.subr.mxu0 0.0
  %97 = vmatpush1.msra.mxu0 0.0
  %98 = vmatprep.mubr.f32.mxu0 0.0
  %99 = vmatmul.mubr.f32.gmra.mrb[0].mxu0 %v29
  %v100 = vpop.f32.mrb[0].mxu0
  %v101 = vadd.f32 %v25, %v100
  %v102 = vpop.f32.mrb[0].mxu0
  %103 = vmatprep.mubr.f32.mxu0 0.0
  %104 = vmatmul.mubr.f32.gmra.mrb[0].mxu0 %v32
  %v105 = vpop.f32.mrb[0].mxu0
  %v106 = vadd.f32 %v25, %v105
  %v107 = vpop.f32.mrb[0].mxu0
  %108 = vdwg.mxu0
  %vm109 = vcmask 490496
  %110 = vst.msk [vmem:[%s3] sm:$0xff] %vm109, %v101
  %111 = vst.msk [vmem:[%s3 + $0x8] sm:$0xff] %vm109, %v106
  // Predicated region
  $region14: #{gru_seq2seq_forward.17} parent=0 // pred_check
    _
  $region15: #{gru_seq2seq_forward.17} parent=0 // pred_check_branch
    %113 = sbr.rel (0) target = $region17
  $region16: #{gru_seq2seq_forward.17} parent=0 // pred_region
    _
  $region17: #{gru_seq2seq_forward.17} parent=0 // pred_fallthru
    _
  // Predicated region
  $region18: #{gru_seq2seq_forward.17} parent=0 // pred_check
    _
  $region19: #{gru_seq2seq_forward.17} parent=0 // pred_check_branch
    %115 = sbr.rel (0) target = $region21
  $region20: #{gru_seq2seq_forward.17} parent=0 // pred_region
    _
  $region21: #{gru_seq2seq_forward.17} parent=0 // pred_fallthru
    _

</llo_original>
